<compile_context>
chip_gen: v7x
topology: tpu7x:2x2x1
jax: 0.10.0
libtpu: 0.0.40
codegen_flags: <defaults>
</compile_context>

<pallas_src>
import numpy as np
import jax
import jax.numpy as jnp
from jax import lax
from jax.experimental import pallas as pl
from jax.experimental.pallas import tpu as pltpu

EPS = 1e-12


def _full_spec(shape):
    # whole-array block, single grid step
    return pl.BlockSpec(shape, lambda i: (0,) * len(shape))


# ----------------------------------------------------------------------------
# Spectral norm: one power iteration (num_svs=1, num_itrs=1, as in SN.W_())
# for all three weights in a single tiny launch; outputs 1/sigma each.
# ----------------------------------------------------------------------------
def _sn_inv_sigma_kernel(w1_ref, u1_ref, w2_ref, u2_ref, wsc_ref, usc_ref,
                         inv1_ref, inv2_ref, invsc_ref):
    def inv_sigma(w_ref, u_ref):
        W = w_ref[...].astype(jnp.float32)        # (O, K) = weight.view(O, -1)
        u = u_ref[...].astype(jnp.float32)        # (1, O)
        v = lax.dot_general(u, W, (((1,), (0,)), ((), ())),
                            preferred_element_type=jnp.float32)       # (1, K)
        v = v / jnp.maximum(jnp.sqrt(jnp.sum(v * v, axis=1, keepdims=True)), EPS)
        t = lax.dot_general(v, W, (((1,), (1,)), ((), ())),
                            preferred_element_type=jnp.float32)       # (1, O)
        u_new = t / jnp.maximum(jnp.sqrt(jnp.sum(t * t, axis=1, keepdims=True)), EPS)
        sv = jnp.sum(t * u_new, axis=1, keepdims=True)                # (1, 1)
        return 1.0 / sv

    inv1_ref[...] = inv_sigma(w1_ref, u1_ref)
    inv2_ref[...] = inv_sigma(w2_ref, u2_ref)
    invsc_ref[...] = inv_sigma(wsc_ref, usc_ref)


def sn_inv_sigmas(params):
    # TODO(synk): training-mode in-place u/sv buffer updates are not
    # reproduced; the returned 1/sigma (and hence the forward) is identical.
    w1m = params["w1"].reshape(params["w1"].shape[0], -1)
    w2m = params["w2"].reshape(params["w2"].shape[0], -1)
    wscm = params["wsc"].reshape(params["wsc"].shape[0], -1)
    u1, u2, usc = params["u1"], params["u2"], params["usc"]
    return pl.pallas_call(
        _sn_inv_sigma_kernel,
        grid=(1,),
        in_specs=[_full_spec(w1m.shape), _full_spec(u1.shape),
                  _full_spec(w2m.shape), _full_spec(u2.shape),
                  _full_spec(wscm.shape), _full_spec(usc.shape)],
        out_specs=tuple(_full_spec((1, 1)) for _ in range(3)),
        out_shape=tuple(jax.ShapeDtypeStruct((1, 1), jnp.float32)
                        for _ in range(3)),
        compiler_params=pltpu.CompilerParams(
            dimension_semantics=("arbitrary",)),
    )(w1m, u1, w2m, u2, wscm, usc)


# ----------------------------------------------------------------------------
# Fused DBlock body: conv1 + ReLU + conv2 + 1x1 shortcut + residual add.
# ----------------------------------------------------------------------------
def _dblock_fused_kernel(inv1_ref, inv2_ref, invsc_ref,
                         x_ref, w1_ref, b1_ref, w2_ref, b2_ref,
                         wsc_ref, bsc_ref, o_ref, xpad_ref, hpad_ref):
    _, H, W, Cin = x_ref.shape
    Chid = w1_ref.shape[1]

    inv1 = inv1_ref[0, 0]           # SMEM scalars: 1/sigma per SN conv
    inv2 = inv2_ref[0, 0]
    invsc = invsc_ref[0, 0]

    xv = x_ref[0]                                            # (H, W, Cin)

    # ---- in-kernel zero padding on VMEM scratch (no padded HBM copies) ----
    xpad_ref[...] = jnp.zeros_like(xpad_ref)
    xpad_ref[pl.ds(1, H), pl.ds(1, W), :] = xv

    def im2col(pad_ref, C):
        cols = [pad_ref[dy:dy + H, dx:dx + W, :]
                for dy in range(3) for dx in range(3)]
        return jnp.concatenate(cols, axis=-1).reshape(H * W, 9 * C)

    # ---- conv1: one fat matmul (K = 9*Cin); SN scale folded into acc ----
    a1 = im2col(xpad_ref, Cin)                               # (H*W, 9*Cin)
    h = jnp.dot(a1, w1_ref[...], preferred_element_type=jnp.float32)
    h = jnp.maximum(h * inv1 + b1_ref[...], 0.0)             # (H*W, Chid)

    # intermediate h stays in VMEM only
    hpad_ref[...] = jnp.zeros_like(hpad_ref)
    hpad_ref[pl.ds(1, H), pl.ds(1, W), :] = h.reshape(H, W, Chid)

    # ---- conv2 in (Cout, H*W) orientation ('ck,mk->cm') ----
    a2 = im2col(hpad_ref, Chid)                              # (H*W, 9*Chid)
    y = lax.dot_general(w2_ref[...], a2, (((1,), (1,)), ((), ())),
                        preferred_element_type=jnp.float32)  # (Cout, H*W)
    y = y * inv2 + b2_ref[...]

    # ---- 1x1 SN shortcut + residual add (same orientation) ----
    sc = lax.dot_general(wsc_ref[...], xv.reshape(H * W, Cin),
                         (((1,), (1,)), ((), ())),
                         preferred_element_type=jnp.float32)  # (Cout, H*W)
    y = y + sc * invsc + bsc_ref[...]

    # lane-dense store (last dim H*W = multiple of 128 here); already NCHW.
    o_ref[0] = y.astype(o_ref.dtype)


def dblock_forward(params, x_nchw):
    B, Cin, H, W = x_nchw.shape
    Chid = params["w1"].shape[0]
    Cout = params["w2"].shape[0]

    x = jnp.transpose(x_nchw, (0, 2, 3, 1))                  # NCHW -> NHWC

    inv1, inv2, invsc = sn_inv_sigmas(params)

    # Conv-layout weights (tiny one-off transposes). The raw weights are never
    # rewritten by spectral norm — 1/sigma is applied inside the kernel.
    w1k = jnp.transpose(params["w1"], (2, 3, 1, 0)).reshape(9 * Cin, Chid)
    w2k = jnp.transpose(params["w2"], (0, 2, 3, 1)).reshape(Cout, 9 * Chid)
    wsck = params["wsc"].reshape(Cout, Cin)
    b1 = params["b1"][None, :]          # (1, Chid)  for (H*W, Chid) rows
    b2 = params["b2"][:, None]          # (Cout, 1)  for (Cout, H*W) rows
    bsc = params["bsc"][:, None]        # (Cout, 1)

    flops = 2 * B * H * W * (9 * Cin * Chid + 9 * Chid * Cout + Cin * Cout)
    bytes_accessed = 4 * (x.size + w1k.size + w2k.size + wsck.size
                          + B * Cout * H * W)

    out = pl.pallas_call(
        _dblock_fused_kernel,
        grid=(B,),
        in_specs=[
            pl.BlockSpec(memory_space=pltpu.MemorySpace.SMEM),   # 1/sigma_1
            pl.BlockSpec(memory_space=pltpu.MemorySpace.SMEM),   # 1/sigma_2
            pl.BlockSpec(memory_space=pltpu.MemorySpace.SMEM),   # 1/sigma_sc
            pl.BlockSpec((1, H, W, Cin), lambda b: (b, 0, 0, 0)),
            pl.BlockSpec((9 * Cin, Chid), lambda b: (0, 0)),
            pl.BlockSpec((1, Chid), lambda b: (0, 0)),
            pl.BlockSpec((Cout, 9 * Chid), lambda b: (0, 0)),
            pl.BlockSpec((Cout, 1), lambda b: (0, 0)),
            pl.BlockSpec((Cout, Cin), lambda b: (0, 0)),
            pl.BlockSpec((Cout, 1), lambda b: (0, 0)),
        ],
        out_specs=pl.BlockSpec((1, Cout, H * W), lambda b: (b, 0, 0)),
        out_shape=jax.ShapeDtypeStruct((B, Cout, H * W), x.dtype),
        scratch_shapes=[pltpu.VMEM((H + 2, W + 2, Cin), jnp.float32),
                        pltpu.VMEM((H + 2, W + 2, Chid), jnp.float32)],
        compiler_params=pltpu.CompilerParams(
            dimension_semantics=("parallel",),
            vmem_limit_bytes=32 * 1024 * 1024),
        cost_estimate=pl.CostEstimate(flops=flops, transcendentals=0,
                                      bytes_accessed=bytes_accessed),
    )(inv1, inv2, invsc, x, w1k, b1, w2k, b2, wsck, bsc)

    return out.reshape(B, Cout, H, W)                        # already NCHW


# ----------------------------------------------------------------------------
# Parameter init + pure-JAX reference (for self-check)
# ----------------------------------------------------------------------------
def init_dblock_params(key, in_ch, out_ch, hidden_ch):
    ks = jax.random.split(key, 9)

    def conv_init(kw, kb, cout, cin, ksz):
        fan_in = cin * ksz * ksz
        w = jax.random.normal(kw, (cout, cin, ksz, ksz), jnp.float32) / np.sqrt(fan_in)
        b = 0.05 * jax.random.normal(kb, (cout,), jnp.float32)
        return w, b

    w1, b1 = conv_init(ks[0], ks[1], hidden_ch, in_ch, 3)
    w2, b2 = conv_init(ks[2], ks[3], out_ch, hidden_ch, 3)
    wsc, bsc = conv_init(ks[4], ks[5], out_ch, in_ch, 1)
    u1 = jax.random.normal(ks[6], (1, hidden_ch), jnp.float32)   # SN u buffers
    u2 = jax.random.normal(ks[7], (1, out_ch), jnp.float32)
    usc = jax.random.normal(ks[8], (1, out_ch), jnp.float32)
    return dict(w1=w1, b1=b1, u1=u1, w2=w2, b2=b2, u2=u2,
                wsc=wsc, bsc=bsc, usc=usc)


def _ref_forward(params, x_nchw):
    def sn(w, u):
        O = w.shape[0]
        Wm = w.reshape(O, -1)
        v = u @ Wm
        v = v / jnp.maximum(jnp.linalg.norm(v), EPS)
        t = v @ Wm.T
        un = t / jnp.maximum(jnp.linalg.norm(t), EPS)
        return w / jnp.sum(t * un)

    def conv(x, w, b, pad):
        y = lax.conv_general_dilated(
            x, w, (1, 1), [(pad, pad), (pad, pad)],
            dimension_numbers=("NCHW", "OIHW", "NCHW"))
        return y + b[None, :, None, None]

    w1 = sn(params["w1"], params["u1"])
    w2 = sn(params["w2"], params["u2"])
    wsc = sn(params["wsc"], params["usc"])
    h = conv(x_nchw, w1, params["b1"], 1)
    h = jax.nn.relu(h)
    h = conv(h, w2, params["b2"], 1)
    sc = conv(x_nchw, wsc, params["bsc"], 0)
    return h + sc


if __name__ == "__main__":
    key = jax.random.PRNGKey(0)
    kx, kp = jax.random.split(key)
    B, Cin, H, W = 2, 4, 16, 16
    Cout = 8                      # wide=True -> hidden_channels = out_channels
    x = jax.random.normal(kx, (B, Cin, H, W), jnp.float32)
    params = init_dblock_params(kp, Cin, Cout, Cout)

    fwd = jax.jit(dblock_forward)
    out = jax.block_until_ready(fwd(params, x))
    assert out.shape == (B, Cout, H, W)

    ref = jax.block_until_ready(_ref_forward(params, x))
    np.testing.assert_allclose(np.asarray(out), np.asarray(ref),
                               rtol=1e-3, atol=1e-3)
    print("KERNEL_OK")
</pallas_src>

<mosaic_0001>
module attributes {stable_mosaic.version = 11 : i64} {
  func.func @_sn_inv_sigma_kernel(%arg0: i32, %arg1: memref<8x36xf32, #tpu.memory_space<vmem>>, %arg2: memref<1x8xf32, #tpu.memory_space<vmem>>, %arg3: memref<8x72xf32, #tpu.memory_space<vmem>>, %arg4: memref<1x8xf32, #tpu.memory_space<vmem>>, %arg5: memref<8x4xf32, #tpu.memory_space<vmem>>, %arg6: memref<1x8xf32, #tpu.memory_space<vmem>>, %arg7: memref<1x1xf32, #tpu.memory_space<vmem>>, %arg8: memref<1x1xf32, #tpu.memory_space<vmem>>, %arg9: memref<1x1xf32, #tpu.memory_space<vmem>>) attributes {dimension_semantics = [#tpu.dimension_semantics<arbitrary>], iteration_bounds = array<i64: 1>, scalar_prefetch = 0 : i64, scratch_operands = 0 : i64, tpu.core_type = #tpu.core_type<tc>, window_params = [{pipeline_mode = #tpu.pipeline_mode<synchronous>, transform_indices = @transform_0, window_bounds = array<i64: 8, 36>}, {pipeline_mode = #tpu.pipeline_mode<synchronous>, transform_indices = @transform_1, window_bounds = array<i64: 1, 8>}, {pipeline_mode = #tpu.pipeline_mode<synchronous>, transform_indices = @transform_2, window_bounds = array<i64: 8, 72>}, {pipeline_mode = #tpu.pipeline_mode<synchronous>, transform_indices = @transform_3, window_bounds = array<i64: 1, 8>}, {pipeline_mode = #tpu.pipeline_mode<synchronous>, transform_indices = @transform_4, window_bounds = array<i64: 8, 4>}, {pipeline_mode = #tpu.pipeline_mode<synchronous>, transform_indices = @transform_5, window_bounds = array<i64: 1, 8>}, {pipeline_mode = #tpu.pipeline_mode<synchronous>, transform_indices = @transform_6, window_bounds = array<i64: 1, 1>}, {pipeline_mode = #tpu.pipeline_mode<synchronous>, transform_indices = @transform_7, window_bounds = array<i64: 1, 1>}, {pipeline_mode = #tpu.pipeline_mode<synchronous>, transform_indices = @transform_8, window_bounds = array<i64: 1, 1>}]} {
    %c0 = arith.constant 0 : index
    %c0_0 = arith.constant 0 : index
    %0 = vector.load %arg1[%c0, %c0_0] : memref<8x36xf32, #tpu.memory_space<vmem>>, vector<8x36xf32>
    %c0_1 = arith.constant 0 : index
    %c0_2 = arith.constant 0 : index
    %1 = vector.load %arg2[%c0_1, %c0_2] : memref<1x8xf32, #tpu.memory_space<vmem>>, vector<1x8xf32>
    %cst = arith.constant dense<0.000000e+00> : vector<1x36xf32>
    %2 = tpu.matmul %1, %0, %cst {dimension_numbers = #tpu.dot_dimension_numbers<[1], [0], [0], [1], [0, 0, 1, 1], [], []>} : vector<1x8xf32>, vector<8x36xf32>, vector<1x36xf32> -> vector<1x36xf32>
    %3 = arith.mulf %2, %2 : vector<1x36xf32>
    %cst_3 = arith.constant dense<0.000000e+00> : vector<1xf32>
    %4 = vector.multi_reduction <add>, %3, %cst_3 [1] : vector<1x36xf32> to vector<1xf32>
    %5 = vector.shape_cast %4 : vector<1xf32> to vector<1x1xf32>
    %6 = math.sqrt %5 : vector<1x1xf32>
    %cst_4 = arith.constant 9.99999996E-13 : f32
    %7 = vector.broadcast %cst_4 : f32 to vector<1x1xf32>
    %8 = arith.maximumf %6, %7 : vector<1x1xf32>
    %9 = vector.broadcast %8 : vector<1x1xf32> to vector<1x36xf32>
    %10 = arith.divf %2, %9 : vector<1x36xf32>
    %cst_5 = arith.constant dense<0.000000e+00> : vector<1x8xf32>
    %11 = tpu.matmul %10, %0, %cst_5 {dimension_numbers = #tpu.dot_dimension_numbers<[1], [1], [0], [0], [0, 0, 1, 0], [], []>} : vector<1x36xf32>, vector<8x36xf32>, vector<1x8xf32> -> vector<1x8xf32>
    %12 = arith.mulf %11, %11 : vector<1x8xf32>
    %cst_6 = arith.constant dense<0.000000e+00> : vector<1xf32>
    %13 = vector.multi_reduction <add>, %12, %cst_6 [1] : vector<1x8xf32> to vector<1xf32>
    %14 = vector.shape_cast %13 : vector<1xf32> to vector<1x1xf32>
    %15 = math.sqrt %14 : vector<1x1xf32>
    %cst_7 = arith.constant 9.99999996E-13 : f32
    %16 = vector.broadcast %cst_7 : f32 to vector<1x1xf32>
    %17 = arith.maximumf %15, %16 : vector<1x1xf32>
    %18 = vector.broadcast %17 : vector<1x1xf32> to vector<1x8xf32>
    %19 = arith.divf %11, %18 : vector<1x8xf32>
    %20 = arith.mulf %11, %19 : vector<1x8xf32>
    %cst_8 = arith.constant dense<0.000000e+00> : vector<1xf32>
    %21 = vector.multi_reduction <add>, %20, %cst_8 [1] : vector<1x8xf32> to vector<1xf32>
    %22 = vector.shape_cast %21 : vector<1xf32> to vector<1x1xf32>
    %cst_9 = arith.constant 1.000000e+00 : f32
    %23 = vector.broadcast %cst_9 : f32 to vector<1x1xf32>
    %24 = arith.divf %23, %22 : vector<1x1xf32>
    %c0_10 = arith.constant 0 : index
    %c0_11 = arith.constant 0 : index
    %25 = vector.load %arg7[%c0_10, %c0_11] : memref<1x1xf32, #tpu.memory_space<vmem>>, vector<1x1xf32>
    tpu.vector_store %arg7[%c0_10, %c0_11], %24 {strides = array<i32>} : memref<1x1xf32, #tpu.memory_space<vmem>>, vector<1x1xf32>,
    %c0_12 = arith.constant 0 : index
    %c0_13 = arith.constant 0 : index
    %26 = vector.load %arg3[%c0_12, %c0_13] : memref<8x72xf32, #tpu.memory_space<vmem>>, vector<8x72xf32>
    %c0_14 = arith.constant 0 : index
    %c0_15 = arith.constant 0 : index
    %27 = vector.load %arg4[%c0_14, %c0_15] : memref<1x8xf32, #tpu.memory_space<vmem>>, vector<1x8xf32>
    %cst_16 = arith.constant dense<0.000000e+00> : vector<1x72xf32>
    %28 = tpu.matmul %27, %26, %cst_16 {dimension_numbers = #tpu.dot_dimension_numbers<[1], [0], [0], [1], [0, 0, 1, 1], [], []>} : vector<1x8xf32>, vector<8x72xf32>, vector<1x72xf32> -> vector<1x72xf32>
    %29 = arith.mulf %28, %28 : vector<1x72xf32>
    %cst_17 = arith.constant dense<0.000000e+00> : vector<1xf32>
    %30 = vector.multi_reduction <add>, %29, %cst_17 [1] : vector<1x72xf32> to vector<1xf32>
    %31 = vector.shape_cast %30 : vector<1xf32> to vector<1x1xf32>
    %32 = math.sqrt %31 : vector<1x1xf32>
    %cst_18 = arith.constant 9.99999996E-13 : f32
    %33 = vector.broadcast %cst_18 : f32 to vector<1x1xf32>
    %34 = arith.maximumf %32, %33 : vector<1x1xf32>
    %35 = vector.broadcast %34 : vector<1x1xf32> to vector<1x72xf32>
    %36 = arith.divf %28, %35 : vector<1x72xf32>
    %cst_19 = arith.constant dense<0.000000e+00> : vector<1x8xf32>
    %37 = tpu.matmul %36, %26, %cst_19 {dimension_numbers = #tpu.dot_dimension_numbers<[1], [1], [0], [0], [0, 0, 1, 0], [], []>} : vector<1x72xf32>, vector<8x72xf32>, vector<1x8xf32> -> vector<1x8xf32>
    %38 = arith.mulf %37, %37 : vector<1x8xf32>
    %cst_20 = arith.constant dense<0.000000e+00> : vector<1xf32>
    %39 = vector.multi_reduction <add>, %38, %cst_20 [1] : vector<1x8xf32> to vector<1xf32>
    %40 = vector.shape_cast %39 : vector<1xf32> to vector<1x1xf32>
    %41 = math.sqrt %40 : vector<1x1xf32>
    %cst_21 = arith.constant 9.99999996E-13 : f32
    %42 = vector.broadcast %cst_21 : f32 to vector<1x1xf32>
    %43 = arith.maximumf %41, %42 : vector<1x1xf32>
    %44 = vector.broadcast %43 : vector<1x1xf32> to vector<1x8xf32>
    %45 = arith.divf %37, %44 : vector<1x8xf32>
    %46 = arith.mulf %37, %45 : vector<1x8xf32>
    %cst_22 = arith.constant dense<0.000000e+00> : vector<1xf32>
    %47 = vector.multi_reduction <add>, %46, %cst_22 [1] : vector<1x8xf32> to vector<1xf32>
    %48 = vector.shape_cast %47 : vector<1xf32> to vector<1x1xf32>
    %cst_23 = arith.constant 1.000000e+00 : f32
    %49 = vector.broadcast %cst_23 : f32 to vector<1x1xf32>
    %50 = arith.divf %49, %48 : vector<1x1xf32>
    %c0_24 = arith.constant 0 : index
    %c0_25 = arith.constant 0 : index
    %51 = vector.load %arg8[%c0_24, %c0_25] : memref<1x1xf32, #tpu.memory_space<vmem>>, vector<1x1xf32>
    tpu.vector_store %arg8[%c0_24, %c0_25], %50 {strides = array<i32>} : memref<1x1xf32, #tpu.memory_space<vmem>>, vector<1x1xf32>,
    %c0_26 = arith.constant 0 : index
    %c0_27 = arith.constant 0 : index
    %52 = vector.load %arg5[%c0_26, %c0_27] : memref<8x4xf32, #tpu.memory_space<vmem>>, vector<8x4xf32>
    %c0_28 = arith.constant 0 : index
    %c0_29 = arith.constant 0 : index
    %53 = vector.load %arg6[%c0_28, %c0_29] : memref<1x8xf32, #tpu.memory_space<vmem>>, vector<1x8xf32>
    %cst_30 = arith.constant dense<0.000000e+00> : vector<1x4xf32>
    %54 = tpu.matmul %53, %52, %cst_30 {dimension_numbers = #tpu.dot_dimension_numbers<[1], [0], [0], [1], [0, 0, 1, 1], [], []>} : vector<1x8xf32>, vector<8x4xf32>, vector<1x4xf32> -> vector<1x4xf32>
    %55 = arith.mulf %54, %54 : vector<1x4xf32>
    %cst_31 = arith.constant dense<0.000000e+00> : vector<1xf32>
    %56 = vector.multi_reduction <add>, %55, %cst_31 [1] : vector<1x4xf32> to vector<1xf32>
    %57 = vector.shape_cast %56 : vector<1xf32> to vector<1x1xf32>
    %58 = math.sqrt %57 : vector<1x1xf32>
    %cst_32 = arith.constant 9.99999996E-13 : f32
    %59 = vector.broadcast %cst_32 : f32 to vector<1x1xf32>
    %60 = arith.maximumf %58, %59 : vector<1x1xf32>
    %61 = vector.broadcast %60 : vector<1x1xf32> to vector<1x4xf32>
    %62 = arith.divf %54, %61 : vector<1x4xf32>
    %cst_33 = arith.constant dense<0.000000e+00> : vector<1x8xf32>
    %63 = tpu.matmul %62, %52, %cst_33 {dimension_numbers = #tpu.dot_dimension_numbers<[1], [1], [0], [0], [0, 0, 1, 0], [], []>} : vector<1x4xf32>, vector<8x4xf32>, vector<1x8xf32> -> vector<1x8xf32>
    %64 = arith.mulf %63, %63 : vector<1x8xf32>
    %cst_34 = arith.constant dense<0.000000e+00> : vector<1xf32>
    %65 = vector.multi_reduction <add>, %64, %cst_34 [1] : vector<1x8xf32> to vector<1xf32>
    %66 = vector.shape_cast %65 : vector<1xf32> to vector<1x1xf32>
    %67 = math.sqrt %66 : vector<1x1xf32>
    %cst_35 = arith.constant 9.99999996E-13 : f32
    %68 = vector.broadcast %cst_35 : f32 to vector<1x1xf32>
    %69 = arith.maximumf %67, %68 : vector<1x1xf32>
    %70 = vector.broadcast %69 : vector<1x1xf32> to vector<1x8xf32>
    %71 = arith.divf %63, %70 : vector<1x8xf32>
    %72 = arith.mulf %63, %71 : vector<1x8xf32>
    %cst_36 = arith.constant dense<0.000000e+00> : vector<1xf32>
    %73 = vector.multi_reduction <add>, %72, %cst_36 [1] : vector<1x8xf32> to vector<1xf32>
    %74 = vector.shape_cast %73 : vector<1xf32> to vector<1x1xf32>
    %cst_37 = arith.constant 1.000000e+00 : f32
    %75 = vector.broadcast %cst_37 : f32 to vector<1x1xf32>
    %76 = arith.divf %75, %74 : vector<1x1xf32>
    %c0_38 = arith.constant 0 : index
    %c0_39 = arith.constant 0 : index
    %77 = vector.load %arg9[%c0_38, %c0_39] : memref<1x1xf32, #tpu.memory_space<vmem>>, vector<1x1xf32>
    tpu.vector_store %arg9[%c0_38, %c0_39], %76 {strides = array<i32>} : memref<1x1xf32, #tpu.memory_space<vmem>>, vector<1x1xf32>,
    return
  }
  func.func @transform_0(%arg0: i32) -> (i32, i32) {
    %c0_i32 = arith.constant 0 : i32
    %c0_i32_0 = arith.constant 0 : i32
    %c0_i32_1 = arith.constant 0 : i32
    return %c0_i32, %c0_i32_0 : i32, i32
  }
  func.func @transform_1(%arg0: i32) -> (i32, i32) {
    %c0_i32 = arith.constant 0 : i32
    %c0_i32_0 = arith.constant 0 : i32
    %c0_i32_1 = arith.constant 0 : i32
    return %c0_i32, %c0_i32_0 : i32, i32
  }
  func.func @transform_2(%arg0: i32) -> (i32, i32) {
    %c0_i32 = arith.constant 0 : i32
    %c0_i32_0 = arith.constant 0 : i32
    %c0_i32_1 = arith.constant 0 : i32
    return %c0_i32, %c0_i32_0 : i32, i32
  }
  func.func @transform_3(%arg0: i32) -> (i32, i32) {
    %c0_i32 = arith.constant 0 : i32
    %c0_i32_0 = arith.constant 0 : i32
    %c0_i32_1 = arith.constant 0 : i32
    return %c0_i32, %c0_i32_0 : i32, i32
  }
  func.func @transform_4(%arg0: i32) -> (i32, i32) {
    %c0_i32 = arith.constant 0 : i32
    %c0_i32_0 = arith.constant 0 : i32
    %c0_i32_1 = arith.constant 0 : i32
    return %c0_i32, %c0_i32_0 : i32, i32
  }
  func.func @transform_5(%arg0: i32) -> (i32, i32) {
    %c0_i32 = arith.constant 0 : i32
    %c0_i32_0 = arith.constant 0 : i32
    %c0_i32_1 = arith.constant 0 : i32
    return %c0_i32, %c0_i32_0 : i32, i32
  }
  func.func @transform_6(%arg0: i32) -> (i32, i32) {
    %c0_i32 = arith.constant 0 : i32
    %c0_i32_0 = arith.constant 0 : i32
    %c0_i32_1 = arith.constant 0 : i32
    return %c0_i32, %c0_i32_0 : i32, i32
  }
  func.func @transform_7(%arg0: i32) -> (i32, i32) {
    %c0_i32 = arith.constant 0 : i32
    %c0_i32_0 = arith.constant 0 : i32
    %c0_i32_1 = arith.constant 0 : i32
    return %c0_i32, %c0_i32_0 : i32, i32
  }
  func.func @transform_8(%arg0: i32) -> (i32, i32) {
    %c0_i32 = arith.constant 0 : i32
    %c0_i32_0 = arith.constant 0 : i32
    %c0_i32_1 = arith.constant 0 : i32
    return %c0_i32, %c0_i32_0 : i32, i32
  }
}

module attributes {stable_mosaic.version = 11 : i64} {
  func.func @_dblock_fused_kernel(%arg0: i32, %arg1: memref<1x1xf32, #tpu.memory_space<smem>>, %arg2: memref<1x1xf32, #tpu.memory_space<smem>>, %arg3: memref<1x1xf32, #tpu.memory_space<smem>>, %arg4: memref<1x16x16x4xf32, #tpu.memory_space<vmem>>, %arg5: memref<36x8xf32, #tpu.memory_space<vmem>>, %arg6: memref<1x8xf32, #tpu.memory_space<vmem>>, %arg7: memref<8x72xf32, #tpu.memory_space<vmem>>, %arg8: memref<8x1xf32, #tpu.memory_space<vmem>>, %arg9: memref<8x4xf32, #tpu.memory_space<vmem>>, %arg10: memref<8x1xf32, #tpu.memory_space<vmem>>, %arg11: memref<1x8x256xf32, #tpu.memory_space<vmem>>, %arg12: memref<18x18x4xf32, #tpu.memory_space<vmem>>, %arg13: memref<18x18x8xf32, #tpu.memory_space<vmem>>) attributes {dimension_semantics = [#tpu.dimension_semantics<parallel>], iteration_bounds = array<i64: 2>, scalar_prefetch = 0 : i64, scratch_operands = 2 : i64, tpu.core_type = #tpu.core_type<tc>, window_params = [{transform_indices = @transform_0, window_bounds = array<i64: 1, 1>}, {transform_indices = @transform_1, window_bounds = array<i64: 1, 1>}, {transform_indices = @transform_2, window_bounds = array<i64: 1, 1>}, {transform_indices = @transform_3, window_bounds = array<i64: 1, 16, 16, 4>}, {pipeline_mode = #tpu.pipeline_mode<synchronous>, transform_indices = @transform_4, window_bounds = array<i64: 36, 8>}, {pipeline_mode = #tpu.pipeline_mode<synchronous>, transform_indices = @transform_5, window_bounds = array<i64: 1, 8>}, {pipeline_mode = #tpu.pipeline_mode<synchronous>, transform_indices = @transform_6, window_bounds = array<i64: 8, 72>}, {pipeline_mode = #tpu.pipeline_mode<synchronous>, transform_indices = @transform_7, window_bounds = array<i64: 8, 1>}, {pipeline_mode = #tpu.pipeline_mode<synchronous>, transform_indices = @transform_8, window_bounds = array<i64: 8, 4>}, {pipeline_mode = #tpu.pipeline_mode<synchronous>, transform_indices = @transform_9, window_bounds = array<i64: 8, 1>}, {transform_indices = @transform_10, window_bounds = array<i64: 1, 8, 256>}]} {
    %c0 = arith.constant 0 : index
    %c0_0 = arith.constant 0 : index
    %0 = memref.load %arg1[%c0, %c0_0] : memref<1x1xf32, #tpu.memory_space<smem>>
    %c0_1 = arith.constant 0 : index
    %c0_2 = arith.constant 0 : index
    %1 = memref.load %arg2[%c0_1, %c0_2] : memref<1x1xf32, #tpu.memory_space<smem>>
    %c0_3 = arith.constant 0 : index
    %c0_4 = arith.constant 0 : index
    %2 = memref.load %arg3[%c0_3, %c0_4] : memref<1x1xf32, #tpu.memory_space<smem>>
    %c0_5 = arith.constant 0 : index
    %c0_6 = arith.constant 0 : index
    %c0_7 = arith.constant 0 : index
    %c0_8 = arith.constant 0 : index
    %3 = vector.load %arg4[%c0_5, %c0_6, %c0_7, %c0_8] : memref<1x16x16x4xf32, #tpu.memory_space<vmem>>, vector<1x16x16x4xf32>
    %4 = vector.shape_cast %3 : vector<1x16x16x4xf32> to vector<16x16x4xf32>
    %cst = arith.constant 0.000000e+00 : f32
    %5 = vector.broadcast %cst : f32 to vector<18x18x4xf32>
    %c0_9 = arith.constant 0 : index
    %c0_10 = arith.constant 0 : index
    %c0_11 = arith.constant 0 : index
    %6 = vector.load %arg12[%c0_9, %c0_10, %c0_11] : memref<18x18x4xf32, #tpu.memory_space<vmem>>, vector<18x18x4xf32>
    tpu.vector_store %arg12[%c0_9, %c0_10, %c0_11], %5 {strides = array<i32>} : memref<18x18x4xf32, #tpu.memory_space<vmem>>, vector<18x18x4xf32>,
    %c1 = arith.constant 1 : index
    %c1_12 = arith.constant 1 : index
    %c0_13 = arith.constant 0 : index
    %7 = vector.load %arg12[%c1, %c1_12, %c0_13] : memref<18x18x4xf32, #tpu.memory_space<vmem>>, vector<16x16x4xf32>
    tpu.vector_store %arg12[%c1, %c1_12, %c0_13], %4 {strides = array<i32>} : memref<18x18x4xf32, #tpu.memory_space<vmem>>, vector<16x16x4xf32>,
    %c0_14 = arith.constant 0 : index
    %c0_15 = arith.constant 0 : index
    %c0_16 = arith.constant 0 : index
    %8 = vector.load %arg12[%c0_14, %c0_15, %c0_16] : memref<18x18x4xf32, #tpu.memory_space<vmem>>, vector<16x16x4xf32>
    %c0_17 = arith.constant 0 : index
    %c1_18 = arith.constant 1 : index
    %c0_19 = arith.constant 0 : index
    %9 = vector.load %arg12[%c0_17, %c1_18, %c0_19] : memref<18x18x4xf32, #tpu.memory_space<vmem>>, vector<16x16x4xf32>
    %c0_20 = arith.constant 0 : index
    %c2 = arith.constant 2 : index
    %c0_21 = arith.constant 0 : index
    %10 = vector.load %arg12[%c0_20, %c2, %c0_21] : memref<18x18x4xf32, #tpu.memory_space<vmem>>, vector<16x16x4xf32>
    %c1_22 = arith.constant 1 : index
    %c0_23 = arith.constant 0 : index
    %c0_24 = arith.constant 0 : index
    %11 = vector.load %arg12[%c1_22, %c0_23, %c0_24] : memref<18x18x4xf32, #tpu.memory_space<vmem>>, vector<16x16x4xf32>
    %c1_25 = arith.constant 1 : index
    %c1_26 = arith.constant 1 : index
    %c0_27 = arith.constant 0 : index
    %12 = vector.load %arg12[%c1_25, %c1_26, %c0_27] : memref<18x18x4xf32, #tpu.memory_space<vmem>>, vector<16x16x4xf32>
    %c1_28 = arith.constant 1 : index
    %c2_29 = arith.constant 2 : index
    %c0_30 = arith.constant 0 : index
    %13 = vector.load %arg12[%c1_28, %c2_29, %c0_30] : memref<18x18x4xf32, #tpu.memory_space<vmem>>, vector<16x16x4xf32>
    %c2_31 = arith.constant 2 : index
    %c0_32 = arith.constant 0 : index
    %c0_33 = arith.constant 0 : index
    %14 = vector.load %arg12[%c2_31, %c0_32, %c0_33] : memref<18x18x4xf32, #tpu.memory_space<vmem>>, vector<16x16x4xf32>
    %c2_34 = arith.constant 2 : index
    %c1_35 = arith.constant 1 : index
    %c0_36 = arith.constant 0 : index
    %15 = vector.load %arg12[%c2_34, %c1_35, %c0_36] : memref<18x18x4xf32, #tpu.memory_space<vmem>>, vector<16x16x4xf32>
    %c2_37 = arith.constant 2 : index
    %c2_38 = arith.constant 2 : index
    %c0_39 = arith.constant 0 : index
    %16 = vector.load %arg12[%c2_37, %c2_38, %c0_39] : memref<18x18x4xf32, #tpu.memory_space<vmem>>, vector<16x16x4xf32>
    %17 = tpu.concatenate %8, %9, %10, %11, %12, %13, %14, %15, %16 in 2 : vector<16x16x4xf32>, vector<16x16x4xf32>, vector<16x16x4xf32>, vector<16x16x4xf32>, vector<16x16x4xf32>, vector<16x16x4xf32>, vector<16x16x4xf32>, vector<16x16x4xf32>, vector<16x16x4xf32> -> vector<16x16x36xf32>
    %18 = vector.shape_cast %17 : vector<16x16x36xf32> to vector<256x36xf32>
    %c0_40 = arith.constant 0 : index
    %c0_41 = arith.constant 0 : index
    %19 = vector.load %arg5[%c0_40, %c0_41] : memref<36x8xf32, #tpu.memory_space<vmem>>, vector<36x8xf32>
    %cst_42 = arith.constant dense<0.000000e+00> : vector<256x8xf32>
    %20 = tpu.matmul %18, %19, %cst_42 {dimension_numbers = #tpu.dot_dimension_numbers<[1], [0], [0], [1], [0, 0, 1, 1], [], []>} : vector<256x36xf32>, vector<36x8xf32>, vector<256x8xf32> -> vector<256x8xf32>
    %21 = vector.broadcast %0 : f32 to vector<256x8xf32>
    %22 = arith.mulf %20, %21 : vector<256x8xf32>
    %c0_43 = arith.constant 0 : index
    %c0_44 = arith.constant 0 : index
    %23 = vector.load %arg6[%c0_43, %c0_44] : memref<1x8xf32, #tpu.memory_space<vmem>>, vector<1x8xf32>
    %24 = vector.broadcast %23 : vector<1x8xf32> to vector<256x8xf32>
    %25 = arith.addf %22, %24 : vector<256x8xf32>
    %cst_45 = arith.constant 0.000000e+00 : f32
    %26 = vector.broadcast %cst_45 : f32 to vector<256x8xf32>
    %27 = arith.maximumf %25, %26 : vector<256x8xf32>
    %cst_46 = arith.constant 0.000000e+00 : f32
    %28 = vector.broadcast %cst_46 : f32 to vector<18x18x8xf32>
    %c0_47 = arith.constant 0 : index
    %c0_48 = arith.constant 0 : index
    %c0_49 = arith.constant 0 : index
    %29 = vector.load %arg13[%c0_47, %c0_48, %c0_49] : memref<18x18x8xf32, #tpu.memory_space<vmem>>, vector<18x18x8xf32>
    tpu.vector_store %arg13[%c0_47, %c0_48, %c0_49], %28 {strides = array<i32>} : memref<18x18x8xf32, #tpu.memory_space<vmem>>, vector<18x18x8xf32>,
    %30 = vector.shape_cast %27 : vector<256x8xf32> to vector<16x16x8xf32>
    %c1_50 = arith.constant 1 : index
    %c1_51 = arith.constant 1 : index
    %c0_52 = arith.constant 0 : index
    %31 = vector.load %arg13[%c1_50, %c1_51, %c0_52] : memref<18x18x8xf32, #tpu.memory_space<vmem>>, vector<16x16x8xf32>
    tpu.vector_store %arg13[%c1_50, %c1_51, %c0_52], %30 {strides = array<i32>} : memref<18x18x8xf32, #tpu.memory_space<vmem>>, vector<16x16x8xf32>,
    %c0_53 = arith.constant 0 : index
    %c0_54 = arith.constant 0 : index
    %c0_55 = arith.constant 0 : index
    %32 = vector.load %arg13[%c0_53, %c0_54, %c0_55] : memref<18x18x8xf32, #tpu.memory_space<vmem>>, vector<16x16x8xf32>
    %c0_56 = arith.constant 0 : index
    %c1_57 = arith.constant 1 : index
    %c0_58 = arith.constant 0 : index
    %33 = vector.load %arg13[%c0_56, %c1_57, %c0_58] : memref<18x18x8xf32, #tpu.memory_space<vmem>>, vector<16x16x8xf32>
    %c0_59 = arith.constant 0 : index
    %c2_60 = arith.constant 2 : index
    %c0_61 = arith.constant 0 : index
    %34 = vector.load %arg13[%c0_59, %c2_60, %c0_61] : memref<18x18x8xf32, #tpu.memory_space<vmem>>, vector<16x16x8xf32>
    %c1_62 = arith.constant 1 : index
    %c0_63 = arith.constant 0 : index
    %c0_64 = arith.constant 0 : index
    %35 = vector.load %arg13[%c1_62, %c0_63, %c0_64] : memref<18x18x8xf32, #tpu.memory_space<vmem>>, vector<16x16x8xf32>
    %c1_65 = arith.constant 1 : index
    %c1_66 = arith.constant 1 : index
    %c0_67 = arith.constant 0 : index
    %36 = vector.load %arg13[%c1_65, %c1_66, %c0_67] : memref<18x18x8xf32, #tpu.memory_space<vmem>>, vector<16x16x8xf32>
    %c1_68 = arith.constant 1 : index
    %c2_69 = arith.constant 2 : index
    %c0_70 = arith.constant 0 : index
    %37 = vector.load %arg13[%c1_68, %c2_69, %c0_70] : memref<18x18x8xf32, #tpu.memory_space<vmem>>, vector<16x16x8xf32>
    %c2_71 = arith.constant 2 : index
    %c0_72 = arith.constant 0 : index
    %c0_73 = arith.constant 0 : index
    %38 = vector.load %arg13[%c2_71, %c0_72, %c0_73] : memref<18x18x8xf32, #tpu.memory_space<vmem>>, vector<16x16x8xf32>
    %c2_74 = arith.constant 2 : index
    %c1_75 = arith.constant 1 : index
    %c0_76 = arith.constant 0 : index
    %39 = vector.load %arg13[%c2_74, %c1_75, %c0_76] : memref<18x18x8xf32, #tpu.memory_space<vmem>>, vector<16x16x8xf32>
    %c2_77 = arith.constant 2 : index
    %c2_78 = arith.constant 2 : index
    %c0_79 = arith.constant 0 : index
    %40 = vector.load %arg13[%c2_77, %c2_78, %c0_79] : memref<18x18x8xf32, #tpu.memory_space<vmem>>, vector<16x16x8xf32>
    %41 = tpu.concatenate %32, %33, %34, %35, %36, %37, %38, %39, %40 in 2 : vector<16x16x8xf32>, vector<16x16x8xf32>, vector<16x16x8xf32>, vector<16x16x8xf32>, vector<16x16x8xf32>, vector<16x16x8xf32>, vector<16x16x8xf32>, vector<16x16x8xf32>, vector<16x16x8xf32> -> vector<16x16x72xf32>
    %42 = vector.shape_cast %41 : vector<16x16x72xf32> to vector<256x72xf32>
    %c0_80 = arith.constant 0 : index
    %c0_81 = arith.constant 0 : index
    %43 = vector.load %arg7[%c0_80, %c0_81] : memref<8x72xf32, #tpu.memory_space<vmem>>, vector<8x72xf32>
    %cst_82 = arith.constant dense<0.000000e+00> : vector<8x256xf32>
    %44 = tpu.matmul %43, %42, %cst_82 {dimension_numbers = #tpu.dot_dimension_numbers<[1], [1], [0], [0], [0, 0, 1, 0], [], []>} : vector<8x72xf32>, vector<256x72xf32>, vector<8x256xf32> -> vector<8x256xf32>
    %45 = vector.broadcast %1 : f32 to vector<8x256xf32>
    %46 = arith.mulf %44, %45 : vector<8x256xf32>
    %c0_83 = arith.constant 0 : index
    %c0_84 = arith.constant 0 : index
    %47 = vector.load %arg8[%c0_83, %c0_84] : memref<8x1xf32, #tpu.memory_space<vmem>>, vector<8x1xf32>
    %48 = vector.broadcast %47 : vector<8x1xf32> to vector<8x256xf32>
    %49 = arith.addf %46, %48 : vector<8x256xf32>
    %c0_85 = arith.constant 0 : index
    %c0_86 = arith.constant 0 : index
    %50 = vector.load %arg9[%c0_85, %c0_86] : memref<8x4xf32, #tpu.memory_space<vmem>>, vector<8x4xf32>
    %51 = vector.shape_cast %4 : vector<16x16x4xf32> to vector<256x4xf32>
    %cst_87 = arith.constant dense<0.000000e+00> : vector<8x256xf32>
    %52 = tpu.matmul %50, %51, %cst_87 {dimension_numbers = #tpu.dot_dimension_numbers<[1], [1], [0], [0], [0, 0, 1, 0], [], []>} : vector<8x4xf32>, vector<256x4xf32>, vector<8x256xf32> -> vector<8x256xf32>
    %53 = vector.broadcast %2 : f32 to vector<8x256xf32>
    %54 = arith.mulf %52, %53 : vector<8x256xf32>
    %55 = arith.addf %49, %54 : vector<8x256xf32>
    %c0_88 = arith.constant 0 : index
    %c0_89 = arith.constant 0 : index
    %56 = vector.load %arg10[%c0_88, %c0_89] : memref<8x1xf32, #tpu.memory_space<vmem>>, vector<8x1xf32>
    %57 = vector.broadcast %56 : vector<8x1xf32> to vector<8x256xf32>
    %58 = arith.addf %55, %57 : vector<8x256xf32>
    %c0_90 = arith.constant 0 : index
    %c0_91 = arith.constant 0 : index
    %c0_92 = arith.constant 0 : index
    %59 = vector.load %arg11[%c0_90, %c0_91, %c0_92] : memref<1x8x256xf32, #tpu.memory_space<vmem>>, vector<1x8x256xf32>
    %60 = vector.shape_cast %59 : vector<1x8x256xf32> to vector<8x256xf32>
    %61 = vector.shape_cast %58 : vector<8x256xf32> to vector<1x8x256xf32>
    tpu.vector_store %arg11[%c0_90, %c0_91, %c0_92], %61 {strides = array<i32>} : memref<1x8x256xf32, #tpu.memory_space<vmem>>, vector<1x8x256xf32>,
    return
  }
  func.func @transform_0(%arg0: i32) -> (i32, i32) {
    %c0_i32 = arith.constant 0 : i32
    %c0_i32_0 = arith.constant 0 : i32
    %c0_i32_1 = arith.constant 0 : i32
    return %c0_i32, %c0_i32_0 : i32, i32
  }
  func.func @transform_1(%arg0: i32) -> (i32, i32) {
    %c0_i32 = arith.constant 0 : i32
    %c0_i32_0 = arith.constant 0 : i32
    %c0_i32_1 = arith.constant 0 : i32
    return %c0_i32, %c0_i32_0 : i32, i32
  }
  func.func @transform_2(%arg0: i32) -> (i32, i32) {
    %c0_i32 = arith.constant 0 : i32
    %c0_i32_0 = arith.constant 0 : i32
    %c0_i32_1 = arith.constant 0 : i32
    return %c0_i32, %c0_i32_0 : i32, i32
  }
  func.func @transform_3(%arg0: i32) -> (i32, i32, i32, i32) {
    %c0_i32 = arith.constant 0 : i32
    %c0_i32_0 = arith.constant 0 : i32
    %c0_i32_1 = arith.constant 0 : i32
    %c0_i32_2 = arith.constant 0 : i32
    return %arg0, %c0_i32, %c0_i32_0, %c0_i32_1 : i32, i32, i32, i32
  }
  func.func @transform_4(%arg0: i32) -> (i32, i32) {
    %c0_i32 = arith.constant 0 : i32
    %c0_i32_0 = arith.constant 0 : i32
    %c0_i32_1 = arith.constant 0 : i32
    return %c0_i32, %c0_i32_0 : i32, i32
  }
  func.func @transform_5(%arg0: i32) -> (i32, i32) {
    %c0_i32 = arith.constant 0 : i32
    %c0_i32_0 = arith.constant 0 : i32
    %c0_i32_1 = arith.constant 0 : i32
    return %c0_i32, %c0_i32_0 : i32, i32
  }
  func.func @transform_6(%arg0: i32) -> (i32, i32) {
    %c0_i32 = arith.constant 0 : i32
    %c0_i32_0 = arith.constant 0 : i32
    %c0_i32_1 = arith.constant 0 : i32
    return %c0_i32, %c0_i32_0 : i32, i32
  }
  func.func @transform_7(%arg0: i32) -> (i32, i32) {
    %c0_i32 = arith.constant 0 : i32
    %c0_i32_0 = arith.constant 0 : i32
    %c0_i32_1 = arith.constant 0 : i32
    return %c0_i32, %c0_i32_0 : i32, i32
  }
  func.func @transform_8(%arg0: i32) -> (i32, i32) {
    %c0_i32 = arith.constant 0 : i32
    %c0_i32_0 = arith.constant 0 : i32
    %c0_i32_1 = arith.constant 0 : i32
    return %c0_i32, %c0_i32_0 : i32, i32
  }
  func.func @transform_9(%arg0: i32) -> (i32, i32) {
    %c0_i32 = arith.constant 0 : i32
    %c0_i32_0 = arith.constant 0 : i32
    %c0_i32_1 = arith.constant 0 : i32
    return %c0_i32, %c0_i32_0 : i32, i32
  }
  func.func @transform_10(%arg0: i32) -> (i32, i32, i32) {
    %c0_i32 = arith.constant 0 : i32
    %c0_i32_0 = arith.constant 0 : i32
    %c0_i32_1 = arith.constant 0 : i32
    return %arg0, %c0_i32, %c0_i32_0 : i32, i32, i32
  }
}

</mosaic_0001>

<llo_original>
// kernel: dblock_forward.2
$region0: #{dblock_forward.2}
  #allocation0 [shape = 'u32[]', space=smem, size = 0x4, offset = 0x4, fixed_abs, tag = 'smem constant byte address 0x4 - core index']
  #allocation1 [shape = 'u32[144,128]{1,0:T(1,128)}', space=vmem, size = 0x12000, scoped, tag = 'internal scratch']
  %s0 = inlined_call_operand.vmem [shape: f32[8,36], index: 0, kind: input, shape index: {}]
  %s1 = inlined_call_operand.vmem [shape: f32[1,8], index: 1, kind: input, shape index: {}]
  %s2 = inlined_call_operand.vmem [shape: f32[8,72], index: 2, kind: input, shape index: {}]
  %s3 = inlined_call_operand.vmem [shape: f32[1,8], index: 3, kind: input, shape index: {}]
  %s4 = inlined_call_operand.vmem [shape: f32[8,4], index: 4, kind: input, shape index: {}]
  %s5 = inlined_call_operand.vmem [shape: f32[1,8], index: 5, kind: input, shape index: {}]
  %s6 = inlined_call_operand.hbm [shape: f32[1,1], index: 6, kind: output, shape index: {0}]
  %s7 = inlined_call_operand.hbm [shape: f32[1,1], index: 7, kind: output, shape index: {1}]
  %s8 = inlined_call_operand.hbm [shape: f32[1,1], index: 8, kind: output, shape index: {2}]
  %9 = xla_tuple %s6, %s7, %s8
  %s10 = sld [smem:[#allocation0]]
  $region50: #{dblock_forward.2} parent=0
    _
  %s12 = ssub.s32 1, %s10
  %s13 = scalar_select 0, %s12, %s10
  $region1: #{dblock_forward.2} parent=0
    #allocation2 [shape = 'u8[512]{0}', space=vmem, size = 0x400, scoped, tag = 'output window, operand 0, single buffered']
    #allocation3 [shape = 's32[1]{0}', space=sflag, size = 0x4, scoped, tag = 'scoped memory for dblock_forward.2']
    #allocation4 [shape = 'u8[512]{0}', space=vmem, size = 0x400, scoped, tag = 'output window, operand 1, single buffered']
    #allocation5 [shape = 's32[1]{0}', space=sflag, size = 0x4, scoped, tag = 'scoped memory for dblock_forward.2']
    #allocation6 [shape = 'u8[512]{0}', space=vmem, size = 0x400, scoped, tag = 'output window, operand 2, single buffered']
    %14 = vsyncpa [#allocation3], 0
    %15 = vsyncpa [#allocation5], 0
    // Predicated region
    $region2: #{dblock_forward.2} parent=1 // pred_check
      _
    $region3: #{dblock_forward.2} parent=1 // pred_check_branch
      %17 = sbr.rel (0) target = $region5
    $region4: #{dblock_forward.2} parent=1 // pred_region
      _
    $region5: #{dblock_forward.2} parent=1 // pred_fallthru
      _
    // Predicated region
    $region6: #{dblock_forward.2} parent=1 // pred_check
      _
    $region7: #{dblock_forward.2} parent=1 // pred_check_branch
      %19 = sbr.rel (0) target = $region9
    $region8: #{dblock_forward.2} parent=1 // pred_region
      _
    $region9: #{dblock_forward.2} parent=1 // pred_fallthru
      _
    // Predicated region
    $region10: #{dblock_forward.2} parent=1 // pred_check
      _
    $region11: #{dblock_forward.2} parent=1 // pred_check_branch
      %21 = sbr.rel (0) target = $region13
    $region12: #{dblock_forward.2} parent=1 // pred_region
      _
    $region13: #{dblock_forward.2} parent=1 // pred_fallthru
      _
    // Predicated region
    $region14: #{dblock_forward.2} parent=1 // pred_check
      _
    $region15: #{dblock_forward.2} parent=1 // pred_check_branch
      %23 = sbr.rel (0) target = $region17
    $region16: #{dblock_forward.2} parent=1 // pred_region
      _
    $region17: #{dblock_forward.2} parent=1 // pred_fallthru
      _
    // Predicated region
    $region18: #{dblock_forward.2} parent=1 // pred_check
      _
    $region19: #{dblock_forward.2} parent=1 // pred_check_branch
      %25 = sbr.rel (0) target = $region21
    $region20: #{dblock_forward.2} parent=1 // pred_region
      _
    $region21: #{dblock_forward.2} parent=1 // pred_fallthru
      _
    // Predicated region
    $region22: #{dblock_forward.2} parent=1 // pred_check
      _
    $region23: #{dblock_forward.2} parent=1 // pred_check_branch
      %27 = sbr.rel (0) target = $region25
    $region24: #{dblock_forward.2} parent=1 // pred_region
      _
    $region25: #{dblock_forward.2} parent=1 // pred_fallthru
      _
    %v28 = vld [vmem:[%s0] sm:$0xff]
    %v29 = vld [vmem:[%s1] sm:$0x1]
    %vm30 = vcmask 64512
    %v32 = vsel %vm30, %v29, 0
    %34 = vmatprep.subr.mxu0 0.0
    %35 = vmatpush1.msra.mxu0 %v28
    %36 = vmatprep.subr.mxu0 0.0
    %37 = vmatpush1.msra.mxu0 0.0
    %38 = vmatprep.subr.mxu0 0.0
    %39 = vmatpush1.msra.mxu0 0.0
    %40 = vmatprep.subr.mxu0 0.0
    %41 = vmatpush1.msra.mxu0 0.0
    %42 = vmatprep.subr.mxu0 0.0
    %43 = vmatpush1.msra.mxu0 0.0
    %44 = vmatprep.subr.mxu0 0.0
    %45 = vmatpush1.msra.mxu0 0.0
    %46 = vmatprep.subr.mxu0 0.0
    %47 = vmatpush1.msra.mxu0 0.0
    %48 = vmatprep.subr.mxu0 0.0
    %49 = vmatpush1.msra.mxu0 0.0
    %50 = vmatprep.subr.mxu0 0.0
    %51 = vmatpush1.msra.mxu0 0.0
    %52 = vmatprep.subr.mxu0 0.0
    %53 = vmatpush1.msra.mxu0 0.0
    %54 = vmatprep.subr.mxu0 0.0
    %55 = vmatpush1.msra.mxu0 0.0
    %56 = vmatprep.subr.mxu0 0.0
    %57 = vmatpush1.msra.mxu0 0.0
    %58 = vmatprep.subr.mxu0 0.0
    %59 = vmatpush1.msra.mxu0 0.0
    %60 = vmatprep.subr.mxu0 0.0
    %61 = vmatpush1.msra.mxu0 0.0
    %62 = vmatprep.subr.mxu0 0.0
    %63 = vmatpush1.msra.mxu0 0.0
    %64 = vmatprep.subr.mxu0 0.0
    %65 = vmatpush1.msra.mxu0 0.0
    %66 = vmatprep.subr.mxu0 0.0
    %67 = vmatpush1.msra.mxu0 0.0
    %68 = vmatprep.subr.mxu0 0.0
    %69 = vmatpush1.msra.mxu0 0.0
    %70 = vmatprep.subr.mxu0 0.0
    %71 = vmatpush1.msra.mxu0 0.0
    %72 = vmatprep.subr.mxu0 0.0
    %73 = vmatpush1.msra.mxu0 0.0
    %74 = vmatprep.subr.mxu0 0.0
    %75 = vmatpush1.msra.mxu0 0.0
    %76 = vmatprep.subr.mxu0 0.0
    %77 = vmatpush1.msra.mxu0 0.0
    %78 = vmatprep.subr.mxu0 0.0
    %79 = vmatpush1.msra.mxu0 0.0
    %80 = vmatprep.subr.mxu0 0.0
    %81 = vmatpush1.msra.mxu0 0.0
    %82 = vmatprep.subr.mxu0 0.0
    %83 = vmatpush1.msra.mxu0 0.0
    %84 = vmatprep.subr.mxu0 0.0
    %85 = vmatpush1.msra.mxu0 0.0
    %86 = vmatprep.subr.mxu0 0.0
    %87 = vmatpush1.msra.mxu0 0.0
    %88 = vmatprep.subr.mxu0 0.0
    %89 = vmatpush1.msra.mxu0 0.0
    %90 = vmatprep.subr.mxu0 0.0
    %91 = vmatpush1.msra.mxu0 0.0
    %92 = vmatprep.subr.mxu0 0.0
    %93 = vmatpush1.msra.mxu0 0.0
    %94 = vmatprep.subr.mxu0 0.0
    %95 = vmatpush1.msra.mxu0 0.0
    %96 = vmatprep.subr.mxu0 0.0
    %97 = vmatpush1.msra.mxu0 0.0
    %98 = vmatprep.mubr.f32.mxu0 0.0
    %99 = vmatmul.mubr.f32.gmra.mrb[0].mxu0 %v32
    %v100 = vpop.f32.mrb[0].mxu0
    %v101 = vadd.f32 0.0, %v100
    %v102 = vpop.f32.mrb[0].mxu0
    %103 = vdwg.mxu0
    %v104 = vmul.f32 %v101, %v101
    %vm105 = vcmask 286720
    %v106 = vsel %vm105, %v104, 0.0
    %107 = vadd.xlane.f32.xlu0 %v106
    %v108 = vpop.xlane.xlu0 %107
    %v109 = vrsqrt.pop %v108
    %v110 = vmul.f32 %v108, %v109
    %vm111 = vcmp.eq.f32.partialorder %v108, inf
    %v112 = vsel %vm111, %v108, %v110
    %vm113 = vcmp.eq.f32.partialorder %v108, 0.0
    %v114 = vand.u32 %v108, 2147483648
    %v115 = vsel %vm113, %v114, %v112
    %v116 = vmax.f32 %v115, 1e-12
    %v117 = vrcp.pop %v116
    %v118 = vmul.f32 %v101, %v117
    %vm119 = vcmask 293888
    %v121 = vsel %vm119, %v118, 0
    %v124 = vsel %vm119, %v28, 0
    %126 = vmatprep.subr.mxu0 0.0
    %127 = vmatpush1.xpose.msra.mxu0 %v124
    %128 = vmatprep.subr.mxu0 0.0
    %129 = vmatpush1.xpose.msra.mxu0 0.0
    %130 = vmatprep.subr.mxu0 0.0
    %131 = vmatpush1.xpose.msra.mxu0 0.0
    %132 = vmatprep.subr.mxu0 0.0
    %133 = vmatpush1.xpose.msra.mxu0 0.0
    %134 = vmatprep.subr.mxu0 0.0
    %135 = vmatpush1.xpose.msra.mxu0 0.0
    %136 = vmatprep.subr.mxu0 0.0
    %137 = vmatpush1.xpose.msra.mxu0 0.0
    %138 = vmatprep.subr.mxu0 0.0
    %139 = vmatpush1.xpose.msra.mxu0 0.0
    %140 = vmatprep.subr.mxu0 0.0
    %141 = vmatpush1.xpose.msra.mxu0 0.0
    %142 = vmatprep.subr.mxu0 0.0
    %143 = vmatpush1.xpose.msra.mxu0 0.0
    %144 = vmatprep.subr.mxu0 0.0
    %145 = vmatpush1.xpose.msra.mxu0 0.0
    %146 = vmatprep.subr.mxu0 0.0
    %147 = vmatpush1.xpose.msra.mxu0 0.0
    %148 = vmatprep.subr.mxu0 0.0
    %149 = vmatpush1.xpose.msra.mxu0 0.0
    %150 = vmatprep.subr.mxu0 0.0
    %151 = vmatpush1.xpose.msra.mxu0 0.0
    %152 = vmatprep.subr.mxu0 0.0
    %153 = vmatpush1.xpose.msra.mxu0 0.0
    %154 = vmatprep.subr.mxu0 0.0
    %155 = vmatpush1.xpose.msra.mxu0 0.0
    %156 = vmatprep.subr.mxu0 0.0
    %157 = vmatpush1.xpose.msra.mxu0 0.0
    %158 = vmatprep.subr.mxu0 0.0
    %159 = vmatpush1.xpose.msra.mxu0 0.0
    %160 = vmatprep.subr.mxu0 0.0
    %161 = vmatpush1.xpose.msra.mxu0 0.0
    %162 = vmatprep.subr.mxu0 0.0
    %163 = vmatpush1.xpose.msra.mxu0 0.0
    %164 = vmatprep.subr.mxu0 0.0
    %165 = vmatpush1.xpose.msra.mxu0 0.0
    %166 = vmatprep.subr.mxu0 0.0
    %167 = vmatpush1.xpose.msra.mxu0 0.0
    %168 = vmatprep.subr.mxu0 0.0
    %169 = vmatpush1.xpose.msra.mxu0 0.0
    %170 = vmatprep.subr.mxu0 0.0
    %171 = vmatpush1.xpose.msra.mxu0 0.0
    %172 = vmatprep.subr.mxu0 0.0
    %173 = vmatpush1.xpose.msra.mxu0 0.0
    %174 = vmatprep.subr.mxu0 0.0
    %175 = vmatpush1.xpose.msra.mxu0 0.0
    %176 = vmatprep.subr.mxu0 0.0
    %177 = vmatpush1.xpose.msra.mxu0 0.0
    %178 = vmatprep.subr.mxu0 0.0
    %179 = vmatpush1.xpose.msra.mxu0 0.0
    %180 = vmatprep.subr.mxu0 0.0
    %181 = vmatpush1.xpose.msra.mxu0 0.0
    %182 = vmatprep.subr.mxu0 0.0
    %183 = vmatpush1.xpose.msra.mxu0 0.0
    %184 = vmatprep.subr.mxu0 0.0
    %185 = vmatpush1.xpose.msra.mxu0 0.0
    %186 = vmatprep.subr.mxu0 0.0
    %187 = vmatpush1.xpose.msra.mxu0 0.0
    %188 = vmatprep.subr.mxu0 0.0
    %189 = vmatpush1.xpose.msra.mxu0 0.0
    %190 = vmatprep.mubr.f32.mxu0 0.0
    %191 = vmatmul.mubr.f32.gmra.mrb[0].mxu0 %v121
    %v192 = vpop.f32.mrb[0].mxu0
    %v193 = vadd.f32 0.0, %v192
    %v194 = vpop.f32.mrb[0].mxu0
    %195 = vdwg.mxu0
    %v196 = vmul.f32 %v193, %v193
    %vm197 = vcmask 57344
    %v198 = vsel %vm197, %v196, 0.0
    %199 = vadd.xlane.f32.xlu0 %v198
    %v200 = vpop.xlane.xlu0 %199
    %v201 = vrsqrt.pop %v200
    %v202 = vmul.f32 %v200, %v201
    %vm203 = vcmp.eq.f32.partialorder %v200, inf
    %v204 = vsel %vm203, %v200, %v202
    %vm205 = vcmp.eq.f32.partialorder %v200, 0.0
    %v206 = vand.u32 %v200, 2147483648
    %v207 = vsel %vm205, %v206, %v204
    %v208 = vmax.f32 %v207, 1e-12
    %v209 = vrcp.pop %v208
    %v210 = vmul.f32 %v193, %v209
    %v211 = vmul.f32 %v193, %v210
    %v212 = vsel %vm197, %v211, 0.0
    %213 = vadd.xlane.f32.xlu0 %v212
    %v214 = vpop.xlane.xlu0 %213
    %v215 = vrcp.pop %v214
    %v216 = vmul.f32 1.0, %v215
    %vm217 = vcmask 0
    %218 = vst.msk [vmem:[#allocation2] sm:$0x1] %vm217, %v216
    %v219 = vld [vmem:[%s2] sm:$0xff]
    %v220 = vld [vmem:[%s3] sm:$0x1]
    %v222 = vsel %vm30, %v220, 0
    %224 = vmatprep.subr.mxu0 0.0
    %225 = vmatpush1.msra.mxu0 %v219
    %226 = vmatprep.subr.mxu0 0.0
    %227 = vmatpush1.msra.mxu0 0.0
    %228 = vmatprep.subr.mxu0 0.0
    %229 = vmatpush1.msra.mxu0 0.0
    %230 = vmatprep.subr.mxu0 0.0
    %231 = vmatpush1.msra.mxu0 0.0
    %232 = vmatprep.subr.mxu0 0.0
    %233 = vmatpush1.msra.mxu0 0.0
    %234 = vmatprep.subr.mxu0 0.0
    %235 = vmatpush1.msra.mxu0 0.0
    %236 = vmatprep.subr.mxu0 0.0
    %237 = vmatpush1.msra.mxu0 0.0
    %238 = vmatprep.subr.mxu0 0.0
    %239 = vmatpush1.msra.mxu0 0.0
    %240 = vmatprep.subr.mxu0 0.0
    %241 = vmatpush1.msra.mxu0 0.0
    %242 = vmatprep.subr.mxu0 0.0
    %243 = vmatpush1.msra.mxu0 0.0
    %244 = vmatprep.subr.mxu0 0.0
    %245 = vmatpush1.msra.mxu0 0.0
    %246 = vmatprep.subr.mxu0 0.0
    %247 = vmatpush1.msra.mxu0 0.0
    %248 = vmatprep.subr.mxu0 0.0
    %249 = vmatpush1.msra.mxu0 0.0
    %250 = vmatprep.subr.mxu0 0.0
    %251 = vmatpush1.msra.mxu0 0.0
    %252 = vmatprep.subr.mxu0 0.0
    %253 = vmatpush1.msra.mxu0 0.0
    %254 = vmatprep.subr.mxu0 0.0
    %255 = vmatpush1.msra.mxu0 0.0
    %256 = vmatprep.subr.mxu0 0.0
    %257 = vmatpush1.msra.mxu0 0.0
    %258 = vmatprep.subr.mxu0 0.0
    %259 = vmatpush1.msra.mxu0 0.0
    %260 = vmatprep.subr.mxu0 0.0
    %261 = vmatpush1.msra.mxu0 0.0
    %262 = vmatprep.subr.mxu0 0.0
    %263 = vmatpush1.msra.mxu0 0.0
    %264 = vmatprep.subr.mxu0 0.0
    %265 = vmatpush1.msra.mxu0 0.0
    %266 = vmatprep.subr.mxu0 0.0
    %267 = vmatpush1.msra.mxu0 0.0
    %268 = vmatprep.subr.mxu0 0.0
    %269 = vmatpush1.msra.mxu0 0.0
    %270 = vmatprep.subr.mxu0 0.0
    %271 = vmatpush1.msra.mxu0 0.0
    %272 = vmatprep.subr.mxu0 0.0
    %273 = vmatpush1.msra.mxu0 0.0
    %274 = vmatprep.subr.mxu0 0.0
    %275 = vmatpush1.msra.mxu0 0.0
    %276 = vmatprep.subr.mxu0 0.0
    %277 = vmatpush1.msra.mxu0 0.0
    %278 = vmatprep.subr.mxu0 0.0
    %279 = vmatpush1.msra.mxu0 0.0
    %280 = vmatprep.subr.mxu0 0.0
    %281 = vmatpush1.msra.mxu0 0.0
    %282 = vmatprep.subr.mxu0 0.0
    %283 = vmatpush1.msra.mxu0 0.0
    %284 = vmatprep.subr.mxu0 0.0
    %285 = vmatpush1.msra.mxu0 0.0
    %286 = vmatprep.subr.mxu0 0.0
    %287 = vmatpush1.msra.mxu0 0.0
    %288 = vmatprep.mubr.f32.mxu0 0.0
    %289 = vmatmul.mubr.f32.gmra.mrb[0].mxu0 %v222
    %v290 = vpop.f32.mrb[0].mxu0
    %v291 = vadd.f32 0.0, %v290
    %v292 = vpop.f32.mrb[0].mxu0
    %293 = vdwg.mxu0
    %v294 = vmul.f32 %v291, %v291
    %vm295 = vcmask 581632
    %v296 = vsel %vm295, %v294, 0.0
    %297 = vadd.xlane.f32.xlu0 %v296
    %v298 = vpop.xlane.xlu0 %297
    %v299 = vrsqrt.pop %v298
    %v300 = vmul.f32 %v298, %v299
    %vm301 = vcmp.eq.f32.partialorder %v298, inf
    %v302 = vsel %vm301, %v298, %v300
    %vm303 = vcmp.eq.f32.partialorder %v298, 0.0
    %v304 = vand.u32 %v298, 2147483648
    %v305 = vsel %vm303, %v304, %v302
    %v306 = vmax.f32 %v305, 1e-12
    %v307 = vrcp.pop %v306
    %v308 = vmul.f32 %v291, %v307
    %vm309 = vcmask 588800
    %v311 = vsel %vm309, %v308, 0
    %v314 = vsel %vm309, %v219, 0
    %316 = vmatprep.subr.mxu0 0.0
    %317 = vmatpush1.xpose.msra.mxu0 %v314
    %318 = vmatprep.subr.mxu0 0.0
    %319 = vmatpush1.xpose.msra.mxu0 0.0
    %320 = vmatprep.subr.mxu0 0.0
    %321 = vmatpush1.xpose.msra.mxu0 0.0
    %322 = vmatprep.subr.mxu0 0.0
    %323 = vmatpush1.xpose.msra.mxu0 0.0
    %324 = vmatprep.subr.mxu0 0.0
    %325 = vmatpush1.xpose.msra.mxu0 0.0
    %326 = vmatprep.subr.mxu0 0.0
    %327 = vmatpush1.xpose.msra.mxu0 0.0
    %328 = vmatprep.subr.mxu0 0.0
    %329 = vmatpush1.xpose.msra.mxu0 0.0
    %330 = vmatprep.subr.mxu0 0.0
    %331 = vmatpush1.xpose.msra.mxu0 0.0
    %332 = vmatprep.subr.mxu0 0.0
    %333 = vmatpush1.xpose.msra.mxu0 0.0
    %334 = vmatprep.subr.mxu0 0.0
    %335 = vmatpush1.xpose.msra.mxu0 0.0
    %336 = vmatprep.subr.mxu0 0.0
    %337 = vmatpush1.xpose.msra.mxu0 0.0
    %338 = vmatprep.subr.mxu0 0.0
    %339 = vmatpush1.xpose.msra.mxu0 0.0
    %340 = vmatprep.subr.mxu0 0.0
    %341 = vmatpush1.xpose.msra.mxu0 0.0
    %342 = vmatprep.subr.mxu0 0.0
    %343 = vmatpush1.xpose.msra.mxu0 0.0
    %344 = vmatprep.subr.mxu0 0.0
    %345 = vmatpush1.xpose.msra.mxu0 0.0
    %346 = vmatprep.subr.mxu0 0.0
    %347 = vmatpush1.xpose.msra.mxu0 0.0
    %348 = vmatprep.subr.mxu0 0.0
    %349 = vmatpush1.xpose.msra.mxu0 0.0
    %350 = vmatprep.subr.mxu0 0.0
    %351 = vmatpush1.xpose.msra.mxu0 0.0
    %352 = vmatprep.subr.mxu0 0.0
    %353 = vmatpush1.xpose.msra.mxu0 0.0
    %354 = vmatprep.subr.mxu0 0.0
    %355 = vmatpush1.xpose.msra.mxu0 0.0
    %356 = vmatprep.subr.mxu0 0.0
    %357 = vmatpush1.xpose.msra.mxu0 0.0
    %358 = vmatprep.subr.mxu0 0.0
    %359 = vmatpush1.xpose.msra.mxu0 0.0
    %360 = vmatprep.subr.mxu0 0.0
    %361 = vmatpush1.xpose.msra.mxu0 0.0
    %362 = vmatprep.subr.mxu0 0.0
    %363 = vmatpush1.xpose.msra.mxu0 0.0
    %364 = vmatprep.subr.mxu0 0.0
    %365 = vmatpush1.xpose.msra.mxu0 0.0
    %366 = vmatprep.subr.mxu0 0.0
    %367 = vmatpush1.xpose.msra.mxu0 0.0
    %368 = vmatprep.subr.mxu0 0.0
    %369 = vmatpush1.xpose.msra.mxu0 0.0
    %370 = vmatprep.subr.mxu0 0.0
    %371 = vmatpush1.xpose.msra.mxu0 0.0
    %372 = vmatprep.subr.mxu0 0.0
    %373 = vmatpush1.xpose.msra.mxu0 0.0
    %374 = vmatprep.subr.mxu0 0.0
    %375 = vmatpush1.xpose.msra.mxu0 0.0
    %376 = vmatprep.subr.mxu0 0.0
    %377 = vmatpush1.xpose.msra.mxu0 0.0
    %378 = vmatprep.subr.mxu0 0.0
    %379 = vmatpush1.xpose.msra.mxu0 0.0
    %380 = vmatprep.mubr.f32.mxu0 0.0
    %381 = vmatmul.mubr.f32.gmra.mrb[0].mxu0 %v311
    %v382 = vpop.f32.mrb[0].mxu0
    %v383 = vadd.f32 0.0, %v382
    %v384 = vpop.f32.mrb[0].mxu0
    %385 = vdwg.mxu0
    %v386 = vmul.f32 %v383, %v383
    %v387 = vsel %vm197, %v386, 0.0
    %388 = vadd.xlane.f32.xlu0 %v387
    %v389 = vpop.xlane.xlu0 %388
    %v390 = vrsqrt.pop %v389
    %v391 = vmul.f32 %v389, %v390
    %vm392 = vcmp.eq.f32.partialorder %v389, inf
    %v393 = vsel %vm392, %v389, %v391
    %vm394 = vcmp.eq.f32.partialorder %v389, 0.0
    %v395 = vand.u32 %v389, 2147483648
    %v396 = vsel %vm394, %v395, %v393
    %v397 = vmax.f32 %v396, 1e-12
    %v398 = vrcp.pop %v397
    %v399 = vmul.f32 %v383, %v398
    %v400 = vmul.f32 %v383, %v399
    %v401 = vsel %vm197, %v400, 0.0
    %402 = vadd.xlane.f32.xlu0 %v401
    %v403 = vpop.xlane.xlu0 %402
    %v404 = vrcp.pop %v403
    %v405 = vmul.f32 1.0, %v404
    %406 = vst.msk [vmem:[#allocation4] sm:$0x1] %vm217, %v405
    %v407 = vld [vmem:[%s4] sm:$0xff]
    %v408 = vld [vmem:[%s5] sm:$0x1]
    %v410 = vsel %vm30, %v408, 0
    %412 = vmatprep.subr.mxu0 0.0
    %413 = vmatpush1.msra.mxu0 %v407
    %414 = vmatprep.subr.mxu0 0.0
    %415 = vmatpush1.msra.mxu0 0.0
    %416 = vmatprep.subr.mxu0 0.0
    %417 = vmatpush1.msra.mxu0 0.0
    %418 = vmatprep.subr.mxu0 0.0
    %419 = vmatpush1.msra.mxu0 0.0
    %420 = vmatprep.subr.mxu0 0.0
    %421 = vmatpush1.msra.mxu0 0.0
    %422 = vmatprep.subr.mxu0 0.0
    %423 = vmatpush1.msra.mxu0 0.0
    %424 = vmatprep.subr.mxu0 0.0
    %425 = vmatpush1.msra.mxu0 0.0
    %426 = vmatprep.subr.mxu0 0.0
    %427 = vmatpush1.msra.mxu0 0.0
    %428 = vmatprep.subr.mxu0 0.0
    %429 = vmatpush1.msra.mxu0 0.0
    %430 = vmatprep.subr.mxu0 0.0
    %431 = vmatpush1.msra.mxu0 0.0
    %432 = vmatprep.subr.mxu0 0.0
    %433 = vmatpush1.msra.mxu0 0.0
    %434 = vmatprep.subr.mxu0 0.0
    %435 = vmatpush1.msra.mxu0 0.0
    %436 = vmatprep.subr.mxu0 0.0
    %437 = vmatpush1.msra.mxu0 0.0
    %438 = vmatprep.subr.mxu0 0.0
    %439 = vmatpush1.msra.mxu0 0.0
    %440 = vmatprep.subr.mxu0 0.0
    %441 = vmatpush1.msra.mxu0 0.0
    %442 = vmatprep.subr.mxu0 0.0
    %443 = vmatpush1.msra.mxu0 0.0
    %444 = vmatprep.subr.mxu0 0.0
    %445 = vmatpush1.msra.mxu0 0.0
    %446 = vmatprep.subr.mxu0 0.0
    %447 = vmatpush1.msra.mxu0 0.0
    %448 = vmatprep.subr.mxu0 0.0
    %449 = vmatpush1.msra.mxu0 0.0
    %450 = vmatprep.subr.mxu0 0.0
    %451 = vmatpush1.msra.mxu0 0.0
    %452 = vmatprep.subr.mxu0 0.0
    %453 = vmatpush1.msra.mxu0 0.0
    %454 = vmatprep.subr.mxu0 0.0
    %455 = vmatpush1.msra.mxu0 0.0
    %456 = vmatprep.subr.mxu0 0.0
    %457 = vmatpush1.msra.mxu0 0.0
    %458 = vmatprep.subr.mxu0 0.0
    %459 = vmatpush1.msra.mxu0 0.0
    %460 = vmatprep.subr.mxu0 0.0
    %461 = vmatpush1.msra.mxu0 0.0
    %462 = vmatprep.subr.mxu0 0.0
    %463 = vmatpush1.msra.mxu0 0.0
    %464 = vmatprep.subr.mxu0 0.0
    %465 = vmatpush1.msra.mxu0 0.0
    %466 = vmatprep.subr.mxu0 0.0
    %467 = vmatpush1.msra.mxu0 0.0
    %468 = vmatprep.subr.mxu0 0.0
    %469 = vmatpush1.msra.mxu0 0.0
    %470 = vmatprep.subr.mxu0 0.0
    %471 = vmatpush1.msra.mxu0 0.0
    %472 = vmatprep.subr.mxu0 0.0
    %473 = vmatpush1.msra.mxu0 0.0
    %474 = vmatprep.subr.mxu0 0.0
    %475 = vmatpush1.msra.mxu0 0.0
    %476 = vmatprep.mubr.f32.mxu0 0.0
    %477 = vmatmul.mubr.f32.gmra.mrb[0].mxu0 %v410
    %v478 = vpop.f32.mrb[0].mxu0
    %v479 = vadd.f32 0.0, %v478
    %v480 = vpop.f32.mrb[0].mxu0
    %481 = vdwg.mxu0
    %v482 = vmul.f32 %v479, %v479
    %vm483 = vcmask 24576
    %v484 = vsel %vm483, %v482, 0.0
    %485 = vadd.xlane.f32.xlu0 %v484
    %v486 = vpop.xlane.xlu0 %485
    %v487 = vrsqrt.pop %v486
    %v488 = vmul.f32 %v486, %v487
    %vm489 = vcmp.eq.f32.partialorder %v486, inf
    %v490 = vsel %vm489, %v486, %v488
    %vm491 = vcmp.eq.f32.partialorder %v486, 0.0
    %v492 = vand.u32 %v486, 2147483648
    %v493 = vsel %vm491, %v492, %v490
    %v494 = vmax.f32 %v493, 1e-12
    %v495 = vrcp.pop %v494
    %v496 = vmul.f32 %v479, %v495
    %vm497 = vcmask 31744
    %v499 = vsel %vm497, %v496, 0
    %v502 = vsel %vm497, %v407, 0
    %504 = vmatprep.subr.mxu0 0.0
    %505 = vmatpush1.xpose.msra.mxu0 %v502
    %506 = vmatprep.subr.mxu0 0.0
    %507 = vmatpush1.xpose.msra.mxu0 0.0
    %508 = vmatprep.subr.mxu0 0.0
    %509 = vmatpush1.xpose.msra.mxu0 0.0
    %510 = vmatprep.subr.mxu0 0.0
    %511 = vmatpush1.xpose.msra.mxu0 0.0
    %512 = vmatprep.subr.mxu0 0.0
    %513 = vmatpush1.xpose.msra.mxu0 0.0
    %514 = vmatprep.subr.mxu0 0.0
    %515 = vmatpush1.xpose.msra.mxu0 0.0
    %516 = vmatprep.subr.mxu0 0.0
    %517 = vmatpush1.xpose.msra.mxu0 0.0
    %518 = vmatprep.subr.mxu0 0.0
    %519 = vmatpush1.xpose.msra.mxu0 0.0
    %520 = vmatprep.subr.mxu0 0.0
    %521 = vmatpush1.xpose.msra.mxu0 0.0
    %522 = vmatprep.subr.mxu0 0.0
    %523 = vmatpush1.xpose.msra.mxu0 0.0
    %524 = vmatprep.subr.mxu0 0.0
    %525 = vmatpush1.xpose.msra.mxu0 0.0
    %526 = vmatprep.subr.mxu0 0.0
    %527 = vmatpush1.xpose.msra.mxu0 0.0
    %528 = vmatprep.subr.mxu0 0.0
    %529 = vmatpush1.xpose.msra.mxu0 0.0
    %530 = vmatprep.subr.mxu0 0.0
    %531 = vmatpush1.xpose.msra.mxu0 0.0
    %532 = vmatprep.subr.mxu0 0.0
    %533 = vmatpush1.xpose.msra.mxu0 0.0
    %534 = vmatprep.subr.mxu0 0.0
    %535 = vmatpush1.xpose.msra.mxu0 0.0
    %536 = vmatprep.subr.mxu0 0.0
    %537 = vmatpush1.xpose.msra.mxu0 0.0
    %538 = vmatprep.subr.mxu0 0.0
    %539 = vmatpush1.xpose.msra.mxu0 0.0
    %540 = vmatprep.subr.mxu0 0.0
    %541 = vmatpush1.xpose.msra.mxu0 0.0
    %542 = vmatprep.subr.mxu0 0.0
    %543 = vmatpush1.xpose.msra.mxu0 0.0
    %544 = vmatprep.subr.mxu0 0.0
    %545 = vmatpush1.xpose.msra.mxu0 0.0
    %546 = vmatprep.subr.mxu0 0.0
    %547 = vmatpush1.xpose.msra.mxu0 0.0
    %548 = vmatprep.subr.mxu0 0.0
    %549 = vmatpush1.xpose.msra.mxu0 0.0
    %550 = vmatprep.subr.mxu0 0.0
    %551 = vmatpush1.xpose.msra.mxu0 0.0
    %552 = vmatprep.subr.mxu0 0.0
    %553 = vmatpush1.xpose.msra.mxu0 0.0
    %554 = vmatprep.subr.mxu0 0.0
    %555 = vmatpush1.xpose.msra.mxu0 0.0
    %556 = vmatprep.subr.mxu0 0.0
    %557 = vmatpush1.xpose.msra.mxu0 0.0
    %558 = vmatprep.subr.mxu0 0.0
    %559 = vmatpush1.xpose.msra.mxu0 0.0
    %560 = vmatprep.subr.mxu0 0.0
    %561 = vmatpush1.xpose.msra.mxu0 0.0
    %562 = vmatprep.subr.mxu0 0.0
    %563 = vmatpush1.xpose.msra.mxu0 0.0
    %564 = vmatprep.subr.mxu0 0.0
    %565 = vmatpush1.xpose.msra.mxu0 0.0
    %566 = vmatprep.subr.mxu0 0.0
    %567 = vmatpush1.xpose.msra.mxu0 0.0
    %568 = vmatprep.mubr.f32.mxu0 0.0
    %569 = vmatmul.mubr.f32.gmra.mrb[0].mxu0 %v499
    %v570 = vpop.f32.mrb[0].mxu0
    %v571 = vadd.f32 0.0, %v570
    %v572 = vpop.f32.mrb[0].mxu0
    %573 = vdwg.mxu0
    %v574 = vmul.f32 %v571, %v571
    %v575 = vsel %vm197, %v574, 0.0
    %576 = vadd.xlane.f32.xlu0 %v575
    %v577 = vpop.xlane.xlu0 %576
    %v578 = vrsqrt.pop %v577
    %v579 = vmul.f32 %v577, %v578
    %vm580 = vcmp.eq.f32.partialorder %v577, inf
    %v581 = vsel %vm580, %v577, %v579
    %vm582 = vcmp.eq.f32.partialorder %v577, 0.0
    %v583 = vand.u32 %v577, 2147483648
    %v584 = vsel %vm582, %v583, %v581
    %v585 = vmax.f32 %v584, 1e-12
    %v586 = vrcp.pop %v585
    %v587 = vmul.f32 %v571, %v586
    %v588 = vmul.f32 %v571, %v587
    %v589 = vsel %vm197, %v588, 0.0
    %590 = vadd.xlane.f32.xlu0 %v589
    %v591 = vpop.xlane.xlu0 %590
    %v592 = vrcp.pop %v591
    %v593 = vmul.f32 1.0, %v592
    %594 = vst.msk [vmem:[#allocation6] sm:$0x1] %vm217, %v593
    // Predicated region
    $region26: #{dblock_forward.2} parent=1 // pred_check
      _
    $region27: #{dblock_forward.2} parent=1 // pred_check_branch
      %596 = sbr.rel (0) target = $region29
    $region28: #{dblock_forward.2} parent=1 // pred_region
      %s598 = ssub.s32 16, 16
      %599 = vsyncadd [#allocation3], %s598
      %s601 = sshll.u32 [#allocation2], 4
      %s602 = int_to_ptr.vmem [resolvable:$true] %s601
      %604 = dma.vmem_to_hbm [thread:$0]  %s602, 16, %s6, [#allocation3]
    $region29: #{dblock_forward.2} parent=1 // pred_fallthru
      _
    // Predicated region
    $region30: #{dblock_forward.2} parent=1 // pred_check
      _
    $region31: #{dblock_forward.2} parent=1 // pred_check_branch
      %606 = sbr.rel (0) target = $region33
    $region32: #{dblock_forward.2} parent=1 // pred_region
      %s608 = ssub.s32 16, 16
      %609 = vsyncadd [#allocation5], %s608
      %s611 = sshll.u32 [#allocation4], 4
      %s612 = int_to_ptr.vmem [resolvable:$true] %s611
      %614 = dma.vmem_to_hbm [thread:$0]  %s612, 16, %s7, [#allocation5]
    $region33: #{dblock_forward.2} parent=1 // pred_fallthru
      _
    // Predicated region
    $region34: #{dblock_forward.2} parent=1 // pred_check
      _
    $region35: #{dblock_forward.2} parent=1 // pred_check_branch
      %616 = sbr.rel (0) target = $region37
    $region36: #{dblock_forward.2} parent=1 // pred_region
      %s618 = ssub.s32 16, 16
      %619 = vsyncadd [#allocation5], %s618
      %s621 = sshll.u32 [#allocation6], 4
      %s622 = int_to_ptr.vmem [resolvable:$true] %s621
      %624 = dma.vmem_to_hbm [thread:$0]  %s622, 16, %s8, [#allocation5]
    $region37: #{dblock_forward.2} parent=1 // pred_fallthru
      _
    // Predicated region
    $region38: #{dblock_forward.2} parent=1 // pred_check
      _
    $region39: #{dblock_forward.2} parent=1 // pred_check_branch
      %626 = sbr.rel (0) target = $region41
    $region40: #{dblock_forward.2} parent=1 // pred_region
      %627 = dma.done [#allocation3], 16
    $region41: #{dblock_forward.2} parent=1 // pred_fallthru
      _
    // Predicated region
    $region42: #{dblock_forward.2} parent=1 // pred_check
      _
    $region43: #{dblock_forward.2} parent=1 // pred_check_branch
      %629 = sbr.rel (0) target = $region45
    $region44: #{dblock_forward.2} parent=1 // pred_region
      %630 = dma.done [#allocation5], 16
    $region45: #{dblock_forward.2} parent=1 // pred_fallthru
      _
    // Predicated region
    $region46: #{dblock_forward.2} parent=1 // pred_check
      _
    $region47: #{dblock_forward.2} parent=1 // pred_check_branch
      %632 = sbr.rel (0) target = $region49
    $region48: #{dblock_forward.2} parent=1 // pred_region
      %633 = dma.done [#allocation5], 16
    $region49: #{dblock_forward.2} parent=1 // pred_fallthru
      _
    %634 = vsyncpa [#allocation3], 1
    %635 = vsyncpa [#allocation5], 1

// kernel: dblock_forward.3
$region0: #{dblock_forward.3}
  #allocation0 [shape = 'u32[]', space=smem, size = 0x4, offset = 0x4, fixed_abs, tag = 'smem constant byte address 0x4 - core index']
  #allocation1 [shape = 'u32[144,128]{1,0:T(1,128)}', space=vmem, size = 0x12000, scoped, tag = 'internal scratch']
  #allocation2 [shape = 'f32[18,18,4]{2,1,0:T(8,128)}', space=vmem, size = 0x36000, scoped, tag = 'scratch operand']
  #allocation3 [shape = 'f32[18,18,8]{2,1,0:T(8,128)}', space=vmem, size = 0x36000, scoped, tag = 'scratch operand']
  #allocation4 [shape = 'f32[1,1]{1,0:T(1,128)S(6)}', space=smem, size = 0x200, scoped, tag = 'scoped memory for dblock_forward.3']
  #allocation5 [shape = 'f32[1,1]{1,0:T(1,128)S(6)}', space=smem, size = 0x200, scoped, tag = 'scoped memory for dblock_forward.3']
  #allocation6 [shape = 'f32[1,1]{1,0:T(1,128)S(6)}', space=smem, size = 0x200, scoped, tag = 'scoped memory for dblock_forward.3']
  %s0 = inlined_call_operand.<no memory space> [shape: f32[1,1], index: 0, kind: input, shape index: {}]
  %s1 = inlined_call_operand.<no memory space> [shape: f32[1,1], index: 1, kind: input, shape index: {}]
  %s2 = inlined_call_operand.<no memory space> [shape: f32[1,1], index: 2, kind: input, shape index: {}]
  %s3 = inlined_call_operand.vmem [shape: f32[2,16,16,4], index: 3, kind: input, shape index: {}]
  %s4 = inlined_call_operand.vmem [shape: f32[36,8], index: 4, kind: input, shape index: {}]
  %s5 = inlined_call_operand.vmem [shape: f32[1,8], index: 5, kind: input, shape index: {}]
  %s6 = inlined_call_operand.vmem [shape: f32[8,72], index: 6, kind: input, shape index: {}]
  %s7 = inlined_call_operand.vmem [shape: f32[8,1], index: 7, kind: input, shape index: {}]
  %s8 = inlined_call_operand.vmem [shape: f32[8,4], index: 8, kind: input, shape index: {}]
  %s9 = inlined_call_operand.vmem [shape: f32[8,1], index: 9, kind: input, shape index: {}]
  %s10 = inlined_call_operand.vmem [shape: f32[2,8,256], index: 10, kind: output, shape index: {}]
  %s11 = sld [smem:[#allocation0]]
  $region73: #{dblock_forward.3} parent=0
    _
  %s13 = ssub.s32 1, %s11
  %s14 = scalar_select 0, %s13, %s11
  %15 = sst [smem:[#allocation4]] %s0
  %16 = sst [smem:[#allocation5]] %s1
  %17 = sst [smem:[#allocation6]] %s2
  loop: start=0, step=1, limit=4
  $region2: #{dblock_forward.3} parent=0 // loop_pre_header
    _
  $region3: #{dblock_forward.3} parent=0 // loop_header
    %s19 = sphi 0, %s23
    %p20 = scmp.ge.s32.totalorder %s19, 4
    %s27 = sphi 0, %s27
    %s29 = sphi 0, %s27
    %s30 = sphi 0, %s29
    %s44 = sphi 0, %s30
    %s48 = sphi 0, %s48
    %s50 = sphi 0, %s48
    %s51 = sphi 0, %s50
    %s65 = sphi 0, %s51
    %s69 = sphi 0, %s69
    %s71 = sphi 0, %s69
    %s72 = sphi 0, %s71
    %s86 = sphi 0, %s72
    %s92 = sphi 0, %s94
    %s95 = sphi 0, %s92
    %s96 = sphi 0, %s95
    %s112 = sphi 0, %s96
    %s116 = sphi 0, %s116
    %s118 = sphi 0, %s116
    %s119 = sphi 0, %s118
    %s133 = sphi 0, %s119
    %s137 = sphi 0, %s137
    %s139 = sphi 0, %s137
    %s140 = sphi 0, %s139
    %s154 = sphi 0, %s140
    %s158 = sphi 0, %s158
    %s160 = sphi 0, %s158
    %s161 = sphi 0, %s160
    %s175 = sphi 0, %s161
    %s179 = sphi 0, %s179
    %s181 = sphi 0, %s179
    %s182 = sphi 0, %s181
    %s196 = sphi 0, %s182
    %s200 = sphi 0, %s200
    %s202 = sphi 0, %s200
    %s203 = sphi 0, %s202
    %s217 = sphi 0, %s203
    %s221 = sphi 0, %s221
    %s223 = sphi 0, %s221
    %s224 = sphi 0, %s223
    %s238 = sphi 0, %s224
    %s244 = sphi 0, %s246
    %s247 = sphi 0, %s244
    %s248 = sphi 0, %s247
    %s264 = sphi 0, %s248
  $region4: #{dblock_forward.3} parent=0 // loop_header_branch
    %22 = sbr.rel (%p20) target = $region8
  $region5: #{dblock_forward.3} parent=0 // loop_body
    %s24 = ssub.s32 %s19, 1
    %s25 = ssub.s32 %s19, 2
    %s26 = sadd.s32 %s19, 1
    %s28 = sadd.s32 %s27, 1
    %p31 = scmp.eq.s32.totalorder %s19, 1
    %p32 = scmp.ne.s32.totalorder %s27, %s29
    %p33 = scmp.eq.s32.totalorder %s19, 0
    %p34 = por %p32, %p33
    %p35 = scmp.ne.s32.totalorder %s27, %s29
    %p36 = scmp.eq.s32.totalorder %s24, 1
    %p37 = por %p35, %p36
    %p38 = scmp.ne.s32.totalorder %s29, %s30
    %p39 = scmp.eq.s32.totalorder %s24, 0
    %p40 = por %p38, %p39
    %p41 = scmp.ne.s32.totalorder %s29, %s30
    %p42 = scmp.eq.s32.totalorder %s25, 1
    %p43 = por %p41, %p42
    %p45 = scmp.ne.s32.totalorder %s30, %s44
    %p46 = scmp.eq.s32.totalorder %s25, 0
    %p47 = por %p45, %p46
    %s49 = sadd.s32 %s48, 1
    %p52 = scmp.eq.s32.totalorder %s19, 1
    %p53 = scmp.ne.s32.totalorder %s48, %s50
    %p54 = scmp.eq.s32.totalorder %s19, 0
    %p55 = por %p53, %p54
    %p56 = scmp.ne.s32.totalorder %s48, %s50
    %p57 = scmp.eq.s32.totalorder %s24, 1
    %p58 = por %p56, %p57
    %p59 = scmp.ne.s32.totalorder %s50, %s51
    %p60 = scmp.eq.s32.totalorder %s24, 0
    %p61 = por %p59, %p60
    %p62 = scmp.ne.s32.totalorder %s50, %s51
    %p63 = scmp.eq.s32.totalorder %s25, 1
    %p64 = por %p62, %p63
    %p66 = scmp.ne.s32.totalorder %s51, %s65
    %p67 = scmp.eq.s32.totalorder %s25, 0
    %p68 = por %p66, %p67
    %s70 = sadd.s32 %s69, 1
    %p73 = scmp.eq.s32.totalorder %s19, 1
    %p74 = scmp.ne.s32.totalorder %s69, %s71
    %p75 = scmp.eq.s32.totalorder %s19, 0
    %p76 = por %p74, %p75
    %p77 = scmp.ne.s32.totalorder %s69, %s71
    %p78 = scmp.eq.s32.totalorder %s24, 1
    %p79 = por %p77, %p78
    %p80 = scmp.ne.s32.totalorder %s71, %s72
    %p81 = scmp.eq.s32.totalorder %s24, 0
    %p82 = por %p80, %p81
    %p83 = scmp.ne.s32.totalorder %s71, %s72
    %p84 = scmp.eq.s32.totalorder %s25, 1
    %p85 = por %p83, %p84
    %p87 = scmp.ne.s32.totalorder %s72, %s86
    %p88 = scmp.eq.s32.totalorder %s25, 0
    %p89 = por %p87, %p88
    %s90 = ssub.s32 %s19, %s26
    %p91 = scmp.eq.s32.totalorder %s90, 0
    %s93 = sadd.s32 %s92, 1
    %s94 = scalar_select %p91, %s92, %s93
    %p97 = pneg %p91
    %p98 = scmp.eq.s32.totalorder %s19, 1
    %p99 = por %p97, %p98
    %p100 = scmp.ne.s32.totalorder %s92, %s95
    %p101 = scmp.eq.s32.totalorder %s19, 0
    %p102 = por %p100, %p101
    %p103 = scmp.ne.s32.totalorder %s92, %s95
    %p104 = scmp.eq.s32.totalorder %s24, 1
    %p105 = por %p103, %p104
    %p106 = scmp.ne.s32.totalorder %s95, %s96
    %p107 = scmp.eq.s32.totalorder %s24, 0
    %p108 = por %p106, %p107
    %p109 = scmp.ne.s32.totalorder %s95, %s96
    %p110 = scmp.eq.s32.totalorder %s25, 1
    %p111 = por %p109, %p110
    %p113 = scmp.ne.s32.totalorder %s96, %s112
    %p114 = scmp.eq.s32.totalorder %s25, 0
    %p115 = por %p113, %p114
    %s117 = sadd.s32 %s116, 1
    %p120 = scmp.eq.s32.totalorder %s19, 1
    %p121 = scmp.ne.s32.totalorder %s116, %s118
    %p122 = scmp.eq.s32.totalorder %s19, 0
    %p123 = por %p121, %p122
    %p124 = scmp.ne.s32.totalorder %s116, %s118
    %p125 = scmp.eq.s32.totalorder %s24, 1
    %p126 = por %p124, %p125
    %p127 = scmp.ne.s32.totalorder %s118, %s119
    %p128 = scmp.eq.s32.totalorder %s24, 0
    %p129 = por %p127, %p128
    %p130 = scmp.ne.s32.totalorder %s118, %s119
    %p131 = scmp.eq.s32.totalorder %s25, 1
    %p132 = por %p130, %p131
    %p134 = scmp.ne.s32.totalorder %s119, %s133
    %p135 = scmp.eq.s32.totalorder %s25, 0
    %p136 = por %p134, %p135
    %s138 = sadd.s32 %s137, 1
    %p141 = scmp.eq.s32.totalorder %s19, 1
    %p142 = scmp.ne.s32.totalorder %s137, %s139
    %p143 = scmp.eq.s32.totalorder %s19, 0
    %p144 = por %p142, %p143
    %p145 = scmp.ne.s32.totalorder %s137, %s139
    %p146 = scmp.eq.s32.totalorder %s24, 1
    %p147 = por %p145, %p146
    %p148 = scmp.ne.s32.totalorder %s139, %s140
    %p149 = scmp.eq.s32.totalorder %s24, 0
    %p150 = por %p148, %p149
    %p151 = scmp.ne.s32.totalorder %s139, %s140
    %p152 = scmp.eq.s32.totalorder %s25, 1
    %p153 = por %p151, %p152
    %p155 = scmp.ne.s32.totalorder %s140, %s154
    %p156 = scmp.eq.s32.totalorder %s25, 0
    %p157 = por %p155, %p156
    %s159 = sadd.s32 %s158, 1
    %p162 = scmp.eq.s32.totalorder %s19, 1
    %p163 = scmp.ne.s32.totalorder %s158, %s160
    %p164 = scmp.eq.s32.totalorder %s19, 0
    %p165 = por %p163, %p164
    %p166 = scmp.ne.s32.totalorder %s158, %s160
    %p167 = scmp.eq.s32.totalorder %s24, 1
    %p168 = por %p166, %p167
    %p169 = scmp.ne.s32.totalorder %s160, %s161
    %p170 = scmp.eq.s32.totalorder %s24, 0
    %p171 = por %p169, %p170
    %p172 = scmp.ne.s32.totalorder %s160, %s161
    %p173 = scmp.eq.s32.totalorder %s25, 1
    %p174 = por %p172, %p173
    %p176 = scmp.ne.s32.totalorder %s161, %s175
    %p177 = scmp.eq.s32.totalorder %s25, 0
    %p178 = por %p176, %p177
    %s180 = sadd.s32 %s179, 1
    %p183 = scmp.eq.s32.totalorder %s19, 1
    %p184 = scmp.ne.s32.totalorder %s179, %s181
    %p185 = scmp.eq.s32.totalorder %s19, 0
    %p186 = por %p184, %p185
    %p187 = scmp.ne.s32.totalorder %s179, %s181
    %p188 = scmp.eq.s32.totalorder %s24, 1
    %p189 = por %p187, %p188
    %p190 = scmp.ne.s32.totalorder %s181, %s182
    %p191 = scmp.eq.s32.totalorder %s24, 0
    %p192 = por %p190, %p191
    %p193 = scmp.ne.s32.totalorder %s181, %s182
    %p194 = scmp.eq.s32.totalorder %s25, 1
    %p195 = por %p193, %p194
    %p197 = scmp.ne.s32.totalorder %s182, %s196
    %p198 = scmp.eq.s32.totalorder %s25, 0
    %p199 = por %p197, %p198
    %s201 = sadd.s32 %s200, 1
    %p204 = scmp.eq.s32.totalorder %s19, 1
    %p205 = scmp.ne.s32.totalorder %s200, %s202
    %p206 = scmp.eq.s32.totalorder %s19, 0
    %p207 = por %p205, %p206
    %p208 = scmp.ne.s32.totalorder %s200, %s202
    %p209 = scmp.eq.s32.totalorder %s24, 1
    %p210 = por %p208, %p209
    %p211 = scmp.ne.s32.totalorder %s202, %s203
    %p212 = scmp.eq.s32.totalorder %s24, 0
    %p213 = por %p211, %p212
    %p214 = scmp.ne.s32.totalorder %s202, %s203
    %p215 = scmp.eq.s32.totalorder %s25, 1
    %p216 = por %p214, %p215
    %p218 = scmp.ne.s32.totalorder %s203, %s217
    %p219 = scmp.eq.s32.totalorder %s25, 0
    %p220 = por %p218, %p219
    %s222 = sadd.s32 %s221, 1
    %p225 = scmp.eq.s32.totalorder %s19, 1
    %p226 = scmp.ne.s32.totalorder %s221, %s223
    %p227 = scmp.eq.s32.totalorder %s19, 0
    %p228 = por %p226, %p227
    %p229 = scmp.ne.s32.totalorder %s221, %s223
    %p230 = scmp.eq.s32.totalorder %s24, 1
    %p231 = por %p229, %p230
    %p232 = scmp.ne.s32.totalorder %s223, %s224
    %p233 = scmp.eq.s32.totalorder %s24, 0
    %p234 = por %p232, %p233
    %p235 = scmp.ne.s32.totalorder %s223, %s224
    %p236 = scmp.eq.s32.totalorder %s25, 1
    %p237 = por %p235, %p236
    %p239 = scmp.ne.s32.totalorder %s224, %s238
    %p240 = scmp.eq.s32.totalorder %s25, 0
    %p241 = por %p239, %p240
    %s242 = ssub.s32 %s19, %s26
    %p243 = scmp.eq.s32.totalorder %s242, 0
    %s245 = sadd.s32 %s244, 1
    %s246 = scalar_select %p243, %s244, %s245
    %p249 = pneg %p243
    %p250 = scmp.eq.s32.totalorder %s19, 1
    %p251 = por %p249, %p250
    %p252 = scmp.ne.s32.totalorder %s244, %s247
    %p253 = scmp.eq.s32.totalorder %s19, 0
    %p254 = por %p252, %p253
    %p255 = scmp.ne.s32.totalorder %s244, %s247
    %p256 = scmp.eq.s32.totalorder %s24, 1
    %p257 = por %p255, %p256
    %p258 = scmp.ne.s32.totalorder %s247, %s248
    %p259 = scmp.eq.s32.totalorder %s24, 0
    %p260 = por %p258, %p259
    %p261 = scmp.ne.s32.totalorder %s247, %s248
    %p262 = scmp.eq.s32.totalorder %s25, 1
    %p263 = por %p261, %p262
    %p265 = scmp.ne.s32.totalorder %s248, %s264
    %p266 = scmp.eq.s32.totalorder %s25, 0
    %p267 = por %p265, %p266
    %p268 = scmp.le.s32.totalorder 1, %s19
    %p269 = scmp.lt.s32.totalorder %s19, 3
    %p270 = pnand %p268, %p269
    %p271 = pneg %p270
    // Predicated region
    $region9: #{dblock_forward.3} parent=5 // pred_check
      _
    $region10: #{dblock_forward.3} parent=5 // pred_check_branch
      %273 = sbr.rel (%p270) target = $region12
    $region11: #{dblock_forward.3} parent=5 // pred_region
      %s274 = ssub.s32 %s19, 1
      // Predicated region
      $region13: #{dblock_forward.3} parent=11 // pred_check
        %p275 = pneg %p40
      $region14: #{dblock_forward.3} parent=11 // pred_check_branch
        %277 = sbr.rel (%p275) target = $region16
      $region15: #{dblock_forward.3} parent=11 // pred_region
        _
      $region16: #{dblock_forward.3} parent=11 // pred_fallthru
        _
      // Predicated region
      $region17: #{dblock_forward.3} parent=11 // pred_check
        %p278 = pneg %p61
      $region18: #{dblock_forward.3} parent=11 // pred_check_branch
        %280 = sbr.rel (%p278) target = $region20
      $region19: #{dblock_forward.3} parent=11 // pred_region
        _
      $region20: #{dblock_forward.3} parent=11 // pred_fallthru
        _
      // Predicated region
      $region21: #{dblock_forward.3} parent=11 // pred_check
        %p281 = pneg %p82
      $region22: #{dblock_forward.3} parent=11 // pred_check_branch
        %283 = sbr.rel (%p281) target = $region24
      $region23: #{dblock_forward.3} parent=11 // pred_region
        _
      $region24: #{dblock_forward.3} parent=11 // pred_fallthru
        _
      // Predicated region
      $region25: #{dblock_forward.3} parent=11 // pred_check
        %p284 = pneg %p129
      $region26: #{dblock_forward.3} parent=11 // pred_check_branch
        %286 = sbr.rel (%p284) target = $region28
      $region27: #{dblock_forward.3} parent=11 // pred_region
        _
      $region28: #{dblock_forward.3} parent=11 // pred_fallthru
        _
      // Predicated region
      $region29: #{dblock_forward.3} parent=11 // pred_check
        %p287 = pneg %p150
      $region30: #{dblock_forward.3} parent=11 // pred_check_branch
        %289 = sbr.rel (%p287) target = $region32
      $region31: #{dblock_forward.3} parent=11 // pred_region
        _
      $region32: #{dblock_forward.3} parent=11 // pred_fallthru
        _
      // Predicated region
      $region33: #{dblock_forward.3} parent=11 // pred_check
        %p290 = pneg %p171
      $region34: #{dblock_forward.3} parent=11 // pred_check_branch
        %292 = sbr.rel (%p290) target = $region36
      $region35: #{dblock_forward.3} parent=11 // pred_region
        _
      $region36: #{dblock_forward.3} parent=11 // pred_fallthru
        _
      // Predicated region
      $region37: #{dblock_forward.3} parent=11 // pred_check
        %p293 = pneg %p192
      $region38: #{dblock_forward.3} parent=11 // pred_check_branch
        %295 = sbr.rel (%p293) target = $region40
      $region39: #{dblock_forward.3} parent=11 // pred_region
        _
      $region40: #{dblock_forward.3} parent=11 // pred_fallthru
        _
      // Predicated region
      $region41: #{dblock_forward.3} parent=11 // pred_check
        %p296 = pneg %p213
      $region42: #{dblock_forward.3} parent=11 // pred_check_branch
        %298 = sbr.rel (%p296) target = $region44
      $region43: #{dblock_forward.3} parent=11 // pred_region
        _
      $region44: #{dblock_forward.3} parent=11 // pred_fallthru
        _
      // Predicated region
      $region45: #{dblock_forward.3} parent=11 // pred_check
        %p299 = pneg %p234
      $region46: #{dblock_forward.3} parent=11 // pred_check_branch
        %301 = sbr.rel (%p299) target = $region48
      $region47: #{dblock_forward.3} parent=11 // pred_region
        _
      $region48: #{dblock_forward.3} parent=11 // pred_fallthru
        _
    $region12: #{dblock_forward.3} parent=5 // pred_fallthru
      _
    %p302 = scmp.lt.s32.totalorder %s19, 2
    // Predicated region
    $region49: #{dblock_forward.3} parent=5 // pred_check
      %p303 = pneg %p302
    $region50: #{dblock_forward.3} parent=5 // pred_check_branch
      %305 = sbr.rel (%p303) target = $region52
    $region51: #{dblock_forward.3} parent=5 // pred_region
      // Predicated region
      $region53: #{dblock_forward.3} parent=51 // pred_check
        %p306 = pneg %p102
      $region54: #{dblock_forward.3} parent=51 // pred_check_branch
        %308 = sbr.rel (%p306) target = $region56
      $region55: #{dblock_forward.3} parent=51 // pred_region
        %p309 = scmp.lt.s32.totalorder %s19, 1
        %s310 = scalar_select %p309, %s19, 1
        %s311 = smul.addr %s310, 32
        %s312 = smul.addr %s311, 8
        %s313 = scalar_lea.vmem %s3, %s312
      $region56: #{dblock_forward.3} parent=51 // pred_fallthru
        _
    $region52: #{dblock_forward.3} parent=5 // pred_fallthru
      _
    %p314 = scmp.le.s32.totalorder 1, %s19
    %p315 = scmp.lt.s32.totalorder %s19, 3
    %p316 = pnand %p314, %p315
    %p317 = pneg %p316
    // Predicated region
    $region57: #{dblock_forward.3} parent=5 // pred_check
      _
    $region58: #{dblock_forward.3} parent=5 // pred_check_branch
      %319 = sbr.rel (%p316) target = $region60
    $region59: #{dblock_forward.3} parent=5 // pred_region
      %s320 = ssub.s32 %s19, 1
      %p321 = pneg %p40
      %p322 = pneg %p37
      %p323 = pneg %p61
      %p324 = pneg %p58
      %p325 = pneg %p82
      %p326 = pneg %p79
      %p327 = scmp.lt.s32.totalorder %s24, 1
      %s328 = scalar_select %p327, %s24, 1
      %s329 = smul.addr %s328, 32
      %s330 = smul.addr %s329, 8
      %s331 = scalar_lea.vmem %s3, %s330
      %p332 = pneg %p108
      %p333 = pneg %p105
      %p334 = pneg %p129
      %p335 = pneg %p126
      %p336 = pneg %p150
      %p337 = pneg %p147
      %p338 = pneg %p171
      %p339 = pneg %p168
      %p340 = pneg %p192
      %p341 = pneg %p189
      %p342 = pneg %p213
      %p343 = pneg %p210
      %p344 = pneg %p234
      %p345 = pneg %p231
      %p346 = pneg %p260
      %p347 = pneg %p257
      %p348 = scmp.lt.s32.totalorder %s24, 1
      %s349 = scalar_select %p348, %s24, 1
      %s350 = smul.addr %s349, 2
      %s351 = smul.addr %s350, 8
      %s352 = scalar_lea.vmem %s10, %s351
      %p353 = scmp.lt.s32.totalorder %s24, 1
      %s354 = scalar_select %p353, %s24, 1
      %s355 = smul.addr %s354, 32
      %s356 = smul.addr %s355, 8
      %s357 = scalar_lea.vmem %s3, %s356
      %p358 = scmp.lt.s32.totalorder %s24, 1
      %s359 = scalar_select %p358, %s24, 1
      %s360 = smul.addr %s359, 2
      %s361 = smul.addr %s360, 8
      %s362 = scalar_lea.vmem %s10, %s361
      %s363 = sld [smem:[#allocation4]]
      %s364 = sld [smem:[#allocation5]]
      %s365 = sld [smem:[#allocation6]]
      %v366 = vld [vmem:[%s357] sm:$0xff]
      %v367 = vld [vmem:[%s357 + $0x8] sm:$0xff]
      %v368 = vld [vmem:[%s357 + $0x10] sm:$0xff]
      %v369 = vld [vmem:[%s357 + $0x18] sm:$0xff]
      %v370 = vld [vmem:[%s357 + $0x20] sm:$0xff]
      %v371 = vld [vmem:[%s357 + $0x28] sm:$0xff]
      %v372 = vld [vmem:[%s357 + $0x30] sm:$0xff]
      %v373 = vld [vmem:[%s357 + $0x38] sm:$0xff]
      %v374 = vld [vmem:[%s357 + $0x40] sm:$0xff]
      %v375 = vld [vmem:[%s357 + $0x48] sm:$0xff]
      %v376 = vld [vmem:[%s357 + $0x50] sm:$0xff]
      %v377 = vld [vmem:[%s357 + $0x58] sm:$0xff]
      %v378 = vld [vmem:[%s357 + $0x60] sm:$0xff]
      %v379 = vld [vmem:[%s357 + $0x68] sm:$0xff]
      %v380 = vld [vmem:[%s357 + $0x70] sm:$0xff]
      %v381 = vld [vmem:[%s357 + $0x78] sm:$0xff]
      %v382 = vld [vmem:[%s357 + $0x80] sm:$0xff]
      %v383 = vld [vmem:[%s357 + $0x88] sm:$0xff]
      %v384 = vld [vmem:[%s357 + $0x90] sm:$0xff]
      %v385 = vld [vmem:[%s357 + $0x98] sm:$0xff]
      %v386 = vld [vmem:[%s357 + $0xa0] sm:$0xff]
      %v387 = vld [vmem:[%s357 + $0xa8] sm:$0xff]
      %v388 = vld [vmem:[%s357 + $0xb0] sm:$0xff]
      %v389 = vld [vmem:[%s357 + $0xb8] sm:$0xff]
      %v390 = vld [vmem:[%s357 + $0xc0] sm:$0xff]
      %v391 = vld [vmem:[%s357 + $0xc8] sm:$0xff]
      %v392 = vld [vmem:[%s357 + $0xd0] sm:$0xff]
      %v393 = vld [vmem:[%s357 + $0xd8] sm:$0xff]
      %v394 = vld [vmem:[%s357 + $0xe0] sm:$0xff]
      %v395 = vld [vmem:[%s357 + $0xe8] sm:$0xff]
      %v396 = vld [vmem:[%s357 + $0xf0] sm:$0xff]
      %v397 = vld [vmem:[%s357 + $0xf8] sm:$0xff]
      %vm398 = vcmask 31744
      %399 = vst.msk [vmem:[#allocation2] sm:$0xff] %vm398, 0.0
      %400 = vst.msk [vmem:[#allocation2 + $0x8] sm:$0xff] %vm398, 0.0
      %vm401 = vcmask 25600
      %402 = vst.msk [vmem:[#allocation2 + $0x10] sm:$0x3] %vm401, 0.0
      %403 = vst.msk [vmem:[#allocation2 + $0x18] sm:$0xff] %vm398, 0.0
      %404 = vst.msk [vmem:[#allocation2 + $0x20] sm:$0xff] %vm398, 0.0
      %405 = vst.msk [vmem:[#allocation2 + $0x28] sm:$0x3] %vm401, 0.0
      %406 = vst.msk [vmem:[#allocation2 + $0x30] sm:$0xff] %vm398, 0.0
      %407 = vst.msk [vmem:[#allocation2 + $0x38] sm:$0xff] %vm398, 0.0
      %408 = vst.msk [vmem:[#allocation2 + $0x40] sm:$0x3] %vm401, 0.0
      %409 = vst.msk [vmem:[#allocation2 + $0x48] sm:$0xff] %vm398, 0.0
      %410 = vst.msk [vmem:[#allocation2 + $0x50] sm:$0xff] %vm398, 0.0
      %411 = vst.msk [vmem:[#allocation2 + $0x58] sm:$0x3] %vm401, 0.0
      %412 = vst.msk [vmem:[#allocation2 + $0x60] sm:$0xff] %vm398, 0.0
      %413 = vst.msk [vmem:[#allocation2 + $0x68] sm:$0xff] %vm398, 0.0
      %414 = vst.msk [vmem:[#allocation2 + $0x70] sm:$0x3] %vm401, 0.0
      %415 = vst.msk [vmem:[#allocation2 + $0x78] sm:$0xff] %vm398, 0.0
      %416 = vst.msk [vmem:[#allocation2 + $0x80] sm:$0xff] %vm398, 0.0
      %417 = vst.msk [vmem:[#allocation2 + $0x88] sm:$0x3] %vm401, 0.0
      %418 = vst.msk [vmem:[#allocation2 + $0x90] sm:$0xff] %vm398, 0.0
      %419 = vst.msk [vmem:[#allocation2 + $0x98] sm:$0xff] %vm398, 0.0
      %420 = vst.msk [vmem:[#allocation2 + $0xa0] sm:$0x3] %vm401, 0.0
      %421 = vst.msk [vmem:[#allocation2 + $0xa8] sm:$0xff] %vm398, 0.0
      %422 = vst.msk [vmem:[#allocation2 + $0xb0] sm:$0xff] %vm398, 0.0
      %423 = vst.msk [vmem:[#allocation2 + $0xb8] sm:$0x3] %vm401, 0.0
      %424 = vst.msk [vmem:[#allocation2 + $0xc0] sm:$0xff] %vm398, 0.0
      %425 = vst.msk [vmem:[#allocation2 + $0xc8] sm:$0xff] %vm398, 0.0
      %426 = vst.msk [vmem:[#allocation2 + $0xd0] sm:$0x3] %vm401, 0.0
      %427 = vst.msk [vmem:[#allocation2 + $0xd8] sm:$0xff] %vm398, 0.0
      %428 = vst.msk [vmem:[#allocation2 + $0xe0] sm:$0xff] %vm398, 0.0
      %429 = vst.msk [vmem:[#allocation2 + $0xe8] sm:$0x3] %vm401, 0.0
      %430 = vst.msk [vmem:[#allocation2 + $0xf0] sm:$0xff] %vm398, 0.0
      %431 = vst.msk [vmem:[#allocation2 + $0xf8] sm:$0xff] %vm398, 0.0
      %432 = vst.msk [vmem:[#allocation2 + $0x100] sm:$0x3] %vm401, 0.0
      %433 = vst.msk [vmem:[#allocation2 + $0x108] sm:$0xff] %vm398, 0.0
      %434 = vst.msk [vmem:[#allocation2 + $0x110] sm:$0xff] %vm398, 0.0
      %435 = vst.msk [vmem:[#allocation2 + $0x118] sm:$0x3] %vm401, 0.0
      %436 = vst.msk [vmem:[#allocation2 + $0x120] sm:$0xff] %vm398, 0.0
      %437 = vst.msk [vmem:[#allocation2 + $0x128] sm:$0xff] %vm398, 0.0
      %438 = vst.msk [vmem:[#allocation2 + $0x130] sm:$0x3] %vm401, 0.0
      %439 = vst.msk [vmem:[#allocation2 + $0x138] sm:$0xff] %vm398, 0.0
      %440 = vst.msk [vmem:[#allocation2 + $0x140] sm:$0xff] %vm398, 0.0
      %441 = vst.msk [vmem:[#allocation2 + $0x148] sm:$0x3] %vm401, 0.0
      %442 = vst.msk [vmem:[#allocation2 + $0x150] sm:$0xff] %vm398, 0.0
      %443 = vst.msk [vmem:[#allocation2 + $0x158] sm:$0xff] %vm398, 0.0
      %444 = vst.msk [vmem:[#allocation2 + $0x160] sm:$0x3] %vm401, 0.0
      %445 = vst.msk [vmem:[#allocation2 + $0x168] sm:$0xff] %vm398, 0.0
      %446 = vst.msk [vmem:[#allocation2 + $0x170] sm:$0xff] %vm398, 0.0
      %447 = vst.msk [vmem:[#allocation2 + $0x178] sm:$0x3] %vm401, 0.0
      %448 = vst.msk [vmem:[#allocation2 + $0x180] sm:$0xff] %vm398, 0.0
      %449 = vst.msk [vmem:[#allocation2 + $0x188] sm:$0xff] %vm398, 0.0
      %450 = vst.msk [vmem:[#allocation2 + $0x190] sm:$0x3] %vm401, 0.0
      %451 = vst.msk [vmem:[#allocation2 + $0x198] sm:$0xff] %vm398, 0.0
      %452 = vst.msk [vmem:[#allocation2 + $0x1a0] sm:$0xff] %vm398, 0.0
      %453 = vst.msk [vmem:[#allocation2 + $0x1a8] sm:$0x3] %vm401, 0.0
      %s454 = scalar_lea.vmem [#allocation2], 24
      %455 = vst.msk [vmem:[%s454 + $0x1] sm:$0xff] %vm398, %v366
      %456 = vst.msk [vmem:[%s454 + $0x9] sm:$0xff] %vm398, %v367
      %457 = vst.msk [vmem:[%s454 + $0x19] sm:$0xff] %vm398, %v368
      %458 = vst.msk [vmem:[%s454 + $0x21] sm:$0xff] %vm398, %v369
      %459 = vst.msk [vmem:[%s454 + $0x31] sm:$0xff] %vm398, %v370
      %460 = vst.msk [vmem:[%s454 + $0x39] sm:$0xff] %vm398, %v371
      %461 = vst.msk [vmem:[%s454 + $0x49] sm:$0xff] %vm398, %v372
      %462 = vst.msk [vmem:[%s454 + $0x51] sm:$0xff] %vm398, %v373
      %463 = vst.msk [vmem:[%s454 + $0x61] sm:$0xff] %vm398, %v374
      %464 = vst.msk [vmem:[%s454 + $0x69] sm:$0xff] %vm398, %v375
      %465 = vst.msk [vmem:[%s454 + $0x79] sm:$0xff] %vm398, %v376
      %466 = vst.msk [vmem:[%s454 + $0x81] sm:$0xff] %vm398, %v377
      %467 = vst.msk [vmem:[%s454 + $0x91] sm:$0xff] %vm398, %v378
      %468 = vst.msk [vmem:[%s454 + $0x99] sm:$0xff] %vm398, %v379
      %469 = vst.msk [vmem:[%s454 + $0xa9] sm:$0xff] %vm398, %v380
      %470 = vst.msk [vmem:[%s454 + $0xb1] sm:$0xff] %vm398, %v381
      %471 = vst.msk [vmem:[%s454 + $0xc1] sm:$0xff] %vm398, %v382
      %472 = vst.msk [vmem:[%s454 + $0xc9] sm:$0xff] %vm398, %v383
      %473 = vst.msk [vmem:[%s454 + $0xd9] sm:$0xff] %vm398, %v384
      %474 = vst.msk [vmem:[%s454 + $0xe1] sm:$0xff] %vm398, %v385
      %475 = vst.msk [vmem:[%s454 + $0xf1] sm:$0xff] %vm398, %v386
      %476 = vst.msk [vmem:[%s454 + $0xf9] sm:$0xff] %vm398, %v387
      %477 = vst.msk [vmem:[%s454 + $0x109] sm:$0xff] %vm398, %v388
      %478 = vst.msk [vmem:[%s454 + $0x111] sm:$0xff] %vm398, %v389
      %479 = vst.msk [vmem:[%s454 + $0x121] sm:$0xff] %vm398, %v390
      %480 = vst.msk [vmem:[%s454 + $0x129] sm:$0xff] %vm398, %v391
      %481 = vst.msk [vmem:[%s454 + $0x139] sm:$0xff] %vm398, %v392
      %482 = vst.msk [vmem:[%s454 + $0x141] sm:$0xff] %vm398, %v393
      %483 = vst.msk [vmem:[%s454 + $0x151] sm:$0xff] %vm398, %v394
      %484 = vst.msk [vmem:[%s454 + $0x159] sm:$0xff] %vm398, %v395
      %485 = vst.msk [vmem:[%s454 + $0x169] sm:$0xff] %vm398, %v396
      %486 = vst.msk [vmem:[%s454 + $0x171] sm:$0xff] %vm398, %v397
      %v487 = vld [vmem:[#allocation2] sm:$0xff]
      %v488 = vld [vmem:[#allocation2 + $0x8] sm:$0xff]
      %v489 = vld [vmem:[#allocation2 + $0x18] sm:$0xff]
      %v490 = vld [vmem:[#allocation2 + $0x20] sm:$0xff]
      %v491 = vld [vmem:[#allocation2 + $0x30] sm:$0xff]
      %v492 = vld [vmem:[#allocation2 + $0x38] sm:$0xff]
      %v493 = vld [vmem:[#allocation2 + $0x48] sm:$0xff]
      %v494 = vld [vmem:[#allocation2 + $0x50] sm:$0xff]
      %v495 = vld [vmem:[#allocation2 + $0x60] sm:$0xff]
      %v496 = vld [vmem:[#allocation2 + $0x68] sm:$0xff]
      %v497 = vld [vmem:[#allocation2 + $0x78] sm:$0xff]
      %v498 = vld [vmem:[#allocation2 + $0x80] sm:$0xff]
      %v499 = vld [vmem:[#allocation2 + $0x90] sm:$0xff]
      %v500 = vld [vmem:[#allocation2 + $0x98] sm:$0xff]
      %v501 = vld [vmem:[#allocation2 + $0xa8] sm:$0xff]
      %v502 = vld [vmem:[#allocation2 + $0xb0] sm:$0xff]
      %v503 = vld [vmem:[#allocation2 + $0xc0] sm:$0xff]
      %v504 = vld [vmem:[#allocation2 + $0xc8] sm:$0xff]
      %v505 = vld [vmem:[#allocation2 + $0xd8] sm:$0xff]
      %v506 = vld [vmem:[#allocation2 + $0xe0] sm:$0xff]
      %v507 = vld [vmem:[#allocation2 + $0xf0] sm:$0xff]
      %v508 = vld [vmem:[#allocation2 + $0xf8] sm:$0xff]
      %v509 = vld [vmem:[#allocation2 + $0x108] sm:$0xff]
      %v510 = vld [vmem:[#allocation2 + $0x110] sm:$0xff]
      %v511 = vld [vmem:[#allocation2 + $0x120] sm:$0xff]
      %v512 = vld [vmem:[#allocation2 + $0x128] sm:$0xff]
      %v513 = vld [vmem:[#allocation2 + $0x138] sm:$0xff]
      %v514 = vld [vmem:[#allocation2 + $0x140] sm:$0xff]
      %v515 = vld [vmem:[#allocation2 + $0x150] sm:$0xff]
      %v516 = vld [vmem:[#allocation2 + $0x158] sm:$0xff]
      %v517 = vld [vmem:[#allocation2 + $0x168] sm:$0xff]
      %v518 = vld [vmem:[#allocation2 + $0x170] sm:$0xff]
      %v519 = vld [vmem:[#allocation2 + $0x1] sm:$0xff]
      %v520 = vld [vmem:[#allocation2 + $0x9] sm:$0xff]
      %v521 = vld [vmem:[#allocation2 + $0x19] sm:$0xff]
      %v522 = vld [vmem:[#allocation2 + $0x21] sm:$0xff]
      %v523 = vld [vmem:[#allocation2 + $0x31] sm:$0xff]
      %v524 = vld [vmem:[#allocation2 + $0x39] sm:$0xff]
      %v525 = vld [vmem:[#allocation2 + $0x49] sm:$0xff]
      %v526 = vld [vmem:[#allocation2 + $0x51] sm:$0xff]
      %v527 = vld [vmem:[#allocation2 + $0x61] sm:$0xff]
      %v528 = vld [vmem:[#allocation2 + $0x69] sm:$0xff]
      %v529 = vld [vmem:[#allocation2 + $0x79] sm:$0xff]
      %v530 = vld [vmem:[#allocation2 + $0x81] sm:$0xff]
      %v531 = vld [vmem:[#allocation2 + $0x91] sm:$0xff]
      %v532 = vld [vmem:[#allocation2 + $0x99] sm:$0xff]
      %v533 = vld [vmem:[#allocation2 + $0xa9] sm:$0xff]
      %v534 = vld [vmem:[#allocation2 + $0xb1] sm:$0xff]
      %v535 = vld [vmem:[#allocation2 + $0xc1] sm:$0xff]
      %v536 = vld [vmem:[#allocation2 + $0xc9] sm:$0xff]
      %v537 = vld [vmem:[#allocation2 + $0xd9] sm:$0xff]
      %v538 = vld [vmem:[#allocation2 + $0xe1] sm:$0xff]
      %v539 = vld [vmem:[#allocation2 + $0xf1] sm:$0xff]
      %v540 = vld [vmem:[#allocation2 + $0xf9] sm:$0xff]
      %v541 = vld [vmem:[#allocation2 + $0x109] sm:$0xff]
      %v542 = vld [vmem:[#allocation2 + $0x111] sm:$0xff]
      %v543 = vld [vmem:[#allocation2 + $0x121] sm:$0xff]
      %v544 = vld [vmem:[#allocation2 + $0x129] sm:$0xff]
      %v545 = vld [vmem:[#allocation2 + $0x139] sm:$0xff]
      %v546 = vld [vmem:[#allocation2 + $0x141] sm:$0xff]
      %v547 = vld [vmem:[#allocation2 + $0x151] sm:$0xff]
      %v548 = vld [vmem:[#allocation2 + $0x159] sm:$0xff]
      %v549 = vld [vmem:[#allocation2 + $0x169] sm:$0xff]
      %v550 = vld [vmem:[#allocation2 + $0x171] sm:$0xff]
      %v551 = vld [vmem:[#allocation2 + $0x2] sm:$0xff]
      %v552 = vld [vmem:[#allocation2 + $0xa] sm:$0xff]
      %v553 = vld [vmem:[#allocation2 + $0x1a] sm:$0xff]
      %v554 = vld [vmem:[#allocation2 + $0x22] sm:$0xff]
      %v555 = vld [vmem:[#allocation2 + $0x32] sm:$0xff]
      %v556 = vld [vmem:[#allocation2 + $0x3a] sm:$0xff]
      %v557 = vld [vmem:[#allocation2 + $0x4a] sm:$0xff]
      %v558 = vld [vmem:[#allocation2 + $0x52] sm:$0xff]
      %v559 = vld [vmem:[#allocation2 + $0x62] sm:$0xff]
      %v560 = vld [vmem:[#allocation2 + $0x6a] sm:$0xff]
      %v561 = vld [vmem:[#allocation2 + $0x7a] sm:$0xff]
      %v562 = vld [vmem:[#allocation2 + $0x82] sm:$0xff]
      %v563 = vld [vmem:[#allocation2 + $0x92] sm:$0xff]
      %v564 = vld [vmem:[#allocation2 + $0x9a] sm:$0xff]
      %v565 = vld [vmem:[#allocation2 + $0xaa] sm:$0xff]
      %v566 = vld [vmem:[#allocation2 + $0xb2] sm:$0xff]
      %v567 = vld [vmem:[#allocation2 + $0xc2] sm:$0xff]
      %v568 = vld [vmem:[#allocation2 + $0xca] sm:$0xff]
      %v569 = vld [vmem:[#allocation2 + $0xda] sm:$0xff]
      %v570 = vld [vmem:[#allocation2 + $0xe2] sm:$0xff]
      %v571 = vld [vmem:[#allocation2 + $0xf2] sm:$0xff]
      %v572 = vld [vmem:[#allocation2 + $0xfa] sm:$0xff]
      %v573 = vld [vmem:[#allocation2 + $0x10a] sm:$0xff]
      %v574 = vld [vmem:[#allocation2 + $0x112] sm:$0xff]
      %v575 = vld [vmem:[#allocation2 + $0x122] sm:$0xff]
      %v576 = vld [vmem:[#allocation2 + $0x12a] sm:$0xff]
      %v577 = vld [vmem:[#allocation2 + $0x13a] sm:$0xff]
      %v578 = vld [vmem:[#allocation2 + $0x142] sm:$0xff]
      %v579 = vld [vmem:[#allocation2 + $0x152] sm:$0xff]
      %v580 = vld [vmem:[#allocation2 + $0x15a] sm:$0xff]
      %v581 = vld [vmem:[#allocation2 + $0x16a] sm:$0xff]
      %v582 = vld [vmem:[#allocation2 + $0x172] sm:$0xff]
      %v583 = vld [vmem:[%s454] sm:$0xff]
      %v584 = vld [vmem:[%s454 + $0x8] sm:$0xff]
      %v585 = vld [vmem:[%s454 + $0x18] sm:$0xff]
      %v586 = vld [vmem:[%s454 + $0x20] sm:$0xff]
      %v587 = vld [vmem:[%s454 + $0x30] sm:$0xff]
      %v588 = vld [vmem:[%s454 + $0x38] sm:$0xff]
      %v589 = vld [vmem:[%s454 + $0x48] sm:$0xff]
      %v590 = vld [vmem:[%s454 + $0x50] sm:$0xff]
      %v591 = vld [vmem:[%s454 + $0x60] sm:$0xff]
      %v592 = vld [vmem:[%s454 + $0x68] sm:$0xff]
      %v593 = vld [vmem:[%s454 + $0x78] sm:$0xff]
      %v594 = vld [vmem:[%s454 + $0x80] sm:$0xff]
      %v595 = vld [vmem:[%s454 + $0x90] sm:$0xff]
      %v596 = vld [vmem:[%s454 + $0x98] sm:$0xff]
      %v597 = vld [vmem:[%s454 + $0xa8] sm:$0xff]
      %v598 = vld [vmem:[%s454 + $0xb0] sm:$0xff]
      %v599 = vld [vmem:[%s454 + $0xc0] sm:$0xff]
      %v600 = vld [vmem:[%s454 + $0xc8] sm:$0xff]
      %v601 = vld [vmem:[%s454 + $0xd8] sm:$0xff]
      %v602 = vld [vmem:[%s454 + $0xe0] sm:$0xff]
      %v603 = vld [vmem:[%s454 + $0xf0] sm:$0xff]
      %v604 = vld [vmem:[%s454 + $0xf8] sm:$0xff]
      %v605 = vld [vmem:[%s454 + $0x108] sm:$0xff]
      %v606 = vld [vmem:[%s454 + $0x110] sm:$0xff]
      %v607 = vld [vmem:[%s454 + $0x120] sm:$0xff]
      %v608 = vld [vmem:[%s454 + $0x128] sm:$0xff]
      %v609 = vld [vmem:[%s454 + $0x138] sm:$0xff]
      %v610 = vld [vmem:[%s454 + $0x140] sm:$0xff]
      %v611 = vld [vmem:[%s454 + $0x150] sm:$0xff]
      %v612 = vld [vmem:[%s454 + $0x158] sm:$0xff]
      %v613 = vld [vmem:[%s454 + $0x168] sm:$0xff]
      %v614 = vld [vmem:[%s454 + $0x170] sm:$0xff]
      %v615 = vld [vmem:[%s454 + $0x1] sm:$0xff]
      %v616 = vld [vmem:[%s454 + $0x9] sm:$0xff]
      %v617 = vld [vmem:[%s454 + $0x19] sm:$0xff]
      %v618 = vld [vmem:[%s454 + $0x21] sm:$0xff]
      %v619 = vld [vmem:[%s454 + $0x31] sm:$0xff]
      %v620 = vld [vmem:[%s454 + $0x39] sm:$0xff]
      %v621 = vld [vmem:[%s454 + $0x49] sm:$0xff]
      %v622 = vld [vmem:[%s454 + $0x51] sm:$0xff]
      %v623 = vld [vmem:[%s454 + $0x61] sm:$0xff]
      %v624 = vld [vmem:[%s454 + $0x69] sm:$0xff]
      %v625 = vld [vmem:[%s454 + $0x79] sm:$0xff]
      %v626 = vld [vmem:[%s454 + $0x81] sm:$0xff]
      %v627 = vld [vmem:[%s454 + $0x91] sm:$0xff]
      %v628 = vld [vmem:[%s454 + $0x99] sm:$0xff]
      %v629 = vld [vmem:[%s454 + $0xa9] sm:$0xff]
      %v630 = vld [vmem:[%s454 + $0xb1] sm:$0xff]
      %v631 = vld [vmem:[%s454 + $0xc1] sm:$0xff]
      %v632 = vld [vmem:[%s454 + $0xc9] sm:$0xff]
      %v633 = vld [vmem:[%s454 + $0xd9] sm:$0xff]
      %v634 = vld [vmem:[%s454 + $0xe1] sm:$0xff]
      %v635 = vld [vmem:[%s454 + $0xf1] sm:$0xff]
      %v636 = vld [vmem:[%s454 + $0xf9] sm:$0xff]
      %v637 = vld [vmem:[%s454 + $0x109] sm:$0xff]
      %v638 = vld [vmem:[%s454 + $0x111] sm:$0xff]
      %v639 = vld [vmem:[%s454 + $0x121] sm:$0xff]
      %v640 = vld [vmem:[%s454 + $0x129] sm:$0xff]
      %v641 = vld [vmem:[%s454 + $0x139] sm:$0xff]
      %v642 = vld [vmem:[%s454 + $0x141] sm:$0xff]
      %v643 = vld [vmem:[%s454 + $0x151] sm:$0xff]
      %v644 = vld [vmem:[%s454 + $0x159] sm:$0xff]
      %v645 = vld [vmem:[%s454 + $0x169] sm:$0xff]
      %v646 = vld [vmem:[%s454 + $0x171] sm:$0xff]
      %v647 = vld [vmem:[%s454 + $0x2] sm:$0xff]
      %v648 = vld [vmem:[%s454 + $0xa] sm:$0xff]
      %v649 = vld [vmem:[%s454 + $0x1a] sm:$0xff]
      %v650 = vld [vmem:[%s454 + $0x22] sm:$0xff]
      %v651 = vld [vmem:[%s454 + $0x32] sm:$0xff]
      %v652 = vld [vmem:[%s454 + $0x3a] sm:$0xff]
      %v653 = vld [vmem:[%s454 + $0x4a] sm:$0xff]
      %v654 = vld [vmem:[%s454 + $0x52] sm:$0xff]
      %v655 = vld [vmem:[%s454 + $0x62] sm:$0xff]
      %v656 = vld [vmem:[%s454 + $0x6a] sm:$0xff]
      %v657 = vld [vmem:[%s454 + $0x7a] sm:$0xff]
      %v658 = vld [vmem:[%s454 + $0x82] sm:$0xff]
      %v659 = vld [vmem:[%s454 + $0x92] sm:$0xff]
      %v660 = vld [vmem:[%s454 + $0x9a] sm:$0xff]
      %v661 = vld [vmem:[%s454 + $0xaa] sm:$0xff]
      %v662 = vld [vmem:[%s454 + $0xb2] sm:$0xff]
      %v663 = vld [vmem:[%s454 + $0xc2] sm:$0xff]
      %v664 = vld [vmem:[%s454 + $0xca] sm:$0xff]
      %v665 = vld [vmem:[%s454 + $0xda] sm:$0xff]
      %v666 = vld [vmem:[%s454 + $0xe2] sm:$0xff]
      %v667 = vld [vmem:[%s454 + $0xf2] sm:$0xff]
      %v668 = vld [vmem:[%s454 + $0xfa] sm:$0xff]
      %v669 = vld [vmem:[%s454 + $0x10a] sm:$0xff]
      %v670 = vld [vmem:[%s454 + $0x112] sm:$0xff]
      %v671 = vld [vmem:[%s454 + $0x122] sm:$0xff]
      %v672 = vld [vmem:[%s454 + $0x12a] sm:$0xff]
      %v673 = vld [vmem:[%s454 + $0x13a] sm:$0xff]
      %v674 = vld [vmem:[%s454 + $0x142] sm:$0xff]
      %v675 = vld [vmem:[%s454 + $0x152] sm:$0xff]
      %v676 = vld [vmem:[%s454 + $0x15a] sm:$0xff]
      %v677 = vld [vmem:[%s454 + $0x16a] sm:$0xff]
      %v678 = vld [vmem:[%s454 + $0x172] sm:$0xff]
      %s679 = scalar_lea.vmem [#allocation2], 48
      %v680 = vld [vmem:[%s679] sm:$0xff]
      %v681 = vld [vmem:[%s679 + $0x8] sm:$0xff]
      %v682 = vld [vmem:[%s679 + $0x18] sm:$0xff]
      %v683 = vld [vmem:[%s679 + $0x20] sm:$0xff]
      %v684 = vld [vmem:[%s679 + $0x30] sm:$0xff]
      %v685 = vld [vmem:[%s679 + $0x38] sm:$0xff]
      %v686 = vld [vmem:[%s679 + $0x48] sm:$0xff]
      %v687 = vld [vmem:[%s679 + $0x50] sm:$0xff]
      %v688 = vld [vmem:[%s679 + $0x60] sm:$0xff]
      %v689 = vld [vmem:[%s679 + $0x68] sm:$0xff]
      %v690 = vld [vmem:[%s679 + $0x78] sm:$0xff]
      %v691 = vld [vmem:[%s679 + $0x80] sm:$0xff]
      %v692 = vld [vmem:[%s679 + $0x90] sm:$0xff]
      %v693 = vld [vmem:[%s679 + $0x98] sm:$0xff]
      %v694 = vld [vmem:[%s679 + $0xa8] sm:$0xff]
      %v695 = vld [vmem:[%s679 + $0xb0] sm:$0xff]
      %v696 = vld [vmem:[%s679 + $0xc0] sm:$0xff]
      %v697 = vld [vmem:[%s679 + $0xc8] sm:$0xff]
      %v698 = vld [vmem:[%s679 + $0xd8] sm:$0xff]
      %v699 = vld [vmem:[%s679 + $0xe0] sm:$0xff]
      %v700 = vld [vmem:[%s679 + $0xf0] sm:$0xff]
      %v701 = vld [vmem:[%s679 + $0xf8] sm:$0xff]
      %v702 = vld [vmem:[%s679 + $0x108] sm:$0xff]
      %v703 = vld [vmem:[%s679 + $0x110] sm:$0xff]
      %v704 = vld [vmem:[%s679 + $0x120] sm:$0xff]
      %v705 = vld [vmem:[%s679 + $0x128] sm:$0xff]
      %v706 = vld [vmem:[%s679 + $0x138] sm:$0xff]
      %v707 = vld [vmem:[%s679 + $0x140] sm:$0xff]
      %v708 = vld [vmem:[%s679 + $0x150] sm:$0xff]
      %v709 = vld [vmem:[%s679 + $0x158] sm:$0xff]
      %v710 = vld [vmem:[%s679 + $0x168] sm:$0xff]
      %v711 = vld [vmem:[%s679 + $0x170] sm:$0xff]
      %v712 = vld [vmem:[%s679 + $0x1] sm:$0xff]
      %v713 = vld [vmem:[%s679 + $0x9] sm:$0xff]
      %v714 = vld [vmem:[%s679 + $0x19] sm:$0xff]
      %v715 = vld [vmem:[%s679 + $0x21] sm:$0xff]
      %v716 = vld [vmem:[%s679 + $0x31] sm:$0xff]
      %v717 = vld [vmem:[%s679 + $0x39] sm:$0xff]
      %v718 = vld [vmem:[%s679 + $0x49] sm:$0xff]
      %v719 = vld [vmem:[%s679 + $0x51] sm:$0xff]
      %v720 = vld [vmem:[%s679 + $0x61] sm:$0xff]
      %v721 = vld [vmem:[%s679 + $0x69] sm:$0xff]
      %v722 = vld [vmem:[%s679 + $0x79] sm:$0xff]
      %v723 = vld [vmem:[%s679 + $0x81] sm:$0xff]
      %v724 = vld [vmem:[%s679 + $0x91] sm:$0xff]
      %v725 = vld [vmem:[%s679 + $0x99] sm:$0xff]
      %v726 = vld [vmem:[%s679 + $0xa9] sm:$0xff]
      %v727 = vld [vmem:[%s679 + $0xb1] sm:$0xff]
      %v728 = vld [vmem:[%s679 + $0xc1] sm:$0xff]
      %v729 = vld [vmem:[%s679 + $0xc9] sm:$0xff]
      %v730 = vld [vmem:[%s679 + $0xd9] sm:$0xff]
      %v731 = vld [vmem:[%s679 + $0xe1] sm:$0xff]
      %v732 = vld [vmem:[%s679 + $0xf1] sm:$0xff]
      %v733 = vld [vmem:[%s679 + $0xf9] sm:$0xff]
      %v734 = vld [vmem:[%s679 + $0x109] sm:$0xff]
      %v735 = vld [vmem:[%s679 + $0x111] sm:$0xff]
      %v736 = vld [vmem:[%s679 + $0x121] sm:$0xff]
      %v737 = vld [vmem:[%s679 + $0x129] sm:$0xff]
      %v738 = vld [vmem:[%s679 + $0x139] sm:$0xff]
      %v739 = vld [vmem:[%s679 + $0x141] sm:$0xff]
      %v740 = vld [vmem:[%s679 + $0x151] sm:$0xff]
      %v741 = vld [vmem:[%s679 + $0x159] sm:$0xff]
      %v742 = vld [vmem:[%s679 + $0x169] sm:$0xff]
      %v743 = vld [vmem:[%s679 + $0x171] sm:$0xff]
      %v744 = vld [vmem:[%s679 + $0x2] sm:$0xff]
      %v745 = vld [vmem:[%s679 + $0xa] sm:$0xff]
      %v746 = vld [vmem:[%s679 + $0x1a] sm:$0xff]
      %v747 = vld [vmem:[%s679 + $0x22] sm:$0xff]
      %v748 = vld [vmem:[%s679 + $0x32] sm:$0xff]
      %v749 = vld [vmem:[%s679 + $0x3a] sm:$0xff]
      %v750 = vld [vmem:[%s679 + $0x4a] sm:$0xff]
      %v751 = vld [vmem:[%s679 + $0x52] sm:$0xff]
      %v752 = vld [vmem:[%s679 + $0x62] sm:$0xff]
      %v753 = vld [vmem:[%s679 + $0x6a] sm:$0xff]
      %v754 = vld [vmem:[%s679 + $0x7a] sm:$0xff]
      %v755 = vld [vmem:[%s679 + $0x82] sm:$0xff]
      %v756 = vld [vmem:[%s679 + $0x92] sm:$0xff]
      %v757 = vld [vmem:[%s679 + $0x9a] sm:$0xff]
      %v758 = vld [vmem:[%s679 + $0xaa] sm:$0xff]
      %v759 = vld [vmem:[%s679 + $0xb2] sm:$0xff]
      %v760 = vld [vmem:[%s679 + $0xc2] sm:$0xff]
      %v761 = vld [vmem:[%s679 + $0xca] sm:$0xff]
      %v762 = vld [vmem:[%s679 + $0xda] sm:$0xff]
      %v763 = vld [vmem:[%s679 + $0xe2] sm:$0xff]
      %v764 = vld [vmem:[%s679 + $0xf2] sm:$0xff]
      %v765 = vld [vmem:[%s679 + $0xfa] sm:$0xff]
      %v766 = vld [vmem:[%s679 + $0x10a] sm:$0xff]
      %v767 = vld [vmem:[%s679 + $0x112] sm:$0xff]
      %v768 = vld [vmem:[%s679 + $0x122] sm:$0xff]
      %v769 = vld [vmem:[%s679 + $0x12a] sm:$0xff]
      %v770 = vld [vmem:[%s679 + $0x13a] sm:$0xff]
      %v771 = vld [vmem:[%s679 + $0x142] sm:$0xff]
      %v772 = vld [vmem:[%s679 + $0x152] sm:$0xff]
      %v773 = vld [vmem:[%s679 + $0x15a] sm:$0xff]
      %v774 = vld [vmem:[%s679 + $0x16a] sm:$0xff]
      %v775 = vld [vmem:[%s679 + $0x172] sm:$0xff]
      %808 = vrot.lane.b32.xlu0 %v519, 4
      %v809 = vpop.permute.xlu0 %808
      %810 = vrot.lane.b32.xlu0 %v520, 4
      %v811 = vpop.permute.xlu0 %810
      %812 = vrot.lane.b32.xlu0 %v521, 4
      %v813 = vpop.permute.xlu0 %812
      %814 = vrot.lane.b32.xlu0 %v522, 4
      %v815 = vpop.permute.xlu0 %814
      %816 = vrot.lane.b32.xlu0 %v523, 4
      %v817 = vpop.permute.xlu0 %816
      %818 = vrot.lane.b32.xlu0 %v524, 4
      %v819 = vpop.permute.xlu0 %818
      %820 = vrot.lane.b32.xlu0 %v525, 4
      %v821 = vpop.permute.xlu0 %820
      %822 = vrot.lane.b32.xlu0 %v526, 4
      %v823 = vpop.permute.xlu0 %822
      %824 = vrot.lane.b32.xlu0 %v527, 4
      %v825 = vpop.permute.xlu0 %824
      %826 = vrot.lane.b32.xlu0 %v528, 4
      %v827 = vpop.permute.xlu0 %826
      %828 = vrot.lane.b32.xlu0 %v529, 4
      %v829 = vpop.permute.xlu0 %828
      %830 = vrot.lane.b32.xlu0 %v530, 4
      %v831 = vpop.permute.xlu0 %830
      %832 = vrot.lane.b32.xlu0 %v531, 4
      %v833 = vpop.permute.xlu0 %832
      %834 = vrot.lane.b32.xlu0 %v532, 4
      %v835 = vpop.permute.xlu0 %834
      %836 = vrot.lane.b32.xlu0 %v533, 4
      %v837 = vpop.permute.xlu0 %836
      %838 = vrot.lane.b32.xlu0 %v534, 4
      %v839 = vpop.permute.xlu0 %838
      %840 = vrot.lane.b32.xlu0 %v535, 4
      %v841 = vpop.permute.xlu0 %840
      %842 = vrot.lane.b32.xlu0 %v536, 4
      %v843 = vpop.permute.xlu0 %842
      %844 = vrot.lane.b32.xlu0 %v537, 4
      %v845 = vpop.permute.xlu0 %844
      %846 = vrot.lane.b32.xlu0 %v538, 4
      %v847 = vpop.permute.xlu0 %846
      %848 = vrot.lane.b32.xlu0 %v539, 4
      %v849 = vpop.permute.xlu0 %848
      %850 = vrot.lane.b32.xlu0 %v540, 4
      %v851 = vpop.permute.xlu0 %850
      %852 = vrot.lane.b32.xlu0 %v541, 4
      %v853 = vpop.permute.xlu0 %852
      %854 = vrot.lane.b32.xlu0 %v542, 4
      %v855 = vpop.permute.xlu0 %854
      %856 = vrot.lane.b32.xlu0 %v543, 4
      %v857 = vpop.permute.xlu0 %856
      %858 = vrot.lane.b32.xlu0 %v544, 4
      %v859 = vpop.permute.xlu0 %858
      %860 = vrot.lane.b32.xlu0 %v545, 4
      %v861 = vpop.permute.xlu0 %860
      %862 = vrot.lane.b32.xlu0 %v546, 4
      %v863 = vpop.permute.xlu0 %862
      %864 = vrot.lane.b32.xlu0 %v547, 4
      %v865 = vpop.permute.xlu0 %864
      %866 = vrot.lane.b32.xlu0 %v548, 4
      %v867 = vpop.permute.xlu0 %866
      %868 = vrot.lane.b32.xlu0 %v549, 4
      %v869 = vpop.permute.xlu0 %868
      %870 = vrot.lane.b32.xlu0 %v550, 4
      %v871 = vpop.permute.xlu0 %870
      %936 = vrot.lane.b32.xlu0 %v551, 8
      %v937 = vpop.permute.xlu0 %936
      %938 = vrot.lane.b32.xlu0 %v552, 8
      %v939 = vpop.permute.xlu0 %938
      %940 = vrot.lane.b32.xlu0 %v553, 8
      %v941 = vpop.permute.xlu0 %940
      %942 = vrot.lane.b32.xlu0 %v554, 8
      %v943 = vpop.permute.xlu0 %942
      %944 = vrot.lane.b32.xlu0 %v555, 8
      %v945 = vpop.permute.xlu0 %944
      %946 = vrot.lane.b32.xlu0 %v556, 8
      %v947 = vpop.permute.xlu0 %946
      %948 = vrot.lane.b32.xlu0 %v557, 8
      %v949 = vpop.permute.xlu0 %948
      %950 = vrot.lane.b32.xlu0 %v558, 8
      %v951 = vpop.permute.xlu0 %950
      %952 = vrot.lane.b32.xlu0 %v559, 8
      %v953 = vpop.permute.xlu0 %952
      %954 = vrot.lane.b32.xlu0 %v560, 8
      %v955 = vpop.permute.xlu0 %954
      %956 = vrot.lane.b32.xlu0 %v561, 8
      %v957 = vpop.permute.xlu0 %956
      %958 = vrot.lane.b32.xlu0 %v562, 8
      %v959 = vpop.permute.xlu0 %958
      %960 = vrot.lane.b32.xlu0 %v563, 8
      %v961 = vpop.permute.xlu0 %960
      %962 = vrot.lane.b32.xlu0 %v564, 8
      %v963 = vpop.permute.xlu0 %962
      %964 = vrot.lane.b32.xlu0 %v565, 8
      %v965 = vpop.permute.xlu0 %964
      %966 = vrot.lane.b32.xlu0 %v566, 8
      %v967 = vpop.permute.xlu0 %966
      %968 = vrot.lane.b32.xlu0 %v567, 8
      %v969 = vpop.permute.xlu0 %968
      %970 = vrot.lane.b32.xlu0 %v568, 8
      %v971 = vpop.permute.xlu0 %970
      %972 = vrot.lane.b32.xlu0 %v569, 8
      %v973 = vpop.permute.xlu0 %972
      %974 = vrot.lane.b32.xlu0 %v570, 8
      %v975 = vpop.permute.xlu0 %974
      %976 = vrot.lane.b32.xlu0 %v571, 8
      %v977 = vpop.permute.xlu0 %976
      %978 = vrot.lane.b32.xlu0 %v572, 8
      %v979 = vpop.permute.xlu0 %978
      %980 = vrot.lane.b32.xlu0 %v573, 8
      %v981 = vpop.permute.xlu0 %980
      %982 = vrot.lane.b32.xlu0 %v574, 8
      %v983 = vpop.permute.xlu0 %982
      %984 = vrot.lane.b32.xlu0 %v575, 8
      %v985 = vpop.permute.xlu0 %984
      %986 = vrot.lane.b32.xlu0 %v576, 8
      %v987 = vpop.permute.xlu0 %986
      %988 = vrot.lane.b32.xlu0 %v577, 8
      %v989 = vpop.permute.xlu0 %988
      %990 = vrot.lane.b32.xlu0 %v578, 8
      %v991 = vpop.permute.xlu0 %990
      %992 = vrot.lane.b32.xlu0 %v579, 8
      %v993 = vpop.permute.xlu0 %992
      %994 = vrot.lane.b32.xlu0 %v580, 8
      %v995 = vpop.permute.xlu0 %994
      %996 = vrot.lane.b32.xlu0 %v581, 8
      %v997 = vpop.permute.xlu0 %996
      %998 = vrot.lane.b32.xlu0 %v582, 8
      %v999 = vpop.permute.xlu0 %998
      %1064 = vrot.lane.b32.xlu0 %v583, 12
      %v1065 = vpop.permute.xlu0 %1064
      %1066 = vrot.lane.b32.xlu0 %v584, 12
      %v1067 = vpop.permute.xlu0 %1066
      %1068 = vrot.lane.b32.xlu0 %v585, 12
      %v1069 = vpop.permute.xlu0 %1068
      %1070 = vrot.lane.b32.xlu0 %v586, 12
      %v1071 = vpop.permute.xlu0 %1070
      %1072 = vrot.lane.b32.xlu0 %v587, 12
      %v1073 = vpop.permute.xlu0 %1072
      %1074 = vrot.lane.b32.xlu0 %v588, 12
      %v1075 = vpop.permute.xlu0 %1074
      %1076 = vrot.lane.b32.xlu0 %v589, 12
      %v1077 = vpop.permute.xlu0 %1076
      %1078 = vrot.lane.b32.xlu0 %v590, 12
      %v1079 = vpop.permute.xlu0 %1078
      %1080 = vrot.lane.b32.xlu0 %v591, 12
      %v1081 = vpop.permute.xlu0 %1080
      %1082 = vrot.lane.b32.xlu0 %v592, 12
      %v1083 = vpop.permute.xlu0 %1082
      %1084 = vrot.lane.b32.xlu0 %v593, 12
      %v1085 = vpop.permute.xlu0 %1084
      %1086 = vrot.lane.b32.xlu0 %v594, 12
      %v1087 = vpop.permute.xlu0 %1086
      %1088 = vrot.lane.b32.xlu0 %v595, 12
      %v1089 = vpop.permute.xlu0 %1088
      %1090 = vrot.lane.b32.xlu0 %v596, 12
      %v1091 = vpop.permute.xlu0 %1090
      %1092 = vrot.lane.b32.xlu0 %v597, 12
      %v1093 = vpop.permute.xlu0 %1092
      %1094 = vrot.lane.b32.xlu0 %v598, 12
      %v1095 = vpop.permute.xlu0 %1094
      %1096 = vrot.lane.b32.xlu0 %v599, 12
      %v1097 = vpop.permute.xlu0 %1096
      %1098 = vrot.lane.b32.xlu0 %v600, 12
      %v1099 = vpop.permute.xlu0 %1098
      %1100 = vrot.lane.b32.xlu0 %v601, 12
      %v1101 = vpop.permute.xlu0 %1100
      %1102 = vrot.lane.b32.xlu0 %v602, 12
      %v1103 = vpop.permute.xlu0 %1102
      %1104 = vrot.lane.b32.xlu0 %v603, 12
      %v1105 = vpop.permute.xlu0 %1104
      %1106 = vrot.lane.b32.xlu0 %v604, 12
      %v1107 = vpop.permute.xlu0 %1106
      %1108 = vrot.lane.b32.xlu0 %v605, 12
      %v1109 = vpop.permute.xlu0 %1108
      %1110 = vrot.lane.b32.xlu0 %v606, 12
      %v1111 = vpop.permute.xlu0 %1110
      %1112 = vrot.lane.b32.xlu0 %v607, 12
      %v1113 = vpop.permute.xlu0 %1112
      %1114 = vrot.lane.b32.xlu0 %v608, 12
      %v1115 = vpop.permute.xlu0 %1114
      %1116 = vrot.lane.b32.xlu0 %v609, 12
      %v1117 = vpop.permute.xlu0 %1116
      %1118 = vrot.lane.b32.xlu0 %v610, 12
      %v1119 = vpop.permute.xlu0 %1118
      %1120 = vrot.lane.b32.xlu0 %v611, 12
      %v1121 = vpop.permute.xlu0 %1120
      %1122 = vrot.lane.b32.xlu0 %v612, 12
      %v1123 = vpop.permute.xlu0 %1122
      %1124 = vrot.lane.b32.xlu0 %v613, 12
      %v1125 = vpop.permute.xlu0 %1124
      %1126 = vrot.lane.b32.xlu0 %v614, 12
      %v1127 = vpop.permute.xlu0 %1126
      %1192 = vrot.lane.b32.xlu0 %v615, 16
      %v1193 = vpop.permute.xlu0 %1192
      %1194 = vrot.lane.b32.xlu0 %v616, 16
      %v1195 = vpop.permute.xlu0 %1194
      %1196 = vrot.lane.b32.xlu0 %v617, 16
      %v1197 = vpop.permute.xlu0 %1196
      %1198 = vrot.lane.b32.xlu0 %v618, 16
      %v1199 = vpop.permute.xlu0 %1198
      %1200 = vrot.lane.b32.xlu0 %v619, 16
      %v1201 = vpop.permute.xlu0 %1200
      %1202 = vrot.lane.b32.xlu0 %v620, 16
      %v1203 = vpop.permute.xlu0 %1202
      %1204 = vrot.lane.b32.xlu0 %v621, 16
      %v1205 = vpop.permute.xlu0 %1204
      %1206 = vrot.lane.b32.xlu0 %v622, 16
      %v1207 = vpop.permute.xlu0 %1206
      %1208 = vrot.lane.b32.xlu0 %v623, 16
      %v1209 = vpop.permute.xlu0 %1208
      %1210 = vrot.lane.b32.xlu0 %v624, 16
      %v1211 = vpop.permute.xlu0 %1210
      %1212 = vrot.lane.b32.xlu0 %v625, 16
      %v1213 = vpop.permute.xlu0 %1212
      %1214 = vrot.lane.b32.xlu0 %v626, 16
      %v1215 = vpop.permute.xlu0 %1214
      %1216 = vrot.lane.b32.xlu0 %v627, 16
      %v1217 = vpop.permute.xlu0 %1216
      %1218 = vrot.lane.b32.xlu0 %v628, 16
      %v1219 = vpop.permute.xlu0 %1218
      %1220 = vrot.lane.b32.xlu0 %v629, 16
      %v1221 = vpop.permute.xlu0 %1220
      %1222 = vrot.lane.b32.xlu0 %v630, 16
      %v1223 = vpop.permute.xlu0 %1222
      %1224 = vrot.lane.b32.xlu0 %v631, 16
      %v1225 = vpop.permute.xlu0 %1224
      %1226 = vrot.lane.b32.xlu0 %v632, 16
      %v1227 = vpop.permute.xlu0 %1226
      %1228 = vrot.lane.b32.xlu0 %v633, 16
      %v1229 = vpop.permute.xlu0 %1228
      %1230 = vrot.lane.b32.xlu0 %v634, 16
      %v1231 = vpop.permute.xlu0 %1230
      %1232 = vrot.lane.b32.xlu0 %v635, 16
      %v1233 = vpop.permute.xlu0 %1232
      %1234 = vrot.lane.b32.xlu0 %v636, 16
      %v1235 = vpop.permute.xlu0 %1234
      %1236 = vrot.lane.b32.xlu0 %v637, 16
      %v1237 = vpop.permute.xlu0 %1236
      %1238 = vrot.lane.b32.xlu0 %v638, 16
      %v1239 = vpop.permute.xlu0 %1238
      %1240 = vrot.lane.b32.xlu0 %v639, 16
      %v1241 = vpop.permute.xlu0 %1240
      %1242 = vrot.lane.b32.xlu0 %v640, 16
      %v1243 = vpop.permute.xlu0 %1242
      %1244 = vrot.lane.b32.xlu0 %v641, 16
      %v1245 = vpop.permute.xlu0 %1244
      %1246 = vrot.lane.b32.xlu0 %v642, 16
      %v1247 = vpop.permute.xlu0 %1246
      %1248 = vrot.lane.b32.xlu0 %v643, 16
      %v1249 = vpop.permute.xlu0 %1248
      %1250 = vrot.lane.b32.xlu0 %v644, 16
      %v1251 = vpop.permute.xlu0 %1250
      %1252 = vrot.lane.b32.xlu0 %v645, 16
      %v1253 = vpop.permute.xlu0 %1252
      %1254 = vrot.lane.b32.xlu0 %v646, 16
      %v1255 = vpop.permute.xlu0 %1254
      %1320 = vrot.lane.b32.xlu0 %v647, 20
      %v1321 = vpop.permute.xlu0 %1320
      %1322 = vrot.lane.b32.xlu0 %v648, 20
      %v1323 = vpop.permute.xlu0 %1322
      %1324 = vrot.lane.b32.xlu0 %v649, 20
      %v1325 = vpop.permute.xlu0 %1324
      %1326 = vrot.lane.b32.xlu0 %v650, 20
      %v1327 = vpop.permute.xlu0 %1326
      %1328 = vrot.lane.b32.xlu0 %v651, 20
      %v1329 = vpop.permute.xlu0 %1328
      %1330 = vrot.lane.b32.xlu0 %v652, 20
      %v1331 = vpop.permute.xlu0 %1330
      %1332 = vrot.lane.b32.xlu0 %v653, 20
      %v1333 = vpop.permute.xlu0 %1332
      %1334 = vrot.lane.b32.xlu0 %v654, 20
      %v1335 = vpop.permute.xlu0 %1334
      %1336 = vrot.lane.b32.xlu0 %v655, 20
      %v1337 = vpop.permute.xlu0 %1336
      %1338 = vrot.lane.b32.xlu0 %v656, 20
      %v1339 = vpop.permute.xlu0 %1338
      %1340 = vrot.lane.b32.xlu0 %v657, 20
      %v1341 = vpop.permute.xlu0 %1340
      %1342 = vrot.lane.b32.xlu0 %v658, 20
      %v1343 = vpop.permute.xlu0 %1342
      %1344 = vrot.lane.b32.xlu0 %v659, 20
      %v1345 = vpop.permute.xlu0 %1344
      %1346 = vrot.lane.b32.xlu0 %v660, 20
      %v1347 = vpop.permute.xlu0 %1346
      %1348 = vrot.lane.b32.xlu0 %v661, 20
      %v1349 = vpop.permute.xlu0 %1348
      %1350 = vrot.lane.b32.xlu0 %v662, 20
      %v1351 = vpop.permute.xlu0 %1350
      %1352 = vrot.lane.b32.xlu0 %v663, 20
      %v1353 = vpop.permute.xlu0 %1352
      %1354 = vrot.lane.b32.xlu0 %v664, 20
      %v1355 = vpop.permute.xlu0 %1354
      %1356 = vrot.lane.b32.xlu0 %v665, 20
      %v1357 = vpop.permute.xlu0 %1356
      %1358 = vrot.lane.b32.xlu0 %v666, 20
      %v1359 = vpop.permute.xlu0 %1358
      %1360 = vrot.lane.b32.xlu0 %v667, 20
      %v1361 = vpop.permute.xlu0 %1360
      %1362 = vrot.lane.b32.xlu0 %v668, 20
      %v1363 = vpop.permute.xlu0 %1362
      %1364 = vrot.lane.b32.xlu0 %v669, 20
      %v1365 = vpop.permute.xlu0 %1364
      %1366 = vrot.lane.b32.xlu0 %v670, 20
      %v1367 = vpop.permute.xlu0 %1366
      %1368 = vrot.lane.b32.xlu0 %v671, 20
      %v1369 = vpop.permute.xlu0 %1368
      %1370 = vrot.lane.b32.xlu0 %v672, 20
      %v1371 = vpop.permute.xlu0 %1370
      %1372 = vrot.lane.b32.xlu0 %v673, 20
      %v1373 = vpop.permute.xlu0 %1372
      %1374 = vrot.lane.b32.xlu0 %v674, 20
      %v1375 = vpop.permute.xlu0 %1374
      %1376 = vrot.lane.b32.xlu0 %v675, 20
      %v1377 = vpop.permute.xlu0 %1376
      %1378 = vrot.lane.b32.xlu0 %v676, 20
      %v1379 = vpop.permute.xlu0 %1378
      %1380 = vrot.lane.b32.xlu0 %v677, 20
      %v1381 = vpop.permute.xlu0 %1380
      %1382 = vrot.lane.b32.xlu0 %v678, 20
      %v1383 = vpop.permute.xlu0 %1382
      %1448 = vrot.lane.b32.xlu0 %v680, 24
      %v1449 = vpop.permute.xlu0 %1448
      %1450 = vrot.lane.b32.xlu0 %v681, 24
      %v1451 = vpop.permute.xlu0 %1450
      %1452 = vrot.lane.b32.xlu0 %v682, 24
      %v1453 = vpop.permute.xlu0 %1452
      %1454 = vrot.lane.b32.xlu0 %v683, 24
      %v1455 = vpop.permute.xlu0 %1454
      %1456 = vrot.lane.b32.xlu0 %v684, 24
      %v1457 = vpop.permute.xlu0 %1456
      %1458 = vrot.lane.b32.xlu0 %v685, 24
      %v1459 = vpop.permute.xlu0 %1458
      %1460 = vrot.lane.b32.xlu0 %v686, 24
      %v1461 = vpop.permute.xlu0 %1460
      %1462 = vrot.lane.b32.xlu0 %v687, 24
      %v1463 = vpop.permute.xlu0 %1462
      %1464 = vrot.lane.b32.xlu0 %v688, 24
      %v1465 = vpop.permute.xlu0 %1464
      %1466 = vrot.lane.b32.xlu0 %v689, 24
      %v1467 = vpop.permute.xlu0 %1466
      %1468 = vrot.lane.b32.xlu0 %v690, 24
      %v1469 = vpop.permute.xlu0 %1468
      %1470 = vrot.lane.b32.xlu0 %v691, 24
      %v1471 = vpop.permute.xlu0 %1470
      %1472 = vrot.lane.b32.xlu0 %v692, 24
      %v1473 = vpop.permute.xlu0 %1472
      %1474 = vrot.lane.b32.xlu0 %v693, 24
      %v1475 = vpop.permute.xlu0 %1474
      %1476 = vrot.lane.b32.xlu0 %v694, 24
      %v1477 = vpop.permute.xlu0 %1476
      %1478 = vrot.lane.b32.xlu0 %v695, 24
      %v1479 = vpop.permute.xlu0 %1478
      %1480 = vrot.lane.b32.xlu0 %v696, 24
      %v1481 = vpop.permute.xlu0 %1480
      %1482 = vrot.lane.b32.xlu0 %v697, 24
      %v1483 = vpop.permute.xlu0 %1482
      %1484 = vrot.lane.b32.xlu0 %v698, 24
      %v1485 = vpop.permute.xlu0 %1484
      %1486 = vrot.lane.b32.xlu0 %v699, 24
      %v1487 = vpop.permute.xlu0 %1486
      %1488 = vrot.lane.b32.xlu0 %v700, 24
      %v1489 = vpop.permute.xlu0 %1488
      %1490 = vrot.lane.b32.xlu0 %v701, 24
      %v1491 = vpop.permute.xlu0 %1490
      %1492 = vrot.lane.b32.xlu0 %v702, 24
      %v1493 = vpop.permute.xlu0 %1492
      %1494 = vrot.lane.b32.xlu0 %v703, 24
      %v1495 = vpop.permute.xlu0 %1494
      %1496 = vrot.lane.b32.xlu0 %v704, 24
      %v1497 = vpop.permute.xlu0 %1496
      %1498 = vrot.lane.b32.xlu0 %v705, 24
      %v1499 = vpop.permute.xlu0 %1498
      %1500 = vrot.lane.b32.xlu0 %v706, 24
      %v1501 = vpop.permute.xlu0 %1500
      %1502 = vrot.lane.b32.xlu0 %v707, 24
      %v1503 = vpop.permute.xlu0 %1502
      %1504 = vrot.lane.b32.xlu0 %v708, 24
      %v1505 = vpop.permute.xlu0 %1504
      %1506 = vrot.lane.b32.xlu0 %v709, 24
      %v1507 = vpop.permute.xlu0 %1506
      %1508 = vrot.lane.b32.xlu0 %v710, 24
      %v1509 = vpop.permute.xlu0 %1508
      %1510 = vrot.lane.b32.xlu0 %v711, 24
      %v1511 = vpop.permute.xlu0 %1510
      %1576 = vrot.lane.b32.xlu0 %v712, 28
      %v1577 = vpop.permute.xlu0 %1576
      %1578 = vrot.lane.b32.xlu0 %v713, 28
      %v1579 = vpop.permute.xlu0 %1578
      %1580 = vrot.lane.b32.xlu0 %v714, 28
      %v1581 = vpop.permute.xlu0 %1580
      %1582 = vrot.lane.b32.xlu0 %v715, 28
      %v1583 = vpop.permute.xlu0 %1582
      %1584 = vrot.lane.b32.xlu0 %v716, 28
      %v1585 = vpop.permute.xlu0 %1584
      %1586 = vrot.lane.b32.xlu0 %v717, 28
      %v1587 = vpop.permute.xlu0 %1586
      %1588 = vrot.lane.b32.xlu0 %v718, 28
      %v1589 = vpop.permute.xlu0 %1588
      %1590 = vrot.lane.b32.xlu0 %v719, 28
      %v1591 = vpop.permute.xlu0 %1590
      %1592 = vrot.lane.b32.xlu0 %v720, 28
      %v1593 = vpop.permute.xlu0 %1592
      %1594 = vrot.lane.b32.xlu0 %v721, 28
      %v1595 = vpop.permute.xlu0 %1594
      %1596 = vrot.lane.b32.xlu0 %v722, 28
      %v1597 = vpop.permute.xlu0 %1596
      %1598 = vrot.lane.b32.xlu0 %v723, 28
      %v1599 = vpop.permute.xlu0 %1598
      %1600 = vrot.lane.b32.xlu0 %v724, 28
      %v1601 = vpop.permute.xlu0 %1600
      %1602 = vrot.lane.b32.xlu0 %v725, 28
      %v1603 = vpop.permute.xlu0 %1602
      %1604 = vrot.lane.b32.xlu0 %v726, 28
      %v1605 = vpop.permute.xlu0 %1604
      %1606 = vrot.lane.b32.xlu0 %v727, 28
      %v1607 = vpop.permute.xlu0 %1606
      %1608 = vrot.lane.b32.xlu0 %v728, 28
      %v1609 = vpop.permute.xlu0 %1608
      %1610 = vrot.lane.b32.xlu0 %v729, 28
      %v1611 = vpop.permute.xlu0 %1610
      %1612 = vrot.lane.b32.xlu0 %v730, 28
      %v1613 = vpop.permute.xlu0 %1612
      %1614 = vrot.lane.b32.xlu0 %v731, 28
      %v1615 = vpop.permute.xlu0 %1614
      %1616 = vrot.lane.b32.xlu0 %v732, 28
      %v1617 = vpop.permute.xlu0 %1616
      %1618 = vrot.lane.b32.xlu0 %v733, 28
      %v1619 = vpop.permute.xlu0 %1618
      %1620 = vrot.lane.b32.xlu0 %v734, 28
      %v1621 = vpop.permute.xlu0 %1620
      %1622 = vrot.lane.b32.xlu0 %v735, 28
      %v1623 = vpop.permute.xlu0 %1622
      %1624 = vrot.lane.b32.xlu0 %v736, 28
      %v1625 = vpop.permute.xlu0 %1624
      %1626 = vrot.lane.b32.xlu0 %v737, 28
      %v1627 = vpop.permute.xlu0 %1626
      %1628 = vrot.lane.b32.xlu0 %v738, 28
      %v1629 = vpop.permute.xlu0 %1628
      %1630 = vrot.lane.b32.xlu0 %v739, 28
      %v1631 = vpop.permute.xlu0 %1630
      %1632 = vrot.lane.b32.xlu0 %v740, 28
      %v1633 = vpop.permute.xlu0 %1632
      %1634 = vrot.lane.b32.xlu0 %v741, 28
      %v1635 = vpop.permute.xlu0 %1634
      %1636 = vrot.lane.b32.xlu0 %v742, 28
      %v1637 = vpop.permute.xlu0 %1636
      %1638 = vrot.lane.b32.xlu0 %v743, 28
      %v1639 = vpop.permute.xlu0 %1638
      %1704 = vrot.lane.b32.xlu0 %v744, 32
      %v1705 = vpop.permute.xlu0 %1704
      %1706 = vrot.lane.b32.xlu0 %v745, 32
      %v1707 = vpop.permute.xlu0 %1706
      %1708 = vrot.lane.b32.xlu0 %v746, 32
      %v1709 = vpop.permute.xlu0 %1708
      %1710 = vrot.lane.b32.xlu0 %v747, 32
      %v1711 = vpop.permute.xlu0 %1710
      %1712 = vrot.lane.b32.xlu0 %v748, 32
      %v1713 = vpop.permute.xlu0 %1712
      %1714 = vrot.lane.b32.xlu0 %v749, 32
      %v1715 = vpop.permute.xlu0 %1714
      %1716 = vrot.lane.b32.xlu0 %v750, 32
      %v1717 = vpop.permute.xlu0 %1716
      %1718 = vrot.lane.b32.xlu0 %v751, 32
      %v1719 = vpop.permute.xlu0 %1718
      %1720 = vrot.lane.b32.xlu0 %v752, 32
      %v1721 = vpop.permute.xlu0 %1720
      %1722 = vrot.lane.b32.xlu0 %v753, 32
      %v1723 = vpop.permute.xlu0 %1722
      %1724 = vrot.lane.b32.xlu0 %v754, 32
      %v1725 = vpop.permute.xlu0 %1724
      %1726 = vrot.lane.b32.xlu0 %v755, 32
      %v1727 = vpop.permute.xlu0 %1726
      %1728 = vrot.lane.b32.xlu0 %v756, 32
      %v1729 = vpop.permute.xlu0 %1728
      %1730 = vrot.lane.b32.xlu0 %v757, 32
      %v1731 = vpop.permute.xlu0 %1730
      %1732 = vrot.lane.b32.xlu0 %v758, 32
      %v1733 = vpop.permute.xlu0 %1732
      %1734 = vrot.lane.b32.xlu0 %v759, 32
      %v1735 = vpop.permute.xlu0 %1734
      %1736 = vrot.lane.b32.xlu0 %v760, 32
      %v1737 = vpop.permute.xlu0 %1736
      %1738 = vrot.lane.b32.xlu0 %v761, 32
      %v1739 = vpop.permute.xlu0 %1738
      %1740 = vrot.lane.b32.xlu0 %v762, 32
      %v1741 = vpop.permute.xlu0 %1740
      %1742 = vrot.lane.b32.xlu0 %v763, 32
      %v1743 = vpop.permute.xlu0 %1742
      %1744 = vrot.lane.b32.xlu0 %v764, 32
      %v1745 = vpop.permute.xlu0 %1744
      %1746 = vrot.lane.b32.xlu0 %v765, 32
      %v1747 = vpop.permute.xlu0 %1746
      %1748 = vrot.lane.b32.xlu0 %v766, 32
      %v1749 = vpop.permute.xlu0 %1748
      %1750 = vrot.lane.b32.xlu0 %v767, 32
      %v1751 = vpop.permute.xlu0 %1750
      %1752 = vrot.lane.b32.xlu0 %v768, 32
      %v1753 = vpop.permute.xlu0 %1752
      %1754 = vrot.lane.b32.xlu0 %v769, 32
      %v1755 = vpop.permute.xlu0 %1754
      %1756 = vrot.lane.b32.xlu0 %v770, 32
      %v1757 = vpop.permute.xlu0 %1756
      %1758 = vrot.lane.b32.xlu0 %v771, 32
      %v1759 = vpop.permute.xlu0 %1758
      %1760 = vrot.lane.b32.xlu0 %v772, 32
      %v1761 = vpop.permute.xlu0 %1760
      %1762 = vrot.lane.b32.xlu0 %v773, 32
      %v1763 = vpop.permute.xlu0 %1762
      %1764 = vrot.lane.b32.xlu0 %v774, 32
      %v1765 = vpop.permute.xlu0 %1764
      %1766 = vrot.lane.b32.xlu0 %v775, 32
      %v1767 = vpop.permute.xlu0 %1766
      %v1800 = vsel %vm398, %v487, %v809
      %v1801 = vsel %vm398, %v488, %v811
      %v1802 = vsel %vm398, %v489, %v813
      %v1803 = vsel %vm398, %v490, %v815
      %v1804 = vsel %vm398, %v491, %v817
      %v1805 = vsel %vm398, %v492, %v819
      %v1806 = vsel %vm398, %v493, %v821
      %v1807 = vsel %vm398, %v494, %v823
      %v1808 = vsel %vm398, %v495, %v825
      %v1809 = vsel %vm398, %v496, %v827
      %v1810 = vsel %vm398, %v497, %v829
      %v1811 = vsel %vm398, %v498, %v831
      %v1812 = vsel %vm398, %v499, %v833
      %v1813 = vsel %vm398, %v500, %v835
      %v1814 = vsel %vm398, %v501, %v837
      %v1815 = vsel %vm398, %v502, %v839
      %v1816 = vsel %vm398, %v503, %v841
      %v1817 = vsel %vm398, %v504, %v843
      %v1818 = vsel %vm398, %v505, %v845
      %v1819 = vsel %vm398, %v506, %v847
      %v1820 = vsel %vm398, %v507, %v849
      %v1821 = vsel %vm398, %v508, %v851
      %v1822 = vsel %vm398, %v509, %v853
      %v1823 = vsel %vm398, %v510, %v855
      %v1824 = vsel %vm398, %v511, %v857
      %v1825 = vsel %vm398, %v512, %v859
      %v1826 = vsel %vm398, %v513, %v861
      %v1827 = vsel %vm398, %v514, %v863
      %v1828 = vsel %vm398, %v515, %v865
      %v1829 = vsel %vm398, %v516, %v867
      %v1830 = vsel %vm398, %v517, %v869
      %v1831 = vsel %vm398, %v518, %v871
      %vm1832 = vcmask 64512
      %v1833 = vsel %vm1832, %v1800, %v937
      %v1834 = vsel %vm1832, %v1801, %v939
      %v1835 = vsel %vm1832, %v1802, %v941
      %v1836 = vsel %vm1832, %v1803, %v943
      %v1837 = vsel %vm1832, %v1804, %v945
      %v1838 = vsel %vm1832, %v1805, %v947
      %v1839 = vsel %vm1832, %v1806, %v949
      %v1840 = vsel %vm1832, %v1807, %v951
      %v1841 = vsel %vm1832, %v1808, %v953
      %v1842 = vsel %vm1832, %v1809, %v955
      %v1843 = vsel %vm1832, %v1810, %v957
      %v1844 = vsel %vm1832, %v1811, %v959
      %v1845 = vsel %vm1832, %v1812, %v961
      %v1846 = vsel %vm1832, %v1813, %v963
      %v1847 = vsel %vm1832, %v1814, %v965
      %v1848 = vsel %vm1832, %v1815, %v967
      %v1849 = vsel %vm1832, %v1816, %v969
      %v1850 = vsel %vm1832, %v1817, %v971
      %v1851 = vsel %vm1832, %v1818, %v973
      %v1852 = vsel %vm1832, %v1819, %v975
      %v1853 = vsel %vm1832, %v1820, %v977
      %v1854 = vsel %vm1832, %v1821, %v979
      %v1855 = vsel %vm1832, %v1822, %v981
      %v1856 = vsel %vm1832, %v1823, %v983
      %v1857 = vsel %vm1832, %v1824, %v985
      %v1858 = vsel %vm1832, %v1825, %v987
      %v1859 = vsel %vm1832, %v1826, %v989
      %v1860 = vsel %vm1832, %v1827, %v991
      %v1861 = vsel %vm1832, %v1828, %v993
      %v1862 = vsel %vm1832, %v1829, %v995
      %v1863 = vsel %vm1832, %v1830, %v997
      %v1864 = vsel %vm1832, %v1831, %v999
      %vm1865 = vcmask 97280
      %v1866 = vsel %vm1865, %v1833, %v1065
      %v1867 = vsel %vm1865, %v1834, %v1067
      %v1868 = vsel %vm1865, %v1835, %v1069
      %v1869 = vsel %vm1865, %v1836, %v1071
      %v1870 = vsel %vm1865, %v1837, %v1073
      %v1871 = vsel %vm1865, %v1838, %v1075
      %v1872 = vsel %vm1865, %v1839, %v1077
      %v1873 = vsel %vm1865, %v1840, %v1079
      %v1874 = vsel %vm1865, %v1841, %v1081
      %v1875 = vsel %vm1865, %v1842, %v1083
      %v1876 = vsel %vm1865, %v1843, %v1085
      %v1877 = vsel %vm1865, %v1844, %v1087
      %v1878 = vsel %vm1865, %v1845, %v1089
      %v1879 = vsel %vm1865, %v1846, %v1091
      %v1880 = vsel %vm1865, %v1847, %v1093
      %v1881 = vsel %vm1865, %v1848, %v1095
      %v1882 = vsel %vm1865, %v1849, %v1097
      %v1883 = vsel %vm1865, %v1850, %v1099
      %v1884 = vsel %vm1865, %v1851, %v1101
      %v1885 = vsel %vm1865, %v1852, %v1103
      %v1886 = vsel %vm1865, %v1853, %v1105
      %v1887 = vsel %vm1865, %v1854, %v1107
      %v1888 = vsel %vm1865, %v1855, %v1109
      %v1889 = vsel %vm1865, %v1856, %v1111
      %v1890 = vsel %vm1865, %v1857, %v1113
      %v1891 = vsel %vm1865, %v1858, %v1115
      %v1892 = vsel %vm1865, %v1859, %v1117
      %v1893 = vsel %vm1865, %v1860, %v1119
      %v1894 = vsel %vm1865, %v1861, %v1121
      %v1895 = vsel %vm1865, %v1862, %v1123
      %v1896 = vsel %vm1865, %v1863, %v1125
      %v1897 = vsel %vm1865, %v1864, %v1127
      %vm1898 = vcmask 130048
      %v1899 = vsel %vm1898, %v1866, %v1193
      %v1900 = vsel %vm1898, %v1867, %v1195
      %v1901 = vsel %vm1898, %v1868, %v1197
      %v1902 = vsel %vm1898, %v1869, %v1199
      %v1903 = vsel %vm1898, %v1870, %v1201
      %v1904 = vsel %vm1898, %v1871, %v1203
      %v1905 = vsel %vm1898, %v1872, %v1205
      %v1906 = vsel %vm1898, %v1873, %v1207
      %v1907 = vsel %vm1898, %v1874, %v1209
      %v1908 = vsel %vm1898, %v1875, %v1211
      %v1909 = vsel %vm1898, %v1876, %v1213
      %v1910 = vsel %vm1898, %v1877, %v1215
      %v1911 = vsel %vm1898, %v1878, %v1217
      %v1912 = vsel %vm1898, %v1879, %v1219
      %v1913 = vsel %vm1898, %v1880, %v1221
      %v1914 = vsel %vm1898, %v1881, %v1223
      %v1915 = vsel %vm1898, %v1882, %v1225
      %v1916 = vsel %vm1898, %v1883, %v1227
      %v1917 = vsel %vm1898, %v1884, %v1229
      %v1918 = vsel %vm1898, %v1885, %v1231
      %v1919 = vsel %vm1898, %v1886, %v1233
      %v1920 = vsel %vm1898, %v1887, %v1235
      %v1921 = vsel %vm1898, %v1888, %v1237
      %v1922 = vsel %vm1898, %v1889, %v1239
      %v1923 = vsel %vm1898, %v1890, %v1241
      %v1924 = vsel %vm1898, %v1891, %v1243
      %v1925 = vsel %vm1898, %v1892, %v1245
      %v1926 = vsel %vm1898, %v1893, %v1247
      %v1927 = vsel %vm1898, %v1894, %v1249
      %v1928 = vsel %vm1898, %v1895, %v1251
      %v1929 = vsel %vm1898, %v1896, %v1253
      %v1930 = vsel %vm1898, %v1897, %v1255
      %vm1931 = vcmask 162816
      %v1932 = vsel %vm1931, %v1899, %v1321
      %v1933 = vsel %vm1931, %v1900, %v1323
      %v1934 = vsel %vm1931, %v1901, %v1325
      %v1935 = vsel %vm1931, %v1902, %v1327
      %v1936 = vsel %vm1931, %v1903, %v1329
      %v1937 = vsel %vm1931, %v1904, %v1331
      %v1938 = vsel %vm1931, %v1905, %v1333
      %v1939 = vsel %vm1931, %v1906, %v1335
      %v1940 = vsel %vm1931, %v1907, %v1337
      %v1941 = vsel %vm1931, %v1908, %v1339
      %v1942 = vsel %vm1931, %v1909, %v1341
      %v1943 = vsel %vm1931, %v1910, %v1343
      %v1944 = vsel %vm1931, %v1911, %v1345
      %v1945 = vsel %vm1931, %v1912, %v1347
      %v1946 = vsel %vm1931, %v1913, %v1349
      %v1947 = vsel %vm1931, %v1914, %v1351
      %v1948 = vsel %vm1931, %v1915, %v1353
      %v1949 = vsel %vm1931, %v1916, %v1355
      %v1950 = vsel %vm1931, %v1917, %v1357
      %v1951 = vsel %vm1931, %v1918, %v1359
      %v1952 = vsel %vm1931, %v1919, %v1361
      %v1953 = vsel %vm1931, %v1920, %v1363
      %v1954 = vsel %vm1931, %v1921, %v1365
      %v1955 = vsel %vm1931, %v1922, %v1367
      %v1956 = vsel %vm1931, %v1923, %v1369
      %v1957 = vsel %vm1931, %v1924, %v1371
      %v1958 = vsel %vm1931, %v1925, %v1373
      %v1959 = vsel %vm1931, %v1926, %v1375
      %v1960 = vsel %vm1931, %v1927, %v1377
      %v1961 = vsel %vm1931, %v1928, %v1379
      %v1962 = vsel %vm1931, %v1929, %v1381
      %v1963 = vsel %vm1931, %v1930, %v1383
      %vm1964 = vcmask 195584
      %v1965 = vsel %vm1964, %v1932, %v1449
      %v1966 = vsel %vm1964, %v1933, %v1451
      %v1967 = vsel %vm1964, %v1934, %v1453
      %v1968 = vsel %vm1964, %v1935, %v1455
      %v1969 = vsel %vm1964, %v1936, %v1457
      %v1970 = vsel %vm1964, %v1937, %v1459
      %v1971 = vsel %vm1964, %v1938, %v1461
      %v1972 = vsel %vm1964, %v1939, %v1463
      %v1973 = vsel %vm1964, %v1940, %v1465
      %v1974 = vsel %vm1964, %v1941, %v1467
      %v1975 = vsel %vm1964, %v1942, %v1469
      %v1976 = vsel %vm1964, %v1943, %v1471
      %v1977 = vsel %vm1964, %v1944, %v1473
      %v1978 = vsel %vm1964, %v1945, %v1475
      %v1979 = vsel %vm1964, %v1946, %v1477
      %v1980 = vsel %vm1964, %v1947, %v1479
      %v1981 = vsel %vm1964, %v1948, %v1481
      %v1982 = vsel %vm1964, %v1949, %v1483
      %v1983 = vsel %vm1964, %v1950, %v1485
      %v1984 = vsel %vm1964, %v1951, %v1487
      %v1985 = vsel %vm1964, %v1952, %v1489
      %v1986 = vsel %vm1964, %v1953, %v1491
      %v1987 = vsel %vm1964, %v1954, %v1493
      %v1988 = vsel %vm1964, %v1955, %v1495
      %v1989 = vsel %vm1964, %v1956, %v1497
      %v1990 = vsel %vm1964, %v1957, %v1499
      %v1991 = vsel %vm1964, %v1958, %v1501
      %v1992 = vsel %vm1964, %v1959, %v1503
      %v1993 = vsel %vm1964, %v1960, %v1505
      %v1994 = vsel %vm1964, %v1961, %v1507
      %v1995 = vsel %vm1964, %v1962, %v1509
      %v1996 = vsel %vm1964, %v1963, %v1511
      %vm1997 = vcmask 228352
      %v1998 = vsel %vm1997, %v1965, %v1577
      %v1999 = vsel %vm1997, %v1966, %v1579
      %v2000 = vsel %vm1997, %v1967, %v1581
      %v2001 = vsel %vm1997, %v1968, %v1583
      %v2002 = vsel %vm1997, %v1969, %v1585
      %v2003 = vsel %vm1997, %v1970, %v1587
      %v2004 = vsel %vm1997, %v1971, %v1589
      %v2005 = vsel %vm1997, %v1972, %v1591
      %v2006 = vsel %vm1997, %v1973, %v1593
      %v2007 = vsel %vm1997, %v1974, %v1595
      %v2008 = vsel %vm1997, %v1975, %v1597
      %v2009 = vsel %vm1997, %v1976, %v1599
      %v2010 = vsel %vm1997, %v1977, %v1601
      %v2011 = vsel %vm1997, %v1978, %v1603
      %v2012 = vsel %vm1997, %v1979, %v1605
      %v2013 = vsel %vm1997, %v1980, %v1607
      %v2014 = vsel %vm1997, %v1981, %v1609
      %v2015 = vsel %vm1997, %v1982, %v1611
      %v2016 = vsel %vm1997, %v1983, %v1613
      %v2017 = vsel %vm1997, %v1984, %v1615
      %v2018 = vsel %vm1997, %v1985, %v1617
      %v2019 = vsel %vm1997, %v1986, %v1619
      %v2020 = vsel %vm1997, %v1987, %v1621
      %v2021 = vsel %vm1997, %v1988, %v1623
      %v2022 = vsel %vm1997, %v1989, %v1625
      %v2023 = vsel %vm1997, %v1990, %v1627
      %v2024 = vsel %vm1997, %v1991, %v1629
      %v2025 = vsel %vm1997, %v1992, %v1631
      %v2026 = vsel %vm1997, %v1993, %v1633
      %v2027 = vsel %vm1997, %v1994, %v1635
      %v2028 = vsel %vm1997, %v1995, %v1637
      %v2029 = vsel %vm1997, %v1996, %v1639
      %vm2030 = vcmask 261120
      %v2031 = vsel %vm2030, %v1998, %v1705
      %v2032 = vsel %vm2030, %v1999, %v1707
      %v2033 = vsel %vm2030, %v2000, %v1709
      %v2034 = vsel %vm2030, %v2001, %v1711
      %v2035 = vsel %vm2030, %v2002, %v1713
      %v2036 = vsel %vm2030, %v2003, %v1715
      %v2037 = vsel %vm2030, %v2004, %v1717
      %v2038 = vsel %vm2030, %v2005, %v1719
      %v2039 = vsel %vm2030, %v2006, %v1721
      %v2040 = vsel %vm2030, %v2007, %v1723
      %v2041 = vsel %vm2030, %v2008, %v1725
      %v2042 = vsel %vm2030, %v2009, %v1727
      %v2043 = vsel %vm2030, %v2010, %v1729
      %v2044 = vsel %vm2030, %v2011, %v1731
      %v2045 = vsel %vm2030, %v2012, %v1733
      %v2046 = vsel %vm2030, %v2013, %v1735
      %v2047 = vsel %vm2030, %v2014, %v1737
      %v2048 = vsel %vm2030, %v2015, %v1739
      %v2049 = vsel %vm2030, %v2016, %v1741
      %v2050 = vsel %vm2030, %v2017, %v1743
      %v2051 = vsel %vm2030, %v2018, %v1745
      %v2052 = vsel %vm2030, %v2019, %v1747
      %v2053 = vsel %vm2030, %v2020, %v1749
      %v2054 = vsel %vm2030, %v2021, %v1751
      %v2055 = vsel %vm2030, %v2022, %v1753
      %v2056 = vsel %vm2030, %v2023, %v1755
      %v2057 = vsel %vm2030, %v2024, %v1757
      %v2058 = vsel %vm2030, %v2025, %v1759
      %v2059 = vsel %vm2030, %v2026, %v1761
      %v2060 = vsel %vm2030, %v2027, %v1763
      %v2061 = vsel %vm2030, %v2028, %v1765
      %v2062 = vsel %vm2030, %v2029, %v1767
      %v2063 = vld [vmem:[%s4] sm:$0xff]
      %v2064 = vld [vmem:[%s4 + $0x8] sm:$0xff]
      %v2065 = vld [vmem:[%s4 + $0x10] sm:$0xff]
      %v2066 = vld [vmem:[%s4 + $0x18] sm:$0xff]
      %v2067 = vld [vmem:[%s4 + $0x20] sm:$0xf]
      %vm2068 = vcmask 293888
      %v2070 = vsel %vm2068, %v2031, 0
      %v2073 = vsel %vm2068, %v2032, 0
      %v2076 = vsel %vm2068, %v2033, 0
      %v2079 = vsel %vm2068, %v2034, 0
      %v2082 = vsel %vm2068, %v2035, 0
      %v2085 = vsel %vm2068, %v2036, 0
      %v2088 = vsel %vm2068, %v2037, 0
      %v2091 = vsel %vm2068, %v2038, 0
      %v2094 = vsel %vm2068, %v2039, 0
      %v2097 = vsel %vm2068, %v2040, 0
      %v2100 = vsel %vm2068, %v2041, 0
      %v2103 = vsel %vm2068, %v2042, 0
      %v2106 = vsel %vm2068, %v2043, 0
      %v2109 = vsel %vm2068, %v2044, 0
      %v2112 = vsel %vm2068, %v2045, 0
      %v2115 = vsel %vm2068, %v2046, 0
      %v2118 = vsel %vm2068, %v2047, 0
      %v2121 = vsel %vm2068, %v2048, 0
      %v2124 = vsel %vm2068, %v2049, 0
      %v2127 = vsel %vm2068, %v2050, 0
      %v2130 = vsel %vm2068, %v2051, 0
      %v2133 = vsel %vm2068, %v2052, 0
      %v2136 = vsel %vm2068, %v2053, 0
      %v2139 = vsel %vm2068, %v2054, 0
      %v2142 = vsel %vm2068, %v2055, 0
      %v2145 = vsel %vm2068, %v2056, 0
      %v2148 = vsel %vm2068, %v2057, 0
      %v2151 = vsel %vm2068, %v2058, 0
      %v2154 = vsel %vm2068, %v2059, 0
      %v2157 = vsel %vm2068, %v2060, 0
      %v2160 = vsel %vm2068, %v2061, 0
      %v2163 = vsel %vm2068, %v2062, 0
      %vm2165 = vcmask 1043456
      %v2167 = vsel %vm2165, %v2067, 0
      %2169 = vmatprep.subr.mxu0 0.0
      %2170 = vmatpush1.msra.mxu0 %v2063
      %2171 = vmatprep.subr.mxu0 0.0
      %2172 = vmatpush1.msra.mxu0 %v2064
      %2173 = vmatprep.subr.mxu0 0.0
      %2174 = vmatpush1.msra.mxu0 %v2065
      %2175 = vmatprep.subr.mxu0 0.0
      %2176 = vmatpush1.msra.mxu0 %v2066
      %2177 = vmatprep.subr.mxu0 0.0
      %2178 = vmatpush1.msra.mxu0 %v2167
      %2179 = vmatprep.subr.mxu0 0.0
      %2180 = vmatpush1.msra.mxu0 0.0
      %2181 = vmatprep.subr.mxu0 0.0
      %2182 = vmatpush1.msra.mxu0 0.0
      %2183 = vmatprep.subr.mxu0 0.0
      %2184 = vmatpush1.msra.mxu0 0.0
      %2185 = vmatprep.subr.mxu0 0.0
      %2186 = vmatpush1.msra.mxu0 0.0
      %2187 = vmatprep.subr.mxu0 0.0
      %2188 = vmatpush1.msra.mxu0 0.0
      %2189 = vmatprep.subr.mxu0 0.0
      %2190 = vmatpush1.msra.mxu0 0.0
      %2191 = vmatprep.subr.mxu0 0.0
      %2192 = vmatpush1.msra.mxu0 0.0
      %2193 = vmatprep.subr.mxu0 0.0
      %2194 = vmatpush1.msra.mxu0 0.0
      %2195 = vmatprep.subr.mxu0 0.0
      %2196 = vmatpush1.msra.mxu0 0.0
      %2197 = vmatprep.subr.mxu0 0.0
      %2198 = vmatpush1.msra.mxu0 0.0
      %2199 = vmatprep.subr.mxu0 0.0
      %2200 = vmatpush1.msra.mxu0 0.0
      %2201 = vmatprep.subr.mxu0 0.0
      %2202 = vmatpush1.msra.mxu0 0.0
      %2203 = vmatprep.subr.mxu0 0.0
      %2204 = vmatpush1.msra.mxu0 0.0
      %2205 = vmatprep.subr.mxu0 0.0
      %2206 = vmatpush1.msra.mxu0 0.0
      %2207 = vmatprep.subr.mxu0 0.0
      %2208 = vmatpush1.msra.mxu0 0.0
      %2209 = vmatprep.subr.mxu0 0.0
      %2210 = vmatpush1.msra.mxu0 0.0
      %2211 = vmatprep.subr.mxu0 0.0
      %2212 = vmatpush1.msra.mxu0 0.0
      %2213 = vmatprep.subr.mxu0 0.0
      %2214 = vmatpush1.msra.mxu0 0.0
      %2215 = vmatprep.subr.mxu0 0.0
      %2216 = vmatpush1.msra.mxu0 0.0
      %2217 = vmatprep.subr.mxu0 0.0
      %2218 = vmatpush1.msra.mxu0 0.0
      %2219 = vmatprep.subr.mxu0 0.0
      %2220 = vmatpush1.msra.mxu0 0.0
      %2221 = vmatprep.subr.mxu0 0.0
      %2222 = vmatpush1.msra.mxu0 0.0
      %2223 = vmatprep.subr.mxu0 0.0
      %2224 = vmatpush1.msra.mxu0 0.0
      %2225 = vmatprep.subr.mxu0 0.0
      %2226 = vmatpush1.msra.mxu0 0.0
      %2227 = vmatprep.subr.mxu0 0.0
      %2228 = vmatpush1.msra.mxu0 0.0
      %2229 = vmatprep.subr.mxu0 0.0
      %2230 = vmatpush1.msra.mxu0 0.0
      %2231 = vmatprep.subr.mxu0 0.0
      %2232 = vmatpush1.msra.mxu0 0.0
      %2233 = vmatprep.mubr.f32.mxu0 0.0
      %2234 = vmatmul.mubr.f32.gmra.mrb[0].mxu0 %v2070
      %v2235 = vpop.f32.mrb[0].mxu0
      %v2236 = vadd.f32 0.0, %v2235
      %v2237 = vpop.f32.mrb[0].mxu0
      %2238 = vmatprep.mubr.f32.mxu0 0.0
      %2239 = vmatmul.mubr.f32.gmra.mrb[0].mxu0 %v2073
      %v2240 = vpop.f32.mrb[0].mxu0
      %v2241 = vadd.f32 0.0, %v2240
      %v2242 = vpop.f32.mrb[0].mxu0
      %2243 = vmatprep.mubr.f32.mxu0 0.0
      %2244 = vmatmul.mubr.f32.gmra.mrb[0].mxu0 %v2076
      %v2245 = vpop.f32.mrb[0].mxu0
      %v2246 = vadd.f32 0.0, %v2245
      %v2247 = vpop.f32.mrb[0].mxu0
      %2248 = vmatprep.mubr.f32.mxu0 0.0
      %2249 = vmatmul.mubr.f32.gmra.mrb[0].mxu0 %v2079
      %v2250 = vpop.f32.mrb[0].mxu0
      %v2251 = vadd.f32 0.0, %v2250
      %v2252 = vpop.f32.mrb[0].mxu0
      %2253 = vmatprep.mubr.f32.mxu0 0.0
      %2254 = vmatmul.mubr.f32.gmra.mrb[0].mxu0 %v2082
      %v2255 = vpop.f32.mrb[0].mxu0
      %v2256 = vadd.f32 0.0, %v2255
      %v2257 = vpop.f32.mrb[0].mxu0
      %2258 = vmatprep.mubr.f32.mxu0 0.0
      %2259 = vmatmul.mubr.f32.gmra.mrb[0].mxu0 %v2085
      %v2260 = vpop.f32.mrb[0].mxu0
      %v2261 = vadd.f32 0.0, %v2260
      %v2262 = vpop.f32.mrb[0].mxu0
      %2263 = vmatprep.mubr.f32.mxu0 0.0
      %2264 = vmatmul.mubr.f32.gmra.mrb[0].mxu0 %v2088
      %v2265 = vpop.f32.mrb[0].mxu0
      %v2266 = vadd.f32 0.0, %v2265
      %v2267 = vpop.f32.mrb[0].mxu0
      %2268 = vmatprep.mubr.f32.mxu0 0.0
      %2269 = vmatmul.mubr.f32.gmra.mrb[0].mxu0 %v2091
      %v2270 = vpop.f32.mrb[0].mxu0
      %v2271 = vadd.f32 0.0, %v2270
      %v2272 = vpop.f32.mrb[0].mxu0
      %2273 = vmatprep.mubr.f32.mxu0 0.0
      %2274 = vmatmul.mubr.f32.gmra.mrb[0].mxu0 %v2094
      %v2275 = vpop.f32.mrb[0].mxu0
      %v2276 = vadd.f32 0.0, %v2275
      %v2277 = vpop.f32.mrb[0].mxu0
      %2278 = vmatprep.mubr.f32.mxu0 0.0
      %2279 = vmatmul.mubr.f32.gmra.mrb[0].mxu0 %v2097
      %v2280 = vpop.f32.mrb[0].mxu0
      %v2281 = vadd.f32 0.0, %v2280
      %v2282 = vpop.f32.mrb[0].mxu0
      %2283 = vmatprep.mubr.f32.mxu0 0.0
      %2284 = vmatmul.mubr.f32.gmra.mrb[0].mxu0 %v2100
      %v2285 = vpop.f32.mrb[0].mxu0
      %v2286 = vadd.f32 0.0, %v2285
      %v2287 = vpop.f32.mrb[0].mxu0
      %2288 = vmatprep.mubr.f32.mxu0 0.0
      %2289 = vmatmul.mubr.f32.gmra.mrb[0].mxu0 %v2103
      %v2290 = vpop.f32.mrb[0].mxu0
      %v2291 = vadd.f32 0.0, %v2290
      %v2292 = vpop.f32.mrb[0].mxu0
      %2293 = vmatprep.mubr.f32.mxu0 0.0
      %2294 = vmatmul.mubr.f32.gmra.mrb[0].mxu0 %v2106
      %v2295 = vpop.f32.mrb[0].mxu0
      %v2296 = vadd.f32 0.0, %v2295
      %v2297 = vpop.f32.mrb[0].mxu0
      %2298 = vmatprep.mubr.f32.mxu0 0.0
      %2299 = vmatmul.mubr.f32.gmra.mrb[0].mxu0 %v2109
      %v2300 = vpop.f32.mrb[0].mxu0
      %v2301 = vadd.f32 0.0, %v2300
      %v2302 = vpop.f32.mrb[0].mxu0
      %2303 = vmatprep.mubr.f32.mxu0 0.0
      %2304 = vmatmul.mubr.f32.gmra.mrb[0].mxu0 %v2112
      %v2305 = vpop.f32.mrb[0].mxu0
      %v2306 = vadd.f32 0.0, %v2305
      %v2307 = vpop.f32.mrb[0].mxu0
      %2308 = vmatprep.mubr.f32.mxu0 0.0
      %2309 = vmatmul.mubr.f32.gmra.mrb[0].mxu0 %v2115
      %v2310 = vpop.f32.mrb[0].mxu0
      %v2311 = vadd.f32 0.0, %v2310
      %v2312 = vpop.f32.mrb[0].mxu0
      %2313 = vmatprep.mubr.f32.mxu0 0.0
      %2314 = vmatmul.mubr.f32.gmra.mrb[0].mxu0 %v2118
      %v2315 = vpop.f32.mrb[0].mxu0
      %v2316 = vadd.f32 0.0, %v2315
      %v2317 = vpop.f32.mrb[0].mxu0
      %2318 = vmatprep.mubr.f32.mxu0 0.0
      %2319 = vmatmul.mubr.f32.gmra.mrb[0].mxu0 %v2121
      %v2320 = vpop.f32.mrb[0].mxu0
      %v2321 = vadd.f32 0.0, %v2320
      %v2322 = vpop.f32.mrb[0].mxu0
      %2323 = vmatprep.mubr.f32.mxu0 0.0
      %2324 = vmatmul.mubr.f32.gmra.mrb[0].mxu0 %v2124
      %v2325 = vpop.f32.mrb[0].mxu0
      %v2326 = vadd.f32 0.0, %v2325
      %v2327 = vpop.f32.mrb[0].mxu0
      %2328 = vmatprep.mubr.f32.mxu0 0.0
      %2329 = vmatmul.mubr.f32.gmra.mrb[0].mxu0 %v2127
      %v2330 = vpop.f32.mrb[0].mxu0
      %v2331 = vadd.f32 0.0, %v2330
      %v2332 = vpop.f32.mrb[0].mxu0
      %2333 = vmatprep.mubr.f32.mxu0 0.0
      %2334 = vmatmul.mubr.f32.gmra.mrb[0].mxu0 %v2130
      %v2335 = vpop.f32.mrb[0].mxu0
      %v2336 = vadd.f32 0.0, %v2335
      %v2337 = vpop.f32.mrb[0].mxu0
      %2338 = vmatprep.mubr.f32.mxu0 0.0
      %2339 = vmatmul.mubr.f32.gmra.mrb[0].mxu0 %v2133
      %v2340 = vpop.f32.mrb[0].mxu0
      %v2341 = vadd.f32 0.0, %v2340
      %v2342 = vpop.f32.mrb[0].mxu0
      %2343 = vmatprep.mubr.f32.mxu0 0.0
      %2344 = vmatmul.mubr.f32.gmra.mrb[0].mxu0 %v2136
      %v2345 = vpop.f32.mrb[0].mxu0
      %v2346 = vadd.f32 0.0, %v2345
      %v2347 = vpop.f32.mrb[0].mxu0
      %2348 = vmatprep.mubr.f32.mxu0 0.0
      %2349 = vmatmul.mubr.f32.gmra.mrb[0].mxu0 %v2139
      %v2350 = vpop.f32.mrb[0].mxu0
      %v2351 = vadd.f32 0.0, %v2350
      %v2352 = vpop.f32.mrb[0].mxu0
      %2353 = vmatprep.mubr.f32.mxu0 0.0
      %2354 = vmatmul.mubr.f32.gmra.mrb[0].mxu0 %v2142
      %v2355 = vpop.f32.mrb[0].mxu0
      %v2356 = vadd.f32 0.0, %v2355
      %v2357 = vpop.f32.mrb[0].mxu0
      %2358 = vmatprep.mubr.f32.mxu0 0.0
      %2359 = vmatmul.mubr.f32.gmra.mrb[0].mxu0 %v2145
      %v2360 = vpop.f32.mrb[0].mxu0
      %v2361 = vadd.f32 0.0, %v2360
      %v2362 = vpop.f32.mrb[0].mxu0
      %2363 = vmatprep.mubr.f32.mxu0 0.0
      %2364 = vmatmul.mubr.f32.gmra.mrb[0].mxu0 %v2148
      %v2365 = vpop.f32.mrb[0].mxu0
      %v2366 = vadd.f32 0.0, %v2365
      %v2367 = vpop.f32.mrb[0].mxu0
      %2368 = vmatprep.mubr.f32.mxu0 0.0
      %2369 = vmatmul.mubr.f32.gmra.mrb[0].mxu0 %v2151
      %v2370 = vpop.f32.mrb[0].mxu0
      %v2371 = vadd.f32 0.0, %v2370
      %v2372 = vpop.f32.mrb[0].mxu0
      %2373 = vmatprep.mubr.f32.mxu0 0.0
      %2374 = vmatmul.mubr.f32.gmra.mrb[0].mxu0 %v2154
      %v2375 = vpop.f32.mrb[0].mxu0
      %v2376 = vadd.f32 0.0, %v2375
      %v2377 = vpop.f32.mrb[0].mxu0
      %2378 = vmatprep.mubr.f32.mxu0 0.0
      %2379 = vmatmul.mubr.f32.gmra.mrb[0].mxu0 %v2157
      %v2380 = vpop.f32.mrb[0].mxu0
      %v2381 = vadd.f32 0.0, %v2380
      %v2382 = vpop.f32.mrb[0].mxu0
      %2383 = vmatprep.mubr.f32.mxu0 0.0
      %2384 = vmatmul.mubr.f32.gmra.mrb[0].mxu0 %v2160
      %v2385 = vpop.f32.mrb[0].mxu0
      %v2386 = vadd.f32 0.0, %v2385
      %v2387 = vpop.f32.mrb[0].mxu0
      %2388 = vmatprep.mubr.f32.mxu0 0.0
      %2389 = vmatmul.mubr.f32.gmra.mrb[0].mxu0 %v2163
      %v2390 = vpop.f32.mrb[0].mxu0
      %v2391 = vadd.f32 0.0, %v2390
      %v2392 = vpop.f32.mrb[0].mxu0
      %2393 = vdwg.mxu0
      %v2394 = vstv %s363
      %v2395 = vmul.f32 %v2236, %v2394
      %v2396 = vmul.f32 %v2241, %v2394
      %v2397 = vmul.f32 %v2246, %v2394
      %v2398 = vmul.f32 %v2251, %v2394
      %v2399 = vmul.f32 %v2256, %v2394
      %v2400 = vmul.f32 %v2261, %v2394
      %v2401 = vmul.f32 %v2266, %v2394
      %v2402 = vmul.f32 %v2271, %v2394
      %v2403 = vmul.f32 %v2276, %v2394
      %v2404 = vmul.f32 %v2281, %v2394
      %v2405 = vmul.f32 %v2286, %v2394
      %v2406 = vmul.f32 %v2291, %v2394
      %v2407 = vmul.f32 %v2296, %v2394
      %v2408 = vmul.f32 %v2301, %v2394
      %v2409 = vmul.f32 %v2306, %v2394
      %v2410 = vmul.f32 %v2311, %v2394
      %v2411 = vmul.f32 %v2316, %v2394
      %v2412 = vmul.f32 %v2321, %v2394
      %v2413 = vmul.f32 %v2326, %v2394
      %v2414 = vmul.f32 %v2331, %v2394
      %v2415 = vmul.f32 %v2336, %v2394
      %v2416 = vmul.f32 %v2341, %v2394
      %v2417 = vmul.f32 %v2346, %v2394
      %v2418 = vmul.f32 %v2351, %v2394
      %v2419 = vmul.f32 %v2356, %v2394
      %v2420 = vmul.f32 %v2361, %v2394
      %v2421 = vmul.f32 %v2366, %v2394
      %v2422 = vmul.f32 %v2371, %v2394
      %v2423 = vmul.f32 %v2376, %v2394
      %v2424 = vmul.f32 %v2381, %v2394
      %v2425 = vmul.f32 %v2386, %v2394
      %v2426 = vmul.f32 %v2391, %v2394
      %v2427 = vld [vmem:[%s5] sm:$0x1]
      %v2429 = vlaneseq
      %v2430 = vshrl.u32 %v2429, 7
      %v2431 = vsub.s32 0, %v2430
      %v2432 = vrot.slane %v2427, %v2431
      %v2434 = vadd.f32 %v2395, %v2432
      %v2435 = vadd.f32 %v2396, %v2432
      %v2436 = vadd.f32 %v2397, %v2432
      %v2437 = vadd.f32 %v2398, %v2432
      %v2438 = vadd.f32 %v2399, %v2432
      %v2439 = vadd.f32 %v2400, %v2432
      %v2440 = vadd.f32 %v2401, %v2432
      %v2441 = vadd.f32 %v2402, %v2432
      %v2442 = vadd.f32 %v2403, %v2432
      %v2443 = vadd.f32 %v2404, %v2432
      %v2444 = vadd.f32 %v2405, %v2432
      %v2445 = vadd.f32 %v2406, %v2432
      %v2446 = vadd.f32 %v2407, %v2432
      %v2447 = vadd.f32 %v2408, %v2432
      %v2448 = vadd.f32 %v2409, %v2432
      %v2449 = vadd.f32 %v2410, %v2432
      %v2450 = vadd.f32 %v2411, %v2432
      %v2451 = vadd.f32 %v2412, %v2432
      %v2452 = vadd.f32 %v2413, %v2432
      %v2453 = vadd.f32 %v2414, %v2432
      %v2454 = vadd.f32 %v2415, %v2432
      %v2455 = vadd.f32 %v2416, %v2432
      %v2456 = vadd.f32 %v2417, %v2432
      %v2457 = vadd.f32 %v2418, %v2432
      %v2458 = vadd.f32 %v2419, %v2432
      %v2459 = vadd.f32 %v2420, %v2432
      %v2460 = vadd.f32 %v2421, %v2432
      %v2461 = vadd.f32 %v2422, %v2432
      %v2462 = vadd.f32 %v2423, %v2432
      %v2463 = vadd.f32 %v2424, %v2432
      %v2464 = vadd.f32 %v2425, %v2432
      %v2465 = vadd.f32 %v2426, %v2432
      %v2466 = vmax.f32 %v2434, 0.0
      %v2467 = vmax.f32 %v2435, 0.0
      %v2468 = vmax.f32 %v2436, 0.0
      %v2469 = vmax.f32 %v2437, 0.0
      %v2470 = vmax.f32 %v2438, 0.0
      %v2471 = vmax.f32 %v2439, 0.0
      %v2472 = vmax.f32 %v2440, 0.0
      %v2473 = vmax.f32 %v2441, 0.0
      %v2474 = vmax.f32 %v2442, 0.0
      %v2475 = vmax.f32 %v2443, 0.0
      %v2476 = vmax.f32 %v2444, 0.0
      %v2477 = vmax.f32 %v2445, 0.0
      %v2478 = vmax.f32 %v2446, 0.0
      %v2479 = vmax.f32 %v2447, 0.0
      %v2480 = vmax.f32 %v2448, 0.0
      %v2481 = vmax.f32 %v2449, 0.0
      %v2482 = vmax.f32 %v2450, 0.0
      %v2483 = vmax.f32 %v2451, 0.0
      %v2484 = vmax.f32 %v2452, 0.0
      %v2485 = vmax.f32 %v2453, 0.0
      %v2486 = vmax.f32 %v2454, 0.0
      %v2487 = vmax.f32 %v2455, 0.0
      %v2488 = vmax.f32 %v2456, 0.0
      %v2489 = vmax.f32 %v2457, 0.0
      %v2490 = vmax.f32 %v2458, 0.0
      %v2491 = vmax.f32 %v2459, 0.0
      %v2492 = vmax.f32 %v2460, 0.0
      %v2493 = vmax.f32 %v2461, 0.0
      %v2494 = vmax.f32 %v2462, 0.0
      %v2495 = vmax.f32 %v2463, 0.0
      %v2496 = vmax.f32 %v2464, 0.0
      %v2497 = vmax.f32 %v2465, 0.0
      %2498 = vst.msk [vmem:[#allocation3] sm:$0xff] %vm1832, 0.0
      %2499 = vst.msk [vmem:[#allocation3 + $0x8] sm:$0xff] %vm1832, 0.0
      %vm2500 = vcmask 58368
      %2501 = vst.msk [vmem:[#allocation3 + $0x10] sm:$0x3] %vm2500, 0.0
      %2502 = vst.msk [vmem:[#allocation3 + $0x18] sm:$0xff] %vm1832, 0.0
      %2503 = vst.msk [vmem:[#allocation3 + $0x20] sm:$0xff] %vm1832, 0.0
      %2504 = vst.msk [vmem:[#allocation3 + $0x28] sm:$0x3] %vm2500, 0.0
      %2505 = vst.msk [vmem:[#allocation3 + $0x30] sm:$0xff] %vm1832, 0.0
      %2506 = vst.msk [vmem:[#allocation3 + $0x38] sm:$0xff] %vm1832, 0.0
      %2507 = vst.msk [vmem:[#allocation3 + $0x40] sm:$0x3] %vm2500, 0.0
      %2508 = vst.msk [vmem:[#allocation3 + $0x48] sm:$0xff] %vm1832, 0.0
      %2509 = vst.msk [vmem:[#allocation3 + $0x50] sm:$0xff] %vm1832, 0.0
      %2510 = vst.msk [vmem:[#allocation3 + $0x58] sm:$0x3] %vm2500, 0.0
      %2511 = vst.msk [vmem:[#allocation3 + $0x60] sm:$0xff] %vm1832, 0.0
      %2512 = vst.msk [vmem:[#allocation3 + $0x68] sm:$0xff] %vm1832, 0.0
      %2513 = vst.msk [vmem:[#allocation3 + $0x70] sm:$0x3] %vm2500, 0.0
      %2514 = vst.msk [vmem:[#allocation3 + $0x78] sm:$0xff] %vm1832, 0.0
      %2515 = vst.msk [vmem:[#allocation3 + $0x80] sm:$0xff] %vm1832, 0.0
      %2516 = vst.msk [vmem:[#allocation3 + $0x88] sm:$0x3] %vm2500, 0.0
      %2517 = vst.msk [vmem:[#allocation3 + $0x90] sm:$0xff] %vm1832, 0.0
      %2518 = vst.msk [vmem:[#allocation3 + $0x98] sm:$0xff] %vm1832, 0.0
      %2519 = vst.msk [vmem:[#allocation3 + $0xa0] sm:$0x3] %vm2500, 0.0
      %2520 = vst.msk [vmem:[#allocation3 + $0xa8] sm:$0xff] %vm1832, 0.0
      %2521 = vst.msk [vmem:[#allocation3 + $0xb0] sm:$0xff] %vm1832, 0.0
      %2522 = vst.msk [vmem:[#allocation3 + $0xb8] sm:$0x3] %vm2500, 0.0
      %2523 = vst.msk [vmem:[#allocation3 + $0xc0] sm:$0xff] %vm1832, 0.0
      %2524 = vst.msk [vmem:[#allocation3 + $0xc8] sm:$0xff] %vm1832, 0.0
      %2525 = vst.msk [vmem:[#allocation3 + $0xd0] sm:$0x3] %vm2500, 0.0
      %2526 = vst.msk [vmem:[#allocation3 + $0xd8] sm:$0xff] %vm1832, 0.0
      %2527 = vst.msk [vmem:[#allocation3 + $0xe0] sm:$0xff] %vm1832, 0.0
      %2528 = vst.msk [vmem:[#allocation3 + $0xe8] sm:$0x3] %vm2500, 0.0
      %2529 = vst.msk [vmem:[#allocation3 + $0xf0] sm:$0xff] %vm1832, 0.0
      %2530 = vst.msk [vmem:[#allocation3 + $0xf8] sm:$0xff] %vm1832, 0.0
      %2531 = vst.msk [vmem:[#allocation3 + $0x100] sm:$0x3] %vm2500, 0.0
      %2532 = vst.msk [vmem:[#allocation3 + $0x108] sm:$0xff] %vm1832, 0.0
      %2533 = vst.msk [vmem:[#allocation3 + $0x110] sm:$0xff] %vm1832, 0.0
      %2534 = vst.msk [vmem:[#allocation3 + $0x118] sm:$0x3] %vm2500, 0.0
      %2535 = vst.msk [vmem:[#allocation3 + $0x120] sm:$0xff] %vm1832, 0.0
      %2536 = vst.msk [vmem:[#allocation3 + $0x128] sm:$0xff] %vm1832, 0.0
      %2537 = vst.msk [vmem:[#allocation3 + $0x130] sm:$0x3] %vm2500, 0.0
      %2538 = vst.msk [vmem:[#allocation3 + $0x138] sm:$0xff] %vm1832, 0.0
      %2539 = vst.msk [vmem:[#allocation3 + $0x140] sm:$0xff] %vm1832, 0.0
      %2540 = vst.msk [vmem:[#allocation3 + $0x148] sm:$0x3] %vm2500, 0.0
      %2541 = vst.msk [vmem:[#allocation3 + $0x150] sm:$0xff] %vm1832, 0.0
      %2542 = vst.msk [vmem:[#allocation3 + $0x158] sm:$0xff] %vm1832, 0.0
      %2543 = vst.msk [vmem:[#allocation3 + $0x160] sm:$0x3] %vm2500, 0.0
      %2544 = vst.msk [vmem:[#allocation3 + $0x168] sm:$0xff] %vm1832, 0.0
      %2545 = vst.msk [vmem:[#allocation3 + $0x170] sm:$0xff] %vm1832, 0.0
      %2546 = vst.msk [vmem:[#allocation3 + $0x178] sm:$0x3] %vm2500, 0.0
      %2547 = vst.msk [vmem:[#allocation3 + $0x180] sm:$0xff] %vm1832, 0.0
      %2548 = vst.msk [vmem:[#allocation3 + $0x188] sm:$0xff] %vm1832, 0.0
      %2549 = vst.msk [vmem:[#allocation3 + $0x190] sm:$0x3] %vm2500, 0.0
      %2550 = vst.msk [vmem:[#allocation3 + $0x198] sm:$0xff] %vm1832, 0.0
      %2551 = vst.msk [vmem:[#allocation3 + $0x1a0] sm:$0xff] %vm1832, 0.0
      %2552 = vst.msk [vmem:[#allocation3 + $0x1a8] sm:$0x3] %vm2500, 0.0
      %s2553 = scalar_lea.vmem [#allocation3], 24
      %2554 = vst.msk [vmem:[%s2553 + $0x1] sm:$0xff] %vm1832, %v2466
      %2555 = vst.msk [vmem:[%s2553 + $0x9] sm:$0xff] %vm1832, %v2467
      %2556 = vst.msk [vmem:[%s2553 + $0x19] sm:$0xff] %vm1832, %v2468
      %2557 = vst.msk [vmem:[%s2553 + $0x21] sm:$0xff] %vm1832, %v2469
      %2558 = vst.msk [vmem:[%s2553 + $0x31] sm:$0xff] %vm1832, %v2470
      %2559 = vst.msk [vmem:[%s2553 + $0x39] sm:$0xff] %vm1832, %v2471
      %2560 = vst.msk [vmem:[%s2553 + $0x49] sm:$0xff] %vm1832, %v2472
      %2561 = vst.msk [vmem:[%s2553 + $0x51] sm:$0xff] %vm1832, %v2473
      %2562 = vst.msk [vmem:[%s2553 + $0x61] sm:$0xff] %vm1832, %v2474
      %2563 = vst.msk [vmem:[%s2553 + $0x69] sm:$0xff] %vm1832, %v2475
      %2564 = vst.msk [vmem:[%s2553 + $0x79] sm:$0xff] %vm1832, %v2476
      %2565 = vst.msk [vmem:[%s2553 + $0x81] sm:$0xff] %vm1832, %v2477
      %2566 = vst.msk [vmem:[%s2553 + $0x91] sm:$0xff] %vm1832, %v2478
      %2567 = vst.msk [vmem:[%s2553 + $0x99] sm:$0xff] %vm1832, %v2479
      %2568 = vst.msk [vmem:[%s2553 + $0xa9] sm:$0xff] %vm1832, %v2480
      %2569 = vst.msk [vmem:[%s2553 + $0xb1] sm:$0xff] %vm1832, %v2481
      %2570 = vst.msk [vmem:[%s2553 + $0xc1] sm:$0xff] %vm1832, %v2482
      %2571 = vst.msk [vmem:[%s2553 + $0xc9] sm:$0xff] %vm1832, %v2483
      %2572 = vst.msk [vmem:[%s2553 + $0xd9] sm:$0xff] %vm1832, %v2484
      %2573 = vst.msk [vmem:[%s2553 + $0xe1] sm:$0xff] %vm1832, %v2485
      %2574 = vst.msk [vmem:[%s2553 + $0xf1] sm:$0xff] %vm1832, %v2486
      %2575 = vst.msk [vmem:[%s2553 + $0xf9] sm:$0xff] %vm1832, %v2487
      %2576 = vst.msk [vmem:[%s2553 + $0x109] sm:$0xff] %vm1832, %v2488
      %2577 = vst.msk [vmem:[%s2553 + $0x111] sm:$0xff] %vm1832, %v2489
      %2578 = vst.msk [vmem:[%s2553 + $0x121] sm:$0xff] %vm1832, %v2490
      %2579 = vst.msk [vmem:[%s2553 + $0x129] sm:$0xff] %vm1832, %v2491
      %2580 = vst.msk [vmem:[%s2553 + $0x139] sm:$0xff] %vm1832, %v2492
      %2581 = vst.msk [vmem:[%s2553 + $0x141] sm:$0xff] %vm1832, %v2493
      %2582 = vst.msk [vmem:[%s2553 + $0x151] sm:$0xff] %vm1832, %v2494
      %2583 = vst.msk [vmem:[%s2553 + $0x159] sm:$0xff] %vm1832, %v2495
      %2584 = vst.msk [vmem:[%s2553 + $0x169] sm:$0xff] %vm1832, %v2496
      %2585 = vst.msk [vmem:[%s2553 + $0x171] sm:$0xff] %vm1832, %v2497
      %v2586 = vld [vmem:[#allocation3] sm:$0xff]
      %v2587 = vld [vmem:[#allocation3 + $0x8] sm:$0xff]
      %v2588 = vld [vmem:[#allocation3 + $0x18] sm:$0xff]
      %v2589 = vld [vmem:[#allocation3 + $0x20] sm:$0xff]
      %v2590 = vld [vmem:[#allocation3 + $0x30] sm:$0xff]
      %v2591 = vld [vmem:[#allocation3 + $0x38] sm:$0xff]
      %v2592 = vld [vmem:[#allocation3 + $0x48] sm:$0xff]
      %v2593 = vld [vmem:[#allocation3 + $0x50] sm:$0xff]
      %v2594 = vld [vmem:[#allocation3 + $0x60] sm:$0xff]
      %v2595 = vld [vmem:[#allocation3 + $0x68] sm:$0xff]
      %v2596 = vld [vmem:[#allocation3 + $0x78] sm:$0xff]
      %v2597 = vld [vmem:[#allocation3 + $0x80] sm:$0xff]
      %v2598 = vld [vmem:[#allocation3 + $0x90] sm:$0xff]
      %v2599 = vld [vmem:[#allocation3 + $0x98] sm:$0xff]
      %v2600 = vld [vmem:[#allocation3 + $0xa8] sm:$0xff]
      %v2601 = vld [vmem:[#allocation3 + $0xb0] sm:$0xff]
      %v2602 = vld [vmem:[#allocation3 + $0xc0] sm:$0xff]
      %v2603 = vld [vmem:[#allocation3 + $0xc8] sm:$0xff]
      %v2604 = vld [vmem:[#allocation3 + $0xd8] sm:$0xff]
      %v2605 = vld [vmem:[#allocation3 + $0xe0] sm:$0xff]
      %v2606 = vld [vmem:[#allocation3 + $0xf0] sm:$0xff]
      %v2607 = vld [vmem:[#allocation3 + $0xf8] sm:$0xff]
      %v2608 = vld [vmem:[#allocation3 + $0x108] sm:$0xff]
      %v2609 = vld [vmem:[#allocation3 + $0x110] sm:$0xff]
      %v2610 = vld [vmem:[#allocation3 + $0x120] sm:$0xff]
      %v2611 = vld [vmem:[#allocation3 + $0x128] sm:$0xff]
      %v2612 = vld [vmem:[#allocation3 + $0x138] sm:$0xff]
      %v2613 = vld [vmem:[#allocation3 + $0x140] sm:$0xff]
      %v2614 = vld [vmem:[#allocation3 + $0x150] sm:$0xff]
      %v2615 = vld [vmem:[#allocation3 + $0x158] sm:$0xff]
      %v2616 = vld [vmem:[#allocation3 + $0x168] sm:$0xff]
      %v2617 = vld [vmem:[#allocation3 + $0x170] sm:$0xff]
      %v2618 = vld [vmem:[#allocation3 + $0x1] sm:$0xff]
      %v2619 = vld [vmem:[#allocation3 + $0x9] sm:$0xff]
      %v2620 = vld [vmem:[#allocation3 + $0x19] sm:$0xff]
      %v2621 = vld [vmem:[#allocation3 + $0x21] sm:$0xff]
      %v2622 = vld [vmem:[#allocation3 + $0x31] sm:$0xff]
      %v2623 = vld [vmem:[#allocation3 + $0x39] sm:$0xff]
      %v2624 = vld [vmem:[#allocation3 + $0x49] sm:$0xff]
      %v2625 = vld [vmem:[#allocation3 + $0x51] sm:$0xff]
      %v2626 = vld [vmem:[#allocation3 + $0x61] sm:$0xff]
      %v2627 = vld [vmem:[#allocation3 + $0x69] sm:$0xff]
      %v2628 = vld [vmem:[#allocation3 + $0x79] sm:$0xff]
      %v2629 = vld [vmem:[#allocation3 + $0x81] sm:$0xff]
      %v2630 = vld [vmem:[#allocation3 + $0x91] sm:$0xff]
      %v2631 = vld [vmem:[#allocation3 + $0x99] sm:$0xff]
      %v2632 = vld [vmem:[#allocation3 + $0xa9] sm:$0xff]
      %v2633 = vld [vmem:[#allocation3 + $0xb1] sm:$0xff]
      %v2634 = vld [vmem:[#allocation3 + $0xc1] sm:$0xff]
      %v2635 = vld [vmem:[#allocation3 + $0xc9] sm:$0xff]
      %v2636 = vld [vmem:[#allocation3 + $0xd9] sm:$0xff]
      %v2637 = vld [vmem:[#allocation3 + $0xe1] sm:$0xff]
      %v2638 = vld [vmem:[#allocation3 + $0xf1] sm:$0xff]
      %v2639 = vld [vmem:[#allocation3 + $0xf9] sm:$0xff]
      %v2640 = vld [vmem:[#allocation3 + $0x109] sm:$0xff]
      %v2641 = vld [vmem:[#allocation3 + $0x111] sm:$0xff]
      %v2642 = vld [vmem:[#allocation3 + $0x121] sm:$0xff]
      %v2643 = vld [vmem:[#allocation3 + $0x129] sm:$0xff]
      %v2644 = vld [vmem:[#allocation3 + $0x139] sm:$0xff]
      %v2645 = vld [vmem:[#allocation3 + $0x141] sm:$0xff]
      %v2646 = vld [vmem:[#allocation3 + $0x151] sm:$0xff]
      %v2647 = vld [vmem:[#allocation3 + $0x159] sm:$0xff]
      %v2648 = vld [vmem:[#allocation3 + $0x169] sm:$0xff]
      %v2649 = vld [vmem:[#allocation3 + $0x171] sm:$0xff]
      %v2650 = vld [vmem:[#allocation3 + $0x2] sm:$0xff]
      %v2651 = vld [vmem:[#allocation3 + $0xa] sm:$0xff]
      %v2652 = vld [vmem:[#allocation3 + $0x1a] sm:$0xff]
      %v2653 = vld [vmem:[#allocation3 + $0x22] sm:$0xff]
      %v2654 = vld [vmem:[#allocation3 + $0x32] sm:$0xff]
      %v2655 = vld [vmem:[#allocation3 + $0x3a] sm:$0xff]
      %v2656 = vld [vmem:[#allocation3 + $0x4a] sm:$0xff]
      %v2657 = vld [vmem:[#allocation3 + $0x52] sm:$0xff]
      %v2658 = vld [vmem:[#allocation3 + $0x62] sm:$0xff]
      %v2659 = vld [vmem:[#allocation3 + $0x6a] sm:$0xff]
      %v2660 = vld [vmem:[#allocation3 + $0x7a] sm:$0xff]
      %v2661 = vld [vmem:[#allocation3 + $0x82] sm:$0xff]
      %v2662 = vld [vmem:[#allocation3 + $0x92] sm:$0xff]
      %v2663 = vld [vmem:[#allocation3 + $0x9a] sm:$0xff]
      %v2664 = vld [vmem:[#allocation3 + $0xaa] sm:$0xff]
      %v2665 = vld [vmem:[#allocation3 + $0xb2] sm:$0xff]
      %v2666 = vld [vmem:[#allocation3 + $0xc2] sm:$0xff]
      %v2667 = vld [vmem:[#allocation3 + $0xca] sm:$0xff]
      %v2668 = vld [vmem:[#allocation3 + $0xda] sm:$0xff]
      %v2669 = vld [vmem:[#allocation3 + $0xe2] sm:$0xff]
      %v2670 = vld [vmem:[#allocation3 + $0xf2] sm:$0xff]
      %v2671 = vld [vmem:[#allocation3 + $0xfa] sm:$0xff]
      %v2672 = vld [vmem:[#allocation3 + $0x10a] sm:$0xff]
      %v2673 = vld [vmem:[#allocation3 + $0x112] sm:$0xff]
      %v2674 = vld [vmem:[#allocation3 + $0x122] sm:$0xff]
      %v2675 = vld [vmem:[#allocation3 + $0x12a] sm:$0xff]
      %v2676 = vld [vmem:[#allocation3 + $0x13a] sm:$0xff]
      %v2677 = vld [vmem:[#allocation3 + $0x142] sm:$0xff]
      %v2678 = vld [vmem:[#allocation3 + $0x152] sm:$0xff]
      %v2679 = vld [vmem:[#allocation3 + $0x15a] sm:$0xff]
      %v2680 = vld [vmem:[#allocation3 + $0x16a] sm:$0xff]
      %v2681 = vld [vmem:[#allocation3 + $0x172] sm:$0xff]
      %v2682 = vld [vmem:[%s2553] sm:$0xff]
      %v2683 = vld [vmem:[%s2553 + $0x8] sm:$0xff]
      %v2684 = vld [vmem:[%s2553 + $0x18] sm:$0xff]
      %v2685 = vld [vmem:[%s2553 + $0x20] sm:$0xff]
      %v2686 = vld [vmem:[%s2553 + $0x30] sm:$0xff]
      %v2687 = vld [vmem:[%s2553 + $0x38] sm:$0xff]
      %v2688 = vld [vmem:[%s2553 + $0x48] sm:$0xff]
      %v2689 = vld [vmem:[%s2553 + $0x50] sm:$0xff]
      %v2690 = vld [vmem:[%s2553 + $0x60] sm:$0xff]
      %v2691 = vld [vmem:[%s2553 + $0x68] sm:$0xff]
      %v2692 = vld [vmem:[%s2553 + $0x78] sm:$0xff]
      %v2693 = vld [vmem:[%s2553 + $0x80] sm:$0xff]
      %v2694 = vld [vmem:[%s2553 + $0x90] sm:$0xff]
      %v2695 = vld [vmem:[%s2553 + $0x98] sm:$0xff]
      %v2696 = vld [vmem:[%s2553 + $0xa8] sm:$0xff]
      %v2697 = vld [vmem:[%s2553 + $0xb0] sm:$0xff]
      %v2698 = vld [vmem:[%s2553 + $0xc0] sm:$0xff]
      %v2699 = vld [vmem:[%s2553 + $0xc8] sm:$0xff]
      %v2700 = vld [vmem:[%s2553 + $0xd8] sm:$0xff]
      %v2701 = vld [vmem:[%s2553 + $0xe0] sm:$0xff]
      %v2702 = vld [vmem:[%s2553 + $0xf0] sm:$0xff]
      %v2703 = vld [vmem:[%s2553 + $0xf8] sm:$0xff]
      %v2704 = vld [vmem:[%s2553 + $0x108] sm:$0xff]
      %v2705 = vld [vmem:[%s2553 + $0x110] sm:$0xff]
      %v2706 = vld [vmem:[%s2553 + $0x120] sm:$0xff]
      %v2707 = vld [vmem:[%s2553 + $0x128] sm:$0xff]
      %v2708 = vld [vmem:[%s2553 + $0x138] sm:$0xff]
      %v2709 = vld [vmem:[%s2553 + $0x140] sm:$0xff]
      %v2710 = vld [vmem:[%s2553 + $0x150] sm:$0xff]
      %v2711 = vld [vmem:[%s2553 + $0x158] sm:$0xff]
      %v2712 = vld [vmem:[%s2553 + $0x168] sm:$0xff]
      %v2713 = vld [vmem:[%s2553 + $0x170] sm:$0xff]
      %v2714 = vld [vmem:[%s2553 + $0x1] sm:$0xff]
      %v2715 = vld [vmem:[%s2553 + $0x9] sm:$0xff]
      %v2716 = vld [vmem:[%s2553 + $0x19] sm:$0xff]
      %v2717 = vld [vmem:[%s2553 + $0x21] sm:$0xff]
      %v2718 = vld [vmem:[%s2553 + $0x31] sm:$0xff]
      %v2719 = vld [vmem:[%s2553 + $0x39] sm:$0xff]
      %v2720 = vld [vmem:[%s2553 + $0x49] sm:$0xff]
      %v2721 = vld [vmem:[%s2553 + $0x51] sm:$0xff]
      %v2722 = vld [vmem:[%s2553 + $0x61] sm:$0xff]
      %v2723 = vld [vmem:[%s2553 + $0x69] sm:$0xff]
      %v2724 = vld [vmem:[%s2553 + $0x79] sm:$0xff]
      %v2725 = vld [vmem:[%s2553 + $0x81] sm:$0xff]
      %v2726 = vld [vmem:[%s2553 + $0x91] sm:$0xff]
      %v2727 = vld [vmem:[%s2553 + $0x99] sm:$0xff]
      %v2728 = vld [vmem:[%s2553 + $0xa9] sm:$0xff]
      %v2729 = vld [vmem:[%s2553 + $0xb1] sm:$0xff]
      %v2730 = vld [vmem:[%s2553 + $0xc1] sm:$0xff]
      %v2731 = vld [vmem:[%s2553 + $0xc9] sm:$0xff]
      %v2732 = vld [vmem:[%s2553 + $0xd9] sm:$0xff]
      %v2733 = vld [vmem:[%s2553 + $0xe1] sm:$0xff]
      %v2734 = vld [vmem:[%s2553 + $0xf1] sm:$0xff]
      %v2735 = vld [vmem:[%s2553 + $0xf9] sm:$0xff]
      %v2736 = vld [vmem:[%s2553 + $0x109] sm:$0xff]
      %v2737 = vld [vmem:[%s2553 + $0x111] sm:$0xff]
      %v2738 = vld [vmem:[%s2553 + $0x121] sm:$0xff]
      %v2739 = vld [vmem:[%s2553 + $0x129] sm:$0xff]
      %v2740 = vld [vmem:[%s2553 + $0x139] sm:$0xff]
      %v2741 = vld [vmem:[%s2553 + $0x141] sm:$0xff]
      %v2742 = vld [vmem:[%s2553 + $0x151] sm:$0xff]
      %v2743 = vld [vmem:[%s2553 + $0x159] sm:$0xff]
      %v2744 = vld [vmem:[%s2553 + $0x169] sm:$0xff]
      %v2745 = vld [vmem:[%s2553 + $0x171] sm:$0xff]
      %v2746 = vld [vmem:[%s2553 + $0x2] sm:$0xff]
      %v2747 = vld [vmem:[%s2553 + $0xa] sm:$0xff]
      %v2748 = vld [vmem:[%s2553 + $0x1a] sm:$0xff]
      %v2749 = vld [vmem:[%s2553 + $0x22] sm:$0xff]
      %v2750 = vld [vmem:[%s2553 + $0x32] sm:$0xff]
      %v2751 = vld [vmem:[%s2553 + $0x3a] sm:$0xff]
      %v2752 = vld [vmem:[%s2553 + $0x4a] sm:$0xff]
      %v2753 = vld [vmem:[%s2553 + $0x52] sm:$0xff]
      %v2754 = vld [vmem:[%s2553 + $0x62] sm:$0xff]
      %v2755 = vld [vmem:[%s2553 + $0x6a] sm:$0xff]
      %v2756 = vld [vmem:[%s2553 + $0x7a] sm:$0xff]
      %v2757 = vld [vmem:[%s2553 + $0x82] sm:$0xff]
      %v2758 = vld [vmem:[%s2553 + $0x92] sm:$0xff]
      %v2759 = vld [vmem:[%s2553 + $0x9a] sm:$0xff]
      %v2760 = vld [vmem:[%s2553 + $0xaa] sm:$0xff]
      %v2761 = vld [vmem:[%s2553 + $0xb2] sm:$0xff]
      %v2762 = vld [vmem:[%s2553 + $0xc2] sm:$0xff]
      %v2763 = vld [vmem:[%s2553 + $0xca] sm:$0xff]
      %v2764 = vld [vmem:[%s2553 + $0xda] sm:$0xff]
      %v2765 = vld [vmem:[%s2553 + $0xe2] sm:$0xff]
      %v2766 = vld [vmem:[%s2553 + $0xf2] sm:$0xff]
      %v2767 = vld [vmem:[%s2553 + $0xfa] sm:$0xff]
      %v2768 = vld [vmem:[%s2553 + $0x10a] sm:$0xff]
      %v2769 = vld [vmem:[%s2553 + $0x112] sm:$0xff]
      %v2770 = vld [vmem:[%s2553 + $0x122] sm:$0xff]
      %v2771 = vld [vmem:[%s2553 + $0x12a] sm:$0xff]
      %v2772 = vld [vmem:[%s2553 + $0x13a] sm:$0xff]
      %v2773 = vld [vmem:[%s2553 + $0x142] sm:$0xff]
      %v2774 = vld [vmem:[%s2553 + $0x152] sm:$0xff]
      %v2775 = vld [vmem:[%s2553 + $0x15a] sm:$0xff]
      %v2776 = vld [vmem:[%s2553 + $0x16a] sm:$0xff]
      %v2777 = vld [vmem:[%s2553 + $0x172] sm:$0xff]
      %s2778 = scalar_lea.vmem [#allocation3], 48
      %v2779 = vld [vmem:[%s2778] sm:$0xff]
      %v2780 = vld [vmem:[%s2778 + $0x8] sm:$0xff]
      %v2781 = vld [vmem:[%s2778 + $0x18] sm:$0xff]
      %v2782 = vld [vmem:[%s2778 + $0x20] sm:$0xff]
      %v2783 = vld [vmem:[%s2778 + $0x30] sm:$0xff]
      %v2784 = vld [vmem:[%s2778 + $0x38] sm:$0xff]
      %v2785 = vld [vmem:[%s2778 + $0x48] sm:$0xff]
      %v2786 = vld [vmem:[%s2778 + $0x50] sm:$0xff]
      %v2787 = vld [vmem:[%s2778 + $0x60] sm:$0xff]
      %v2788 = vld [vmem:[%s2778 + $0x68] sm:$0xff]
      %v2789 = vld [vmem:[%s2778 + $0x78] sm:$0xff]
      %v2790 = vld [vmem:[%s2778 + $0x80] sm:$0xff]
      %v2791 = vld [vmem:[%s2778 + $0x90] sm:$0xff]
      %v2792 = vld [vmem:[%s2778 + $0x98] sm:$0xff]
      %v2793 = vld [vmem:[%s2778 + $0xa8] sm:$0xff]
      %v2794 = vld [vmem:[%s2778 + $0xb0] sm:$0xff]
      %v2795 = vld [vmem:[%s2778 + $0xc0] sm:$0xff]
      %v2796 = vld [vmem:[%s2778 + $0xc8] sm:$0xff]
      %v2797 = vld [vmem:[%s2778 + $0xd8] sm:$0xff]
      %v2798 = vld [vmem:[%s2778 + $0xe0] sm:$0xff]
      %v2799 = vld [vmem:[%s2778 + $0xf0] sm:$0xff]
      %v2800 = vld [vmem:[%s2778 + $0xf8] sm:$0xff]
      %v2801 = vld [vmem:[%s2778 + $0x108] sm:$0xff]
      %v2802 = vld [vmem:[%s2778 + $0x110] sm:$0xff]
      %v2803 = vld [vmem:[%s2778 + $0x120] sm:$0xff]
      %v2804 = vld [vmem:[%s2778 + $0x128] sm:$0xff]
      %v2805 = vld [vmem:[%s2778 + $0x138] sm:$0xff]
      %v2806 = vld [vmem:[%s2778 + $0x140] sm:$0xff]
      %v2807 = vld [vmem:[%s2778 + $0x150] sm:$0xff]
      %v2808 = vld [vmem:[%s2778 + $0x158] sm:$0xff]
      %v2809 = vld [vmem:[%s2778 + $0x168] sm:$0xff]
      %v2810 = vld [vmem:[%s2778 + $0x170] sm:$0xff]
      %v2811 = vld [vmem:[%s2778 + $0x1] sm:$0xff]
      %v2812 = vld [vmem:[%s2778 + $0x9] sm:$0xff]
      %v2813 = vld [vmem:[%s2778 + $0x19] sm:$0xff]
      %v2814 = vld [vmem:[%s2778 + $0x21] sm:$0xff]
      %v2815 = vld [vmem:[%s2778 + $0x31] sm:$0xff]
      %v2816 = vld [vmem:[%s2778 + $0x39] sm:$0xff]
      %v2817 = vld [vmem:[%s2778 + $0x49] sm:$0xff]
      %v2818 = vld [vmem:[%s2778 + $0x51] sm:$0xff]
      %v2819 = vld [vmem:[%s2778 + $0x61] sm:$0xff]
      %v2820 = vld [vmem:[%s2778 + $0x69] sm:$0xff]
      %v2821 = vld [vmem:[%s2778 + $0x79] sm:$0xff]
      %v2822 = vld [vmem:[%s2778 + $0x81] sm:$0xff]
      %v2823 = vld [vmem:[%s2778 + $0x91] sm:$0xff]
      %v2824 = vld [vmem:[%s2778 + $0x99] sm:$0xff]
      %v2825 = vld [vmem:[%s2778 + $0xa9] sm:$0xff]
      %v2826 = vld [vmem:[%s2778 + $0xb1] sm:$0xff]
      %v2827 = vld [vmem:[%s2778 + $0xc1] sm:$0xff]
      %v2828 = vld [vmem:[%s2778 + $0xc9] sm:$0xff]
      %v2829 = vld [vmem:[%s2778 + $0xd9] sm:$0xff]
      %v2830 = vld [vmem:[%s2778 + $0xe1] sm:$0xff]
      %v2831 = vld [vmem:[%s2778 + $0xf1] sm:$0xff]
      %v2832 = vld [vmem:[%s2778 + $0xf9] sm:$0xff]
      %v2833 = vld [vmem:[%s2778 + $0x109] sm:$0xff]
      %v2834 = vld [vmem:[%s2778 + $0x111] sm:$0xff]
      %v2835 = vld [vmem:[%s2778 + $0x121] sm:$0xff]
      %v2836 = vld [vmem:[%s2778 + $0x129] sm:$0xff]
      %v2837 = vld [vmem:[%s2778 + $0x139] sm:$0xff]
      %v2838 = vld [vmem:[%s2778 + $0x141] sm:$0xff]
      %v2839 = vld [vmem:[%s2778 + $0x151] sm:$0xff]
      %v2840 = vld [vmem:[%s2778 + $0x159] sm:$0xff]
      %v2841 = vld [vmem:[%s2778 + $0x169] sm:$0xff]
      %v2842 = vld [vmem:[%s2778 + $0x171] sm:$0xff]
      %v2843 = vld [vmem:[%s2778 + $0x2] sm:$0xff]
      %v2844 = vld [vmem:[%s2778 + $0xa] sm:$0xff]
      %v2845 = vld [vmem:[%s2778 + $0x1a] sm:$0xff]
      %v2846 = vld [vmem:[%s2778 + $0x22] sm:$0xff]
      %v2847 = vld [vmem:[%s2778 + $0x32] sm:$0xff]
      %v2848 = vld [vmem:[%s2778 + $0x3a] sm:$0xff]
      %v2849 = vld [vmem:[%s2778 + $0x4a] sm:$0xff]
      %v2850 = vld [vmem:[%s2778 + $0x52] sm:$0xff]
      %v2851 = vld [vmem:[%s2778 + $0x62] sm:$0xff]
      %v2852 = vld [vmem:[%s2778 + $0x6a] sm:$0xff]
      %v2853 = vld [vmem:[%s2778 + $0x7a] sm:$0xff]
      %v2854 = vld [vmem:[%s2778 + $0x82] sm:$0xff]
      %v2855 = vld [vmem:[%s2778 + $0x92] sm:$0xff]
      %v2856 = vld [vmem:[%s2778 + $0x9a] sm:$0xff]
      %v2857 = vld [vmem:[%s2778 + $0xaa] sm:$0xff]
      %v2858 = vld [vmem:[%s2778 + $0xb2] sm:$0xff]
      %v2859 = vld [vmem:[%s2778 + $0xc2] sm:$0xff]
      %v2860 = vld [vmem:[%s2778 + $0xca] sm:$0xff]
      %v2861 = vld [vmem:[%s2778 + $0xda] sm:$0xff]
      %v2862 = vld [vmem:[%s2778 + $0xe2] sm:$0xff]
      %v2863 = vld [vmem:[%s2778 + $0xf2] sm:$0xff]
      %v2864 = vld [vmem:[%s2778 + $0xfa] sm:$0xff]
      %v2865 = vld [vmem:[%s2778 + $0x10a] sm:$0xff]
      %v2866 = vld [vmem:[%s2778 + $0x112] sm:$0xff]
      %v2867 = vld [vmem:[%s2778 + $0x122] sm:$0xff]
      %v2868 = vld [vmem:[%s2778 + $0x12a] sm:$0xff]
      %v2869 = vld [vmem:[%s2778 + $0x13a] sm:$0xff]
      %v2870 = vld [vmem:[%s2778 + $0x142] sm:$0xff]
      %v2871 = vld [vmem:[%s2778 + $0x152] sm:$0xff]
      %v2872 = vld [vmem:[%s2778 + $0x15a] sm:$0xff]
      %v2873 = vld [vmem:[%s2778 + $0x16a] sm:$0xff]
      %v2874 = vld [vmem:[%s2778 + $0x172] sm:$0xff]
      %2907 = vrot.lane.b32.xlu0 %v2618, 8
      %v2908 = vpop.permute.xlu0 %2907
      %2909 = vrot.lane.b32.xlu0 %v2619, 8
      %v2910 = vpop.permute.xlu0 %2909
      %2911 = vrot.lane.b32.xlu0 %v2620, 8
      %v2912 = vpop.permute.xlu0 %2911
      %2913 = vrot.lane.b32.xlu0 %v2621, 8
      %v2914 = vpop.permute.xlu0 %2913
      %2915 = vrot.lane.b32.xlu0 %v2622, 8
      %v2916 = vpop.permute.xlu0 %2915
      %2917 = vrot.lane.b32.xlu0 %v2623, 8
      %v2918 = vpop.permute.xlu0 %2917
      %2919 = vrot.lane.b32.xlu0 %v2624, 8
      %v2920 = vpop.permute.xlu0 %2919
      %2921 = vrot.lane.b32.xlu0 %v2625, 8
      %v2922 = vpop.permute.xlu0 %2921
      %2923 = vrot.lane.b32.xlu0 %v2626, 8
      %v2924 = vpop.permute.xlu0 %2923
      %2925 = vrot.lane.b32.xlu0 %v2627, 8
      %v2926 = vpop.permute.xlu0 %2925
      %2927 = vrot.lane.b32.xlu0 %v2628, 8
      %v2928 = vpop.permute.xlu0 %2927
      %2929 = vrot.lane.b32.xlu0 %v2629, 8
      %v2930 = vpop.permute.xlu0 %2929
      %2931 = vrot.lane.b32.xlu0 %v2630, 8
      %v2932 = vpop.permute.xlu0 %2931
      %2933 = vrot.lane.b32.xlu0 %v2631, 8
      %v2934 = vpop.permute.xlu0 %2933
      %2935 = vrot.lane.b32.xlu0 %v2632, 8
      %v2936 = vpop.permute.xlu0 %2935
      %2937 = vrot.lane.b32.xlu0 %v2633, 8
      %v2938 = vpop.permute.xlu0 %2937
      %2939 = vrot.lane.b32.xlu0 %v2634, 8
      %v2940 = vpop.permute.xlu0 %2939
      %2941 = vrot.lane.b32.xlu0 %v2635, 8
      %v2942 = vpop.permute.xlu0 %2941
      %2943 = vrot.lane.b32.xlu0 %v2636, 8
      %v2944 = vpop.permute.xlu0 %2943
      %2945 = vrot.lane.b32.xlu0 %v2637, 8
      %v2946 = vpop.permute.xlu0 %2945
      %2947 = vrot.lane.b32.xlu0 %v2638, 8
      %v2948 = vpop.permute.xlu0 %2947
      %2949 = vrot.lane.b32.xlu0 %v2639, 8
      %v2950 = vpop.permute.xlu0 %2949
      %2951 = vrot.lane.b32.xlu0 %v2640, 8
      %v2952 = vpop.permute.xlu0 %2951
      %2953 = vrot.lane.b32.xlu0 %v2641, 8
      %v2954 = vpop.permute.xlu0 %2953
      %2955 = vrot.lane.b32.xlu0 %v2642, 8
      %v2956 = vpop.permute.xlu0 %2955
      %2957 = vrot.lane.b32.xlu0 %v2643, 8
      %v2958 = vpop.permute.xlu0 %2957
      %2959 = vrot.lane.b32.xlu0 %v2644, 8
      %v2960 = vpop.permute.xlu0 %2959
      %2961 = vrot.lane.b32.xlu0 %v2645, 8
      %v2962 = vpop.permute.xlu0 %2961
      %2963 = vrot.lane.b32.xlu0 %v2646, 8
      %v2964 = vpop.permute.xlu0 %2963
      %2965 = vrot.lane.b32.xlu0 %v2647, 8
      %v2966 = vpop.permute.xlu0 %2965
      %2967 = vrot.lane.b32.xlu0 %v2648, 8
      %v2968 = vpop.permute.xlu0 %2967
      %2969 = vrot.lane.b32.xlu0 %v2649, 8
      %v2970 = vpop.permute.xlu0 %2969
      %3035 = vrot.lane.b32.xlu0 %v2650, 16
      %v3036 = vpop.permute.xlu0 %3035
      %3037 = vrot.lane.b32.xlu0 %v2651, 16
      %v3038 = vpop.permute.xlu0 %3037
      %3039 = vrot.lane.b32.xlu0 %v2652, 16
      %v3040 = vpop.permute.xlu0 %3039
      %3041 = vrot.lane.b32.xlu0 %v2653, 16
      %v3042 = vpop.permute.xlu0 %3041
      %3043 = vrot.lane.b32.xlu0 %v2654, 16
      %v3044 = vpop.permute.xlu0 %3043
      %3045 = vrot.lane.b32.xlu0 %v2655, 16
      %v3046 = vpop.permute.xlu0 %3045
      %3047 = vrot.lane.b32.xlu0 %v2656, 16
      %v3048 = vpop.permute.xlu0 %3047
      %3049 = vrot.lane.b32.xlu0 %v2657, 16
      %v3050 = vpop.permute.xlu0 %3049
      %3051 = vrot.lane.b32.xlu0 %v2658, 16
      %v3052 = vpop.permute.xlu0 %3051
      %3053 = vrot.lane.b32.xlu0 %v2659, 16
      %v3054 = vpop.permute.xlu0 %3053
      %3055 = vrot.lane.b32.xlu0 %v2660, 16
      %v3056 = vpop.permute.xlu0 %3055
      %3057 = vrot.lane.b32.xlu0 %v2661, 16
      %v3058 = vpop.permute.xlu0 %3057
      %3059 = vrot.lane.b32.xlu0 %v2662, 16
      %v3060 = vpop.permute.xlu0 %3059
      %3061 = vrot.lane.b32.xlu0 %v2663, 16
      %v3062 = vpop.permute.xlu0 %3061
      %3063 = vrot.lane.b32.xlu0 %v2664, 16
      %v3064 = vpop.permute.xlu0 %3063
      %3065 = vrot.lane.b32.xlu0 %v2665, 16
      %v3066 = vpop.permute.xlu0 %3065
      %3067 = vrot.lane.b32.xlu0 %v2666, 16
      %v3068 = vpop.permute.xlu0 %3067
      %3069 = vrot.lane.b32.xlu0 %v2667, 16
      %v3070 = vpop.permute.xlu0 %3069
      %3071 = vrot.lane.b32.xlu0 %v2668, 16
      %v3072 = vpop.permute.xlu0 %3071
      %3073 = vrot.lane.b32.xlu0 %v2669, 16
      %v3074 = vpop.permute.xlu0 %3073
      %3075 = vrot.lane.b32.xlu0 %v2670, 16
      %v3076 = vpop.permute.xlu0 %3075
      %3077 = vrot.lane.b32.xlu0 %v2671, 16
      %v3078 = vpop.permute.xlu0 %3077
      %3079 = vrot.lane.b32.xlu0 %v2672, 16
      %v3080 = vpop.permute.xlu0 %3079
      %3081 = vrot.lane.b32.xlu0 %v2673, 16
      %v3082 = vpop.permute.xlu0 %3081
      %3083 = vrot.lane.b32.xlu0 %v2674, 16
      %v3084 = vpop.permute.xlu0 %3083
      %3085 = vrot.lane.b32.xlu0 %v2675, 16
      %v3086 = vpop.permute.xlu0 %3085
      %3087 = vrot.lane.b32.xlu0 %v2676, 16
      %v3088 = vpop.permute.xlu0 %3087
      %3089 = vrot.lane.b32.xlu0 %v2677, 16
      %v3090 = vpop.permute.xlu0 %3089
      %3091 = vrot.lane.b32.xlu0 %v2678, 16
      %v3092 = vpop.permute.xlu0 %3091
      %3093 = vrot.lane.b32.xlu0 %v2679, 16
      %v3094 = vpop.permute.xlu0 %3093
      %3095 = vrot.lane.b32.xlu0 %v2680, 16
      %v3096 = vpop.permute.xlu0 %3095
      %3097 = vrot.lane.b32.xlu0 %v2681, 16
      %v3098 = vpop.permute.xlu0 %3097
      %3163 = vrot.lane.b32.xlu0 %v2682, 24
      %v3164 = vpop.permute.xlu0 %3163
      %3165 = vrot.lane.b32.xlu0 %v2683, 24
      %v3166 = vpop.permute.xlu0 %3165
      %3167 = vrot.lane.b32.xlu0 %v2684, 24
      %v3168 = vpop.permute.xlu0 %3167
      %3169 = vrot.lane.b32.xlu0 %v2685, 24
      %v3170 = vpop.permute.xlu0 %3169
      %3171 = vrot.lane.b32.xlu0 %v2686, 24
      %v3172 = vpop.permute.xlu0 %3171
      %3173 = vrot.lane.b32.xlu0 %v2687, 24
      %v3174 = vpop.permute.xlu0 %3173
      %3175 = vrot.lane.b32.xlu0 %v2688, 24
      %v3176 = vpop.permute.xlu0 %3175
      %3177 = vrot.lane.b32.xlu0 %v2689, 24
      %v3178 = vpop.permute.xlu0 %3177
      %3179 = vrot.lane.b32.xlu0 %v2690, 24
      %v3180 = vpop.permute.xlu0 %3179
      %3181 = vrot.lane.b32.xlu0 %v2691, 24
      %v3182 = vpop.permute.xlu0 %3181
      %3183 = vrot.lane.b32.xlu0 %v2692, 24
      %v3184 = vpop.permute.xlu0 %3183
      %3185 = vrot.lane.b32.xlu0 %v2693, 24
      %v3186 = vpop.permute.xlu0 %3185
      %3187 = vrot.lane.b32.xlu0 %v2694, 24
      %v3188 = vpop.permute.xlu0 %3187
      %3189 = vrot.lane.b32.xlu0 %v2695, 24
      %v3190 = vpop.permute.xlu0 %3189
      %3191 = vrot.lane.b32.xlu0 %v2696, 24
      %v3192 = vpop.permute.xlu0 %3191
      %3193 = vrot.lane.b32.xlu0 %v2697, 24
      %v3194 = vpop.permute.xlu0 %3193
      %3195 = vrot.lane.b32.xlu0 %v2698, 24
      %v3196 = vpop.permute.xlu0 %3195
      %3197 = vrot.lane.b32.xlu0 %v2699, 24
      %v3198 = vpop.permute.xlu0 %3197
      %3199 = vrot.lane.b32.xlu0 %v2700, 24
      %v3200 = vpop.permute.xlu0 %3199
      %3201 = vrot.lane.b32.xlu0 %v2701, 24
      %v3202 = vpop.permute.xlu0 %3201
      %3203 = vrot.lane.b32.xlu0 %v2702, 24
      %v3204 = vpop.permute.xlu0 %3203
      %3205 = vrot.lane.b32.xlu0 %v2703, 24
      %v3206 = vpop.permute.xlu0 %3205
      %3207 = vrot.lane.b32.xlu0 %v2704, 24
      %v3208 = vpop.permute.xlu0 %3207
      %3209 = vrot.lane.b32.xlu0 %v2705, 24
      %v3210 = vpop.permute.xlu0 %3209
      %3211 = vrot.lane.b32.xlu0 %v2706, 24
      %v3212 = vpop.permute.xlu0 %3211
      %3213 = vrot.lane.b32.xlu0 %v2707, 24
      %v3214 = vpop.permute.xlu0 %3213
      %3215 = vrot.lane.b32.xlu0 %v2708, 24
      %v3216 = vpop.permute.xlu0 %3215
      %3217 = vrot.lane.b32.xlu0 %v2709, 24
      %v3218 = vpop.permute.xlu0 %3217
      %3219 = vrot.lane.b32.xlu0 %v2710, 24
      %v3220 = vpop.permute.xlu0 %3219
      %3221 = vrot.lane.b32.xlu0 %v2711, 24
      %v3222 = vpop.permute.xlu0 %3221
      %3223 = vrot.lane.b32.xlu0 %v2712, 24
      %v3224 = vpop.permute.xlu0 %3223
      %3225 = vrot.lane.b32.xlu0 %v2713, 24
      %v3226 = vpop.permute.xlu0 %3225
      %3291 = vrot.lane.b32.xlu0 %v2714, 32
      %v3292 = vpop.permute.xlu0 %3291
      %3293 = vrot.lane.b32.xlu0 %v2715, 32
      %v3294 = vpop.permute.xlu0 %3293
      %3295 = vrot.lane.b32.xlu0 %v2716, 32
      %v3296 = vpop.permute.xlu0 %3295
      %3297 = vrot.lane.b32.xlu0 %v2717, 32
      %v3298 = vpop.permute.xlu0 %3297
      %3299 = vrot.lane.b32.xlu0 %v2718, 32
      %v3300 = vpop.permute.xlu0 %3299
      %3301 = vrot.lane.b32.xlu0 %v2719, 32
      %v3302 = vpop.permute.xlu0 %3301
      %3303 = vrot.lane.b32.xlu0 %v2720, 32
      %v3304 = vpop.permute.xlu0 %3303
      %3305 = vrot.lane.b32.xlu0 %v2721, 32
      %v3306 = vpop.permute.xlu0 %3305
      %3307 = vrot.lane.b32.xlu0 %v2722, 32
      %v3308 = vpop.permute.xlu0 %3307
      %3309 = vrot.lane.b32.xlu0 %v2723, 32
      %v3310 = vpop.permute.xlu0 %3309
      %3311 = vrot.lane.b32.xlu0 %v2724, 32
      %v3312 = vpop.permute.xlu0 %3311
      %3313 = vrot.lane.b32.xlu0 %v2725, 32
      %v3314 = vpop.permute.xlu0 %3313
      %3315 = vrot.lane.b32.xlu0 %v2726, 32
      %v3316 = vpop.permute.xlu0 %3315
      %3317 = vrot.lane.b32.xlu0 %v2727, 32
      %v3318 = vpop.permute.xlu0 %3317
      %3319 = vrot.lane.b32.xlu0 %v2728, 32
      %v3320 = vpop.permute.xlu0 %3319
      %3321 = vrot.lane.b32.xlu0 %v2729, 32
      %v3322 = vpop.permute.xlu0 %3321
      %3323 = vrot.lane.b32.xlu0 %v2730, 32
      %v3324 = vpop.permute.xlu0 %3323
      %3325 = vrot.lane.b32.xlu0 %v2731, 32
      %v3326 = vpop.permute.xlu0 %3325
      %3327 = vrot.lane.b32.xlu0 %v2732, 32
      %v3328 = vpop.permute.xlu0 %3327
      %3329 = vrot.lane.b32.xlu0 %v2733, 32
      %v3330 = vpop.permute.xlu0 %3329
      %3331 = vrot.lane.b32.xlu0 %v2734, 32
      %v3332 = vpop.permute.xlu0 %3331
      %3333 = vrot.lane.b32.xlu0 %v2735, 32
      %v3334 = vpop.permute.xlu0 %3333
      %3335 = vrot.lane.b32.xlu0 %v2736, 32
      %v3336 = vpop.permute.xlu0 %3335
      %3337 = vrot.lane.b32.xlu0 %v2737, 32
      %v3338 = vpop.permute.xlu0 %3337
      %3339 = vrot.lane.b32.xlu0 %v2738, 32
      %v3340 = vpop.permute.xlu0 %3339
      %3341 = vrot.lane.b32.xlu0 %v2739, 32
      %v3342 = vpop.permute.xlu0 %3341
      %3343 = vrot.lane.b32.xlu0 %v2740, 32
      %v3344 = vpop.permute.xlu0 %3343
      %3345 = vrot.lane.b32.xlu0 %v2741, 32
      %v3346 = vpop.permute.xlu0 %3345
      %3347 = vrot.lane.b32.xlu0 %v2742, 32
      %v3348 = vpop.permute.xlu0 %3347
      %3349 = vrot.lane.b32.xlu0 %v2743, 32
      %v3350 = vpop.permute.xlu0 %3349
      %3351 = vrot.lane.b32.xlu0 %v2744, 32
      %v3352 = vpop.permute.xlu0 %3351
      %3353 = vrot.lane.b32.xlu0 %v2745, 32
      %v3354 = vpop.permute.xlu0 %3353
      %3419 = vrot.lane.b32.xlu0 %v2746, 40
      %v3420 = vpop.permute.xlu0 %3419
      %3421 = vrot.lane.b32.xlu0 %v2747, 40
      %v3422 = vpop.permute.xlu0 %3421
      %3423 = vrot.lane.b32.xlu0 %v2748, 40
      %v3424 = vpop.permute.xlu0 %3423
      %3425 = vrot.lane.b32.xlu0 %v2749, 40
      %v3426 = vpop.permute.xlu0 %3425
      %3427 = vrot.lane.b32.xlu0 %v2750, 40
      %v3428 = vpop.permute.xlu0 %3427
      %3429 = vrot.lane.b32.xlu0 %v2751, 40
      %v3430 = vpop.permute.xlu0 %3429
      %3431 = vrot.lane.b32.xlu0 %v2752, 40
      %v3432 = vpop.permute.xlu0 %3431
      %3433 = vrot.lane.b32.xlu0 %v2753, 40
      %v3434 = vpop.permute.xlu0 %3433
      %3435 = vrot.lane.b32.xlu0 %v2754, 40
      %v3436 = vpop.permute.xlu0 %3435
      %3437 = vrot.lane.b32.xlu0 %v2755, 40
      %v3438 = vpop.permute.xlu0 %3437
      %3439 = vrot.lane.b32.xlu0 %v2756, 40
      %v3440 = vpop.permute.xlu0 %3439
      %3441 = vrot.lane.b32.xlu0 %v2757, 40
      %v3442 = vpop.permute.xlu0 %3441
      %3443 = vrot.lane.b32.xlu0 %v2758, 40
      %v3444 = vpop.permute.xlu0 %3443
      %3445 = vrot.lane.b32.xlu0 %v2759, 40
      %v3446 = vpop.permute.xlu0 %3445
      %3447 = vrot.lane.b32.xlu0 %v2760, 40
      %v3448 = vpop.permute.xlu0 %3447
      %3449 = vrot.lane.b32.xlu0 %v2761, 40
      %v3450 = vpop.permute.xlu0 %3449
      %3451 = vrot.lane.b32.xlu0 %v2762, 40
      %v3452 = vpop.permute.xlu0 %3451
      %3453 = vrot.lane.b32.xlu0 %v2763, 40
      %v3454 = vpop.permute.xlu0 %3453
      %3455 = vrot.lane.b32.xlu0 %v2764, 40
      %v3456 = vpop.permute.xlu0 %3455
      %3457 = vrot.lane.b32.xlu0 %v2765, 40
      %v3458 = vpop.permute.xlu0 %3457
      %3459 = vrot.lane.b32.xlu0 %v2766, 40
      %v3460 = vpop.permute.xlu0 %3459
      %3461 = vrot.lane.b32.xlu0 %v2767, 40
      %v3462 = vpop.permute.xlu0 %3461
      %3463 = vrot.lane.b32.xlu0 %v2768, 40
      %v3464 = vpop.permute.xlu0 %3463
      %3465 = vrot.lane.b32.xlu0 %v2769, 40
      %v3466 = vpop.permute.xlu0 %3465
      %3467 = vrot.lane.b32.xlu0 %v2770, 40
      %v3468 = vpop.permute.xlu0 %3467
      %3469 = vrot.lane.b32.xlu0 %v2771, 40
      %v3470 = vpop.permute.xlu0 %3469
      %3471 = vrot.lane.b32.xlu0 %v2772, 40
      %v3472 = vpop.permute.xlu0 %3471
      %3473 = vrot.lane.b32.xlu0 %v2773, 40
      %v3474 = vpop.permute.xlu0 %3473
      %3475 = vrot.lane.b32.xlu0 %v2774, 40
      %v3476 = vpop.permute.xlu0 %3475
      %3477 = vrot.lane.b32.xlu0 %v2775, 40
      %v3478 = vpop.permute.xlu0 %3477
      %3479 = vrot.lane.b32.xlu0 %v2776, 40
      %v3480 = vpop.permute.xlu0 %3479
      %3481 = vrot.lane.b32.xlu0 %v2777, 40
      %v3482 = vpop.permute.xlu0 %3481
      %3547 = vrot.lane.b32.xlu0 %v2779, 48
      %v3548 = vpop.permute.xlu0 %3547
      %3549 = vrot.lane.b32.xlu0 %v2780, 48
      %v3550 = vpop.permute.xlu0 %3549
      %3551 = vrot.lane.b32.xlu0 %v2781, 48
      %v3552 = vpop.permute.xlu0 %3551
      %3553 = vrot.lane.b32.xlu0 %v2782, 48
      %v3554 = vpop.permute.xlu0 %3553
      %3555 = vrot.lane.b32.xlu0 %v2783, 48
      %v3556 = vpop.permute.xlu0 %3555
      %3557 = vrot.lane.b32.xlu0 %v2784, 48
      %v3558 = vpop.permute.xlu0 %3557
      %3559 = vrot.lane.b32.xlu0 %v2785, 48
      %v3560 = vpop.permute.xlu0 %3559
      %3561 = vrot.lane.b32.xlu0 %v2786, 48
      %v3562 = vpop.permute.xlu0 %3561
      %3563 = vrot.lane.b32.xlu0 %v2787, 48
      %v3564 = vpop.permute.xlu0 %3563
      %3565 = vrot.lane.b32.xlu0 %v2788, 48
      %v3566 = vpop.permute.xlu0 %3565
      %3567 = vrot.lane.b32.xlu0 %v2789, 48
      %v3568 = vpop.permute.xlu0 %3567
      %3569 = vrot.lane.b32.xlu0 %v2790, 48
      %v3570 = vpop.permute.xlu0 %3569
      %3571 = vrot.lane.b32.xlu0 %v2791, 48
      %v3572 = vpop.permute.xlu0 %3571
      %3573 = vrot.lane.b32.xlu0 %v2792, 48
      %v3574 = vpop.permute.xlu0 %3573
      %3575 = vrot.lane.b32.xlu0 %v2793, 48
      %v3576 = vpop.permute.xlu0 %3575
      %3577 = vrot.lane.b32.xlu0 %v2794, 48
      %v3578 = vpop.permute.xlu0 %3577
      %3579 = vrot.lane.b32.xlu0 %v2795, 48
      %v3580 = vpop.permute.xlu0 %3579
      %3581 = vrot.lane.b32.xlu0 %v2796, 48
      %v3582 = vpop.permute.xlu0 %3581
      %3583 = vrot.lane.b32.xlu0 %v2797, 48
      %v3584 = vpop.permute.xlu0 %3583
      %3585 = vrot.lane.b32.xlu0 %v2798, 48
      %v3586 = vpop.permute.xlu0 %3585
      %3587 = vrot.lane.b32.xlu0 %v2799, 48
      %v3588 = vpop.permute.xlu0 %3587
      %3589 = vrot.lane.b32.xlu0 %v2800, 48
      %v3590 = vpop.permute.xlu0 %3589
      %3591 = vrot.lane.b32.xlu0 %v2801, 48
      %v3592 = vpop.permute.xlu0 %3591
      %3593 = vrot.lane.b32.xlu0 %v2802, 48
      %v3594 = vpop.permute.xlu0 %3593
      %3595 = vrot.lane.b32.xlu0 %v2803, 48
      %v3596 = vpop.permute.xlu0 %3595
      %3597 = vrot.lane.b32.xlu0 %v2804, 48
      %v3598 = vpop.permute.xlu0 %3597
      %3599 = vrot.lane.b32.xlu0 %v2805, 48
      %v3600 = vpop.permute.xlu0 %3599
      %3601 = vrot.lane.b32.xlu0 %v2806, 48
      %v3602 = vpop.permute.xlu0 %3601
      %3603 = vrot.lane.b32.xlu0 %v2807, 48
      %v3604 = vpop.permute.xlu0 %3603
      %3605 = vrot.lane.b32.xlu0 %v2808, 48
      %v3606 = vpop.permute.xlu0 %3605
      %3607 = vrot.lane.b32.xlu0 %v2809, 48
      %v3608 = vpop.permute.xlu0 %3607
      %3609 = vrot.lane.b32.xlu0 %v2810, 48
      %v3610 = vpop.permute.xlu0 %3609
      %3675 = vrot.lane.b32.xlu0 %v2811, 56
      %v3676 = vpop.permute.xlu0 %3675
      %3677 = vrot.lane.b32.xlu0 %v2812, 56
      %v3678 = vpop.permute.xlu0 %3677
      %3679 = vrot.lane.b32.xlu0 %v2813, 56
      %v3680 = vpop.permute.xlu0 %3679
      %3681 = vrot.lane.b32.xlu0 %v2814, 56
      %v3682 = vpop.permute.xlu0 %3681
      %3683 = vrot.lane.b32.xlu0 %v2815, 56
      %v3684 = vpop.permute.xlu0 %3683
      %3685 = vrot.lane.b32.xlu0 %v2816, 56
      %v3686 = vpop.permute.xlu0 %3685
      %3687 = vrot.lane.b32.xlu0 %v2817, 56
      %v3688 = vpop.permute.xlu0 %3687
      %3689 = vrot.lane.b32.xlu0 %v2818, 56
      %v3690 = vpop.permute.xlu0 %3689
      %3691 = vrot.lane.b32.xlu0 %v2819, 56
      %v3692 = vpop.permute.xlu0 %3691
      %3693 = vrot.lane.b32.xlu0 %v2820, 56
      %v3694 = vpop.permute.xlu0 %3693
      %3695 = vrot.lane.b32.xlu0 %v2821, 56
      %v3696 = vpop.permute.xlu0 %3695
      %3697 = vrot.lane.b32.xlu0 %v2822, 56
      %v3698 = vpop.permute.xlu0 %3697
      %3699 = vrot.lane.b32.xlu0 %v2823, 56
      %v3700 = vpop.permute.xlu0 %3699
      %3701 = vrot.lane.b32.xlu0 %v2824, 56
      %v3702 = vpop.permute.xlu0 %3701
      %3703 = vrot.lane.b32.xlu0 %v2825, 56
      %v3704 = vpop.permute.xlu0 %3703
      %3705 = vrot.lane.b32.xlu0 %v2826, 56
      %v3706 = vpop.permute.xlu0 %3705
      %3707 = vrot.lane.b32.xlu0 %v2827, 56
      %v3708 = vpop.permute.xlu0 %3707
      %3709 = vrot.lane.b32.xlu0 %v2828, 56
      %v3710 = vpop.permute.xlu0 %3709
      %3711 = vrot.lane.b32.xlu0 %v2829, 56
      %v3712 = vpop.permute.xlu0 %3711
      %3713 = vrot.lane.b32.xlu0 %v2830, 56
      %v3714 = vpop.permute.xlu0 %3713
      %3715 = vrot.lane.b32.xlu0 %v2831, 56
      %v3716 = vpop.permute.xlu0 %3715
      %3717 = vrot.lane.b32.xlu0 %v2832, 56
      %v3718 = vpop.permute.xlu0 %3717
      %3719 = vrot.lane.b32.xlu0 %v2833, 56
      %v3720 = vpop.permute.xlu0 %3719
      %3721 = vrot.lane.b32.xlu0 %v2834, 56
      %v3722 = vpop.permute.xlu0 %3721
      %3723 = vrot.lane.b32.xlu0 %v2835, 56
      %v3724 = vpop.permute.xlu0 %3723
      %3725 = vrot.lane.b32.xlu0 %v2836, 56
      %v3726 = vpop.permute.xlu0 %3725
      %3727 = vrot.lane.b32.xlu0 %v2837, 56
      %v3728 = vpop.permute.xlu0 %3727
      %3729 = vrot.lane.b32.xlu0 %v2838, 56
      %v3730 = vpop.permute.xlu0 %3729
      %3731 = vrot.lane.b32.xlu0 %v2839, 56
      %v3732 = vpop.permute.xlu0 %3731
      %3733 = vrot.lane.b32.xlu0 %v2840, 56
      %v3734 = vpop.permute.xlu0 %3733
      %3735 = vrot.lane.b32.xlu0 %v2841, 56
      %v3736 = vpop.permute.xlu0 %3735
      %3737 = vrot.lane.b32.xlu0 %v2842, 56
      %v3738 = vpop.permute.xlu0 %3737
      %3803 = vrot.lane.b32.xlu0 %v2843, 64
      %v3804 = vpop.permute.xlu0 %3803
      %3805 = vrot.lane.b32.xlu0 %v2844, 64
      %v3806 = vpop.permute.xlu0 %3805
      %3807 = vrot.lane.b32.xlu0 %v2845, 64
      %v3808 = vpop.permute.xlu0 %3807
      %3809 = vrot.lane.b32.xlu0 %v2846, 64
      %v3810 = vpop.permute.xlu0 %3809
      %3811 = vrot.lane.b32.xlu0 %v2847, 64
      %v3812 = vpop.permute.xlu0 %3811
      %3813 = vrot.lane.b32.xlu0 %v2848, 64
      %v3814 = vpop.permute.xlu0 %3813
      %3815 = vrot.lane.b32.xlu0 %v2849, 64
      %v3816 = vpop.permute.xlu0 %3815
      %3817 = vrot.lane.b32.xlu0 %v2850, 64
      %v3818 = vpop.permute.xlu0 %3817
      %3819 = vrot.lane.b32.xlu0 %v2851, 64
      %v3820 = vpop.permute.xlu0 %3819
      %3821 = vrot.lane.b32.xlu0 %v2852, 64
      %v3822 = vpop.permute.xlu0 %3821
      %3823 = vrot.lane.b32.xlu0 %v2853, 64
      %v3824 = vpop.permute.xlu0 %3823
      %3825 = vrot.lane.b32.xlu0 %v2854, 64
      %v3826 = vpop.permute.xlu0 %3825
      %3827 = vrot.lane.b32.xlu0 %v2855, 64
      %v3828 = vpop.permute.xlu0 %3827
      %3829 = vrot.lane.b32.xlu0 %v2856, 64
      %v3830 = vpop.permute.xlu0 %3829
      %3831 = vrot.lane.b32.xlu0 %v2857, 64
      %v3832 = vpop.permute.xlu0 %3831
      %3833 = vrot.lane.b32.xlu0 %v2858, 64
      %v3834 = vpop.permute.xlu0 %3833
      %3835 = vrot.lane.b32.xlu0 %v2859, 64
      %v3836 = vpop.permute.xlu0 %3835
      %3837 = vrot.lane.b32.xlu0 %v2860, 64
      %v3838 = vpop.permute.xlu0 %3837
      %3839 = vrot.lane.b32.xlu0 %v2861, 64
      %v3840 = vpop.permute.xlu0 %3839
      %3841 = vrot.lane.b32.xlu0 %v2862, 64
      %v3842 = vpop.permute.xlu0 %3841
      %3843 = vrot.lane.b32.xlu0 %v2863, 64
      %v3844 = vpop.permute.xlu0 %3843
      %3845 = vrot.lane.b32.xlu0 %v2864, 64
      %v3846 = vpop.permute.xlu0 %3845
      %3847 = vrot.lane.b32.xlu0 %v2865, 64
      %v3848 = vpop.permute.xlu0 %3847
      %3849 = vrot.lane.b32.xlu0 %v2866, 64
      %v3850 = vpop.permute.xlu0 %3849
      %3851 = vrot.lane.b32.xlu0 %v2867, 64
      %v3852 = vpop.permute.xlu0 %3851
      %3853 = vrot.lane.b32.xlu0 %v2868, 64
      %v3854 = vpop.permute.xlu0 %3853
      %3855 = vrot.lane.b32.xlu0 %v2869, 64
      %v3856 = vpop.permute.xlu0 %3855
      %3857 = vrot.lane.b32.xlu0 %v2870, 64
      %v3858 = vpop.permute.xlu0 %3857
      %3859 = vrot.lane.b32.xlu0 %v2871, 64
      %v3860 = vpop.permute.xlu0 %3859
      %3861 = vrot.lane.b32.xlu0 %v2872, 64
      %v3862 = vpop.permute.xlu0 %3861
      %3863 = vrot.lane.b32.xlu0 %v2873, 64
      %v3864 = vpop.permute.xlu0 %3863
      %3865 = vrot.lane.b32.xlu0 %v2874, 64
      %v3866 = vpop.permute.xlu0 %3865
      %v3899 = vsel %vm1832, %v2586, %v2908
      %v3900 = vsel %vm1832, %v2587, %v2910
      %v3901 = vsel %vm1832, %v2588, %v2912
      %v3902 = vsel %vm1832, %v2589, %v2914
      %v3903 = vsel %vm1832, %v2590, %v2916
      %v3904 = vsel %vm1832, %v2591, %v2918
      %v3905 = vsel %vm1832, %v2592, %v2920
      %v3906 = vsel %vm1832, %v2593, %v2922
      %v3907 = vsel %vm1832, %v2594, %v2924
      %v3908 = vsel %vm1832, %v2595, %v2926
      %v3909 = vsel %vm1832, %v2596, %v2928
      %v3910 = vsel %vm1832, %v2597, %v2930
      %v3911 = vsel %vm1832, %v2598, %v2932
      %v3912 = vsel %vm1832, %v2599, %v2934
      %v3913 = vsel %vm1832, %v2600, %v2936
      %v3914 = vsel %vm1832, %v2601, %v2938
      %v3915 = vsel %vm1832, %v2602, %v2940
      %v3916 = vsel %vm1832, %v2603, %v2942
      %v3917 = vsel %vm1832, %v2604, %v2944
      %v3918 = vsel %vm1832, %v2605, %v2946
      %v3919 = vsel %vm1832, %v2606, %v2948
      %v3920 = vsel %vm1832, %v2607, %v2950
      %v3921 = vsel %vm1832, %v2608, %v2952
      %v3922 = vsel %vm1832, %v2609, %v2954
      %v3923 = vsel %vm1832, %v2610, %v2956
      %v3924 = vsel %vm1832, %v2611, %v2958
      %v3925 = vsel %vm1832, %v2612, %v2960
      %v3926 = vsel %vm1832, %v2613, %v2962
      %v3927 = vsel %vm1832, %v2614, %v2964
      %v3928 = vsel %vm1832, %v2615, %v2966
      %v3929 = vsel %vm1832, %v2616, %v2968
      %v3930 = vsel %vm1832, %v2617, %v2970
      %v3931 = vsel %vm1898, %v3899, %v3036
      %v3932 = vsel %vm1898, %v3900, %v3038
      %v3933 = vsel %vm1898, %v3901, %v3040
      %v3934 = vsel %vm1898, %v3902, %v3042
      %v3935 = vsel %vm1898, %v3903, %v3044
      %v3936 = vsel %vm1898, %v3904, %v3046
      %v3937 = vsel %vm1898, %v3905, %v3048
      %v3938 = vsel %vm1898, %v3906, %v3050
      %v3939 = vsel %vm1898, %v3907, %v3052
      %v3940 = vsel %vm1898, %v3908, %v3054
      %v3941 = vsel %vm1898, %v3909, %v3056
      %v3942 = vsel %vm1898, %v3910, %v3058
      %v3943 = vsel %vm1898, %v3911, %v3060
      %v3944 = vsel %vm1898, %v3912, %v3062
      %v3945 = vsel %vm1898, %v3913, %v3064
      %v3946 = vsel %vm1898, %v3914, %v3066
      %v3947 = vsel %vm1898, %v3915, %v3068
      %v3948 = vsel %vm1898, %v3916, %v3070
      %v3949 = vsel %vm1898, %v3917, %v3072
      %v3950 = vsel %vm1898, %v3918, %v3074
      %v3951 = vsel %vm1898, %v3919, %v3076
      %v3952 = vsel %vm1898, %v3920, %v3078
      %v3953 = vsel %vm1898, %v3921, %v3080
      %v3954 = vsel %vm1898, %v3922, %v3082
      %v3955 = vsel %vm1898, %v3923, %v3084
      %v3956 = vsel %vm1898, %v3924, %v3086
      %v3957 = vsel %vm1898, %v3925, %v3088
      %v3958 = vsel %vm1898, %v3926, %v3090
      %v3959 = vsel %vm1898, %v3927, %v3092
      %v3960 = vsel %vm1898, %v3928, %v3094
      %v3961 = vsel %vm1898, %v3929, %v3096
      %v3962 = vsel %vm1898, %v3930, %v3098
      %v3963 = vsel %vm1964, %v3931, %v3164
      %v3964 = vsel %vm1964, %v3932, %v3166
      %v3965 = vsel %vm1964, %v3933, %v3168
      %v3966 = vsel %vm1964, %v3934, %v3170
      %v3967 = vsel %vm1964, %v3935, %v3172
      %v3968 = vsel %vm1964, %v3936, %v3174
      %v3969 = vsel %vm1964, %v3937, %v3176
      %v3970 = vsel %vm1964, %v3938, %v3178
      %v3971 = vsel %vm1964, %v3939, %v3180
      %v3972 = vsel %vm1964, %v3940, %v3182
      %v3973 = vsel %vm1964, %v3941, %v3184
      %v3974 = vsel %vm1964, %v3942, %v3186
      %v3975 = vsel %vm1964, %v3943, %v3188
      %v3976 = vsel %vm1964, %v3944, %v3190
      %v3977 = vsel %vm1964, %v3945, %v3192
      %v3978 = vsel %vm1964, %v3946, %v3194
      %v3979 = vsel %vm1964, %v3947, %v3196
      %v3980 = vsel %vm1964, %v3948, %v3198
      %v3981 = vsel %vm1964, %v3949, %v3200
      %v3982 = vsel %vm1964, %v3950, %v3202
      %v3983 = vsel %vm1964, %v3951, %v3204
      %v3984 = vsel %vm1964, %v3952, %v3206
      %v3985 = vsel %vm1964, %v3953, %v3208
      %v3986 = vsel %vm1964, %v3954, %v3210
      %v3987 = vsel %vm1964, %v3955, %v3212
      %v3988 = vsel %vm1964, %v3956, %v3214
      %v3989 = vsel %vm1964, %v3957, %v3216
      %v3990 = vsel %vm1964, %v3958, %v3218
      %v3991 = vsel %vm1964, %v3959, %v3220
      %v3992 = vsel %vm1964, %v3960, %v3222
      %v3993 = vsel %vm1964, %v3961, %v3224
      %v3994 = vsel %vm1964, %v3962, %v3226
      %v3995 = vsel %vm2030, %v3963, %v3292
      %v3996 = vsel %vm2030, %v3964, %v3294
      %v3997 = vsel %vm2030, %v3965, %v3296
      %v3998 = vsel %vm2030, %v3966, %v3298
      %v3999 = vsel %vm2030, %v3967, %v3300
      %v4000 = vsel %vm2030, %v3968, %v3302
      %v4001 = vsel %vm2030, %v3969, %v3304
      %v4002 = vsel %vm2030, %v3970, %v3306
      %v4003 = vsel %vm2030, %v3971, %v3308
      %v4004 = vsel %vm2030, %v3972, %v3310
      %v4005 = vsel %vm2030, %v3973, %v3312
      %v4006 = vsel %vm2030, %v3974, %v3314
      %v4007 = vsel %vm2030, %v3975, %v3316
      %v4008 = vsel %vm2030, %v3976, %v3318
      %v4009 = vsel %vm2030, %v3977, %v3320
      %v4010 = vsel %vm2030, %v3978, %v3322
      %v4011 = vsel %vm2030, %v3979, %v3324
      %v4012 = vsel %vm2030, %v3980, %v3326
      %v4013 = vsel %vm2030, %v3981, %v3328
      %v4014 = vsel %vm2030, %v3982, %v3330
      %v4015 = vsel %vm2030, %v3983, %v3332
      %v4016 = vsel %vm2030, %v3984, %v3334
      %v4017 = vsel %vm2030, %v3985, %v3336
      %v4018 = vsel %vm2030, %v3986, %v3338
      %v4019 = vsel %vm2030, %v3987, %v3340
      %v4020 = vsel %vm2030, %v3988, %v3342
      %v4021 = vsel %vm2030, %v3989, %v3344
      %v4022 = vsel %vm2030, %v3990, %v3346
      %v4023 = vsel %vm2030, %v3991, %v3348
      %v4024 = vsel %vm2030, %v3992, %v3350
      %v4025 = vsel %vm2030, %v3993, %v3352
      %v4026 = vsel %vm2030, %v3994, %v3354
      %vm4027 = vcmask 326656
      %v4028 = vsel %vm4027, %v3995, %v3420
      %v4029 = vsel %vm4027, %v3996, %v3422
      %v4030 = vsel %vm4027, %v3997, %v3424
      %v4031 = vsel %vm4027, %v3998, %v3426
      %v4032 = vsel %vm4027, %v3999, %v3428
      %v4033 = vsel %vm4027, %v4000, %v3430
      %v4034 = vsel %vm4027, %v4001, %v3432
      %v4035 = vsel %vm4027, %v4002, %v3434
      %v4036 = vsel %vm4027, %v4003, %v3436
      %v4037 = vsel %vm4027, %v4004, %v3438
      %v4038 = vsel %vm4027, %v4005, %v3440
      %v4039 = vsel %vm4027, %v4006, %v3442
      %v4040 = vsel %vm4027, %v4007, %v3444
      %v4041 = vsel %vm4027, %v4008, %v3446
      %v4042 = vsel %vm4027, %v4009, %v3448
      %v4043 = vsel %vm4027, %v4010, %v3450
      %v4044 = vsel %vm4027, %v4011, %v3452
      %v4045 = vsel %vm4027, %v4012, %v3454
      %v4046 = vsel %vm4027, %v4013, %v3456
      %v4047 = vsel %vm4027, %v4014, %v3458
      %v4048 = vsel %vm4027, %v4015, %v3460
      %v4049 = vsel %vm4027, %v4016, %v3462
      %v4050 = vsel %vm4027, %v4017, %v3464
      %v4051 = vsel %vm4027, %v4018, %v3466
      %v4052 = vsel %vm4027, %v4019, %v3468
      %v4053 = vsel %vm4027, %v4020, %v3470
      %v4054 = vsel %vm4027, %v4021, %v3472
      %v4055 = vsel %vm4027, %v4022, %v3474
      %v4056 = vsel %vm4027, %v4023, %v3476
      %v4057 = vsel %vm4027, %v4024, %v3478
      %v4058 = vsel %vm4027, %v4025, %v3480
      %v4059 = vsel %vm4027, %v4026, %v3482
      %vm4060 = vcmask 392192
      %v4061 = vsel %vm4060, %v4028, %v3548
      %v4062 = vsel %vm4060, %v4029, %v3550
      %v4063 = vsel %vm4060, %v4030, %v3552
      %v4064 = vsel %vm4060, %v4031, %v3554
      %v4065 = vsel %vm4060, %v4032, %v3556
      %v4066 = vsel %vm4060, %v4033, %v3558
      %v4067 = vsel %vm4060, %v4034, %v3560
      %v4068 = vsel %vm4060, %v4035, %v3562
      %v4069 = vsel %vm4060, %v4036, %v3564
      %v4070 = vsel %vm4060, %v4037, %v3566
      %v4071 = vsel %vm4060, %v4038, %v3568
      %v4072 = vsel %vm4060, %v4039, %v3570
      %v4073 = vsel %vm4060, %v4040, %v3572
      %v4074 = vsel %vm4060, %v4041, %v3574
      %v4075 = vsel %vm4060, %v4042, %v3576
      %v4076 = vsel %vm4060, %v4043, %v3578
      %v4077 = vsel %vm4060, %v4044, %v3580
      %v4078 = vsel %vm4060, %v4045, %v3582
      %v4079 = vsel %vm4060, %v4046, %v3584
      %v4080 = vsel %vm4060, %v4047, %v3586
      %v4081 = vsel %vm4060, %v4048, %v3588
      %v4082 = vsel %vm4060, %v4049, %v3590
      %v4083 = vsel %vm4060, %v4050, %v3592
      %v4084 = vsel %vm4060, %v4051, %v3594
      %v4085 = vsel %vm4060, %v4052, %v3596
      %v4086 = vsel %vm4060, %v4053, %v3598
      %v4087 = vsel %vm4060, %v4054, %v3600
      %v4088 = vsel %vm4060, %v4055, %v3602
      %v4089 = vsel %vm4060, %v4056, %v3604
      %v4090 = vsel %vm4060, %v4057, %v3606
      %v4091 = vsel %vm4060, %v4058, %v3608
      %v4092 = vsel %vm4060, %v4059, %v3610
      %vm4093 = vcmask 457728
      %v4094 = vsel %vm4093, %v4061, %v3676
      %v4095 = vsel %vm4093, %v4062, %v3678
      %v4096 = vsel %vm4093, %v4063, %v3680
      %v4097 = vsel %vm4093, %v4064, %v3682
      %v4098 = vsel %vm4093, %v4065, %v3684
      %v4099 = vsel %vm4093, %v4066, %v3686
      %v4100 = vsel %vm4093, %v4067, %v3688
      %v4101 = vsel %vm4093, %v4068, %v3690
      %v4102 = vsel %vm4093, %v4069, %v3692
      %v4103 = vsel %vm4093, %v4070, %v3694
      %v4104 = vsel %vm4093, %v4071, %v3696
      %v4105 = vsel %vm4093, %v4072, %v3698
      %v4106 = vsel %vm4093, %v4073, %v3700
      %v4107 = vsel %vm4093, %v4074, %v3702
      %v4108 = vsel %vm4093, %v4075, %v3704
      %v4109 = vsel %vm4093, %v4076, %v3706
      %v4110 = vsel %vm4093, %v4077, %v3708
      %v4111 = vsel %vm4093, %v4078, %v3710
      %v4112 = vsel %vm4093, %v4079, %v3712
      %v4113 = vsel %vm4093, %v4080, %v3714
      %v4114 = vsel %vm4093, %v4081, %v3716
      %v4115 = vsel %vm4093, %v4082, %v3718
      %v4116 = vsel %vm4093, %v4083, %v3720
      %v4117 = vsel %vm4093, %v4084, %v3722
      %v4118 = vsel %vm4093, %v4085, %v3724
      %v4119 = vsel %vm4093, %v4086, %v3726
      %v4120 = vsel %vm4093, %v4087, %v3728
      %v4121 = vsel %vm4093, %v4088, %v3730
      %v4122 = vsel %vm4093, %v4089, %v3732
      %v4123 = vsel %vm4093, %v4090, %v3734
      %v4124 = vsel %vm4093, %v4091, %v3736
      %v4125 = vsel %vm4093, %v4092, %v3738
      %vm4126 = vcmask 523264
      %v4127 = vsel %vm4126, %v4094, %v3804
      %v4128 = vsel %vm4126, %v4095, %v3806
      %v4129 = vsel %vm4126, %v4096, %v3808
      %v4130 = vsel %vm4126, %v4097, %v3810
      %v4131 = vsel %vm4126, %v4098, %v3812
      %v4132 = vsel %vm4126, %v4099, %v3814
      %v4133 = vsel %vm4126, %v4100, %v3816
      %v4134 = vsel %vm4126, %v4101, %v3818
      %v4135 = vsel %vm4126, %v4102, %v3820
      %v4136 = vsel %vm4126, %v4103, %v3822
      %v4137 = vsel %vm4126, %v4104, %v3824
      %v4138 = vsel %vm4126, %v4105, %v3826
      %v4139 = vsel %vm4126, %v4106, %v3828
      %v4140 = vsel %vm4126, %v4107, %v3830
      %v4141 = vsel %vm4126, %v4108, %v3832
      %v4142 = vsel %vm4126, %v4109, %v3834
      %v4143 = vsel %vm4126, %v4110, %v3836
      %v4144 = vsel %vm4126, %v4111, %v3838
      %v4145 = vsel %vm4126, %v4112, %v3840
      %v4146 = vsel %vm4126, %v4113, %v3842
      %v4147 = vsel %vm4126, %v4114, %v3844
      %v4148 = vsel %vm4126, %v4115, %v3846
      %v4149 = vsel %vm4126, %v4116, %v3848
      %v4150 = vsel %vm4126, %v4117, %v3850
      %v4151 = vsel %vm4126, %v4118, %v3852
      %v4152 = vsel %vm4126, %v4119, %v3854
      %v4153 = vsel %vm4126, %v4120, %v3856
      %v4154 = vsel %vm4126, %v4121, %v3858
      %v4155 = vsel %vm4126, %v4122, %v3860
      %v4156 = vsel %vm4126, %v4123, %v3862
      %v4157 = vsel %vm4126, %v4124, %v3864
      %v4158 = vsel %vm4126, %v4125, %v3866
      %v4159 = vld [vmem:[%s6] sm:$0xff]
      %vm4160 = vcmask 588800
      %v4162 = vsel %vm4160, %v4159, 0
      %v4165 = vsel %vm4160, %v4127, 0
      %v4168 = vsel %vm4160, %v4128, 0
      %v4171 = vsel %vm4160, %v4129, 0
      %v4174 = vsel %vm4160, %v4130, 0
      %v4177 = vsel %vm4160, %v4131, 0
      %v4180 = vsel %vm4160, %v4132, 0
      %v4183 = vsel %vm4160, %v4133, 0
      %v4186 = vsel %vm4160, %v4134, 0
      %v4189 = vsel %vm4160, %v4135, 0
      %v4192 = vsel %vm4160, %v4136, 0
      %v4195 = vsel %vm4160, %v4137, 0
      %v4198 = vsel %vm4160, %v4138, 0
      %v4201 = vsel %vm4160, %v4139, 0
      %v4204 = vsel %vm4160, %v4140, 0
      %v4207 = vsel %vm4160, %v4141, 0
      %v4210 = vsel %vm4160, %v4142, 0
      %v4213 = vsel %vm4160, %v4143, 0
      %v4216 = vsel %vm4160, %v4144, 0
      %v4219 = vsel %vm4160, %v4145, 0
      %v4222 = vsel %vm4160, %v4146, 0
      %v4225 = vsel %vm4160, %v4147, 0
      %v4228 = vsel %vm4160, %v4148, 0
      %v4231 = vsel %vm4160, %v4149, 0
      %v4234 = vsel %vm4160, %v4150, 0
      %v4237 = vsel %vm4160, %v4151, 0
      %v4240 = vsel %vm4160, %v4152, 0
      %v4243 = vsel %vm4160, %v4153, 0
      %v4246 = vsel %vm4160, %v4154, 0
      %v4249 = vsel %vm4160, %v4155, 0
      %v4252 = vsel %vm4160, %v4156, 0
      %v4255 = vsel %vm4160, %v4157, 0
      %v4258 = vsel %vm4160, %v4158, 0
      %4260 = vmatprep.subr.mxu0 0.0
      %4261 = vmatpush1.xpose.msra.mxu0 %v4165
      %4262 = vmatprep.subr.mxu0 0.0
      %4263 = vmatpush1.xpose.msra.mxu0 %v4168
      %4264 = vmatprep.subr.mxu0 0.0
      %4265 = vmatpush1.xpose.msra.mxu0 %v4171
      %4266 = vmatprep.subr.mxu0 0.0
      %4267 = vmatpush1.xpose.msra.mxu0 %v4174
      %4268 = vmatprep.subr.mxu0 0.0
      %4269 = vmatpush1.xpose.msra.mxu0 %v4177
      %4270 = vmatprep.subr.mxu0 0.0
      %4271 = vmatpush1.xpose.msra.mxu0 %v4180
      %4272 = vmatprep.subr.mxu0 0.0
      %4273 = vmatpush1.xpose.msra.mxu0 %v4183
      %4274 = vmatprep.subr.mxu0 0.0
      %4275 = vmatpush1.xpose.msra.mxu0 %v4186
      %4276 = vmatprep.subr.mxu0 0.0
      %4277 = vmatpush1.xpose.msra.mxu0 %v4189
      %4278 = vmatprep.subr.mxu0 0.0
      %4279 = vmatpush1.xpose.msra.mxu0 %v4192
      %4280 = vmatprep.subr.mxu0 0.0
      %4281 = vmatpush1.xpose.msra.mxu0 %v4195
      %4282 = vmatprep.subr.mxu0 0.0
      %4283 = vmatpush1.xpose.msra.mxu0 %v4198
      %4284 = vmatprep.subr.mxu0 0.0
      %4285 = vmatpush1.xpose.msra.mxu0 %v4201
      %4286 = vmatprep.subr.mxu0 0.0
      %4287 = vmatpush1.xpose.msra.mxu0 %v4204
      %4288 = vmatprep.subr.mxu0 0.0
      %4289 = vmatpush1.xpose.msra.mxu0 %v4207
      %4290 = vmatprep.subr.mxu0 0.0
      %4291 = vmatpush1.xpose.msra.mxu0 %v4210
      %4292 = vmatprep.subr.mxu0 0.0
      %4293 = vmatpush1.xpose.msra.mxu0 %v4213
      %4294 = vmatprep.subr.mxu0 0.0
      %4295 = vmatpush1.xpose.msra.mxu0 %v4216
      %4296 = vmatprep.subr.mxu0 0.0
      %4297 = vmatpush1.xpose.msra.mxu0 %v4219
      %4298 = vmatprep.subr.mxu0 0.0
      %4299 = vmatpush1.xpose.msra.mxu0 %v4222
      %4300 = vmatprep.subr.mxu0 0.0
      %4301 = vmatpush1.xpose.msra.mxu0 %v4225
      %4302 = vmatprep.subr.mxu0 0.0
      %4303 = vmatpush1.xpose.msra.mxu0 %v4228
      %4304 = vmatprep.subr.mxu0 0.0
      %4305 = vmatpush1.xpose.msra.mxu0 %v4231
      %4306 = vmatprep.subr.mxu0 0.0
      %4307 = vmatpush1.xpose.msra.mxu0 %v4234
      %4308 = vmatprep.subr.mxu0 0.0
      %4309 = vmatpush1.xpose.msra.mxu0 %v4237
      %4310 = vmatprep.subr.mxu0 0.0
      %4311 = vmatpush1.xpose.msra.mxu0 %v4240
      %4312 = vmatprep.subr.mxu0 0.0
      %4313 = vmatpush1.xpose.msra.mxu0 %v4243
      %4314 = vmatprep.subr.mxu0 0.0
      %4315 = vmatpush1.xpose.msra.mxu0 %v4246
      %4316 = vmatprep.subr.mxu0 0.0
      %4317 = vmatpush1.xpose.msra.mxu0 %v4249
      %4318 = vmatprep.subr.mxu0 0.0
      %4319 = vmatpush1.xpose.msra.mxu0 %v4252
      %4320 = vmatprep.subr.mxu0 0.0
      %4321 = vmatpush1.xpose.msra.mxu0 %v4255
      %4322 = vmatprep.subr.mxu0 0.0
      %4323 = vmatpush1.xpose.msra.mxu0 %v4258
      %4324 = vmatprep.mubr.f32.mxu0 0.0
      %4325 = vmatmul.mubr.f32.gmra.mrb[0].mxu0 %v4162
      %v4326 = vpop.f32.mrb[0].mxu0
      %v4327 = vadd.f32 0.0, %v4326
      %v4328 = vpop.f32.mrb[0].mxu0
      %v4329 = vadd.f32 0.0, %v4328
      %4330 = vdwg.mxu0
      %v4331 = vstv %s364
      %v4332 = vmul.f32 %v4327, %v4331
      %v4333 = vmul.f32 %v4329, %v4331
      %v4334 = vld [vmem:[%s7] sm:$0xff]
      %4336 = vset.pattern.permute.xlu0 0
      %4337 = vperm.xlu0 %4336, %v4334
      %v4338 = vpop.permute.xlu0 %4337
      %v4340 = vadd.f32 %v4332, %v4338
      %v4341 = vadd.f32 %v4333, %v4338
      %v4342 = vld [vmem:[%s8] sm:$0xff]
      %v4344 = vsel %vm398, %v4342, 0
      %v4347 = vsel %vm398, %v366, 0
      %v4350 = vsel %vm398, %v367, 0
      %v4353 = vsel %vm398, %v368, 0
      %v4356 = vsel %vm398, %v369, 0
      %v4359 = vsel %vm398, %v370, 0
      %v4362 = vsel %vm398, %v371, 0
      %v4365 = vsel %vm398, %v372, 0
      %v4368 = vsel %vm398, %v373, 0
      %v4371 = vsel %vm398, %v374, 0
      %v4374 = vsel %vm398, %v375, 0
      %v4377 = vsel %vm398, %v376, 0
      %v4380 = vsel %vm398, %v377, 0
      %v4383 = vsel %vm398, %v378, 0
      %v4386 = vsel %vm398, %v379, 0
      %v4389 = vsel %vm398, %v380, 0
      %v4392 = vsel %vm398, %v381, 0
      %v4395 = vsel %vm398, %v382, 0
      %v4398 = vsel %vm398, %v383, 0
      %v4401 = vsel %vm398, %v384, 0
      %v4404 = vsel %vm398, %v385, 0
      %v4407 = vsel %vm398, %v386, 0
      %v4410 = vsel %vm398, %v387, 0
      %v4413 = vsel %vm398, %v388, 0
      %v4416 = vsel %vm398, %v389, 0
      %v4419 = vsel %vm398, %v390, 0
      %v4422 = vsel %vm398, %v391, 0
      %v4425 = vsel %vm398, %v392, 0
      %v4428 = vsel %vm398, %v393, 0
      %v4431 = vsel %vm398, %v394, 0
      %v4434 = vsel %vm398, %v395, 0
      %v4437 = vsel %vm398, %v396, 0
      %v4440 = vsel %vm398, %v397, 0
      %4442 = vmatprep.subr.mxu0 0.0
      %4443 = vmatpush1.xpose.msra.mxu0 %v4347
      %4444 = vmatprep.subr.mxu0 0.0
      %4445 = vmatpush1.xpose.msra.mxu0 %v4350
      %4446 = vmatprep.subr.mxu0 0.0
      %4447 = vmatpush1.xpose.msra.mxu0 %v4353
      %4448 = vmatprep.subr.mxu0 0.0
      %4449 = vmatpush1.xpose.msra.mxu0 %v4356
      %4450 = vmatprep.subr.mxu0 0.0
      %4451 = vmatpush1.xpose.msra.mxu0 %v4359
      %4452 = vmatprep.subr.mxu0 0.0
      %4453 = vmatpush1.xpose.msra.mxu0 %v4362
      %4454 = vmatprep.subr.mxu0 0.0
      %4455 = vmatpush1.xpose.msra.mxu0 %v4365
      %4456 = vmatprep.subr.mxu0 0.0
      %4457 = vmatpush1.xpose.msra.mxu0 %v4368
      %4458 = vmatprep.subr.mxu0 0.0
      %4459 = vmatpush1.xpose.msra.mxu0 %v4371
      %4460 = vmatprep.subr.mxu0 0.0
      %4461 = vmatpush1.xpose.msra.mxu0 %v4374
      %4462 = vmatprep.subr.mxu0 0.0
      %4463 = vmatpush1.xpose.msra.mxu0 %v4377
      %4464 = vmatprep.subr.mxu0 0.0
      %4465 = vmatpush1.xpose.msra.mxu0 %v4380
      %4466 = vmatprep.subr.mxu0 0.0
      %4467 = vmatpush1.xpose.msra.mxu0 %v4383
      %4468 = vmatprep.subr.mxu0 0.0
      %4469 = vmatpush1.xpose.msra.mxu0 %v4386
      %4470 = vmatprep.subr.mxu0 0.0
      %4471 = vmatpush1.xpose.msra.mxu0 %v4389
      %4472 = vmatprep.subr.mxu0 0.0
      %4473 = vmatpush1.xpose.msra.mxu0 %v4392
      %4474 = vmatprep.subr.mxu0 0.0
      %4475 = vmatpush1.xpose.msra.mxu0 %v4395
      %4476 = vmatprep.subr.mxu0 0.0
      %4477 = vmatpush1.xpose.msra.mxu0 %v4398
      %4478 = vmatprep.subr.mxu0 0.0
      %4479 = vmatpush1.xpose.msra.mxu0 %v4401
      %4480 = vmatprep.subr.mxu0 0.0
      %4481 = vmatpush1.xpose.msra.mxu0 %v4404
      %4482 = vmatprep.subr.mxu0 0.0
      %4483 = vmatpush1.xpose.msra.mxu0 %v4407
      %4484 = vmatprep.subr.mxu0 0.0
      %4485 = vmatpush1.xpose.msra.mxu0 %v4410
      %4486 = vmatprep.subr.mxu0 0.0
      %4487 = vmatpush1.xpose.msra.mxu0 %v4413
      %4488 = vmatprep.subr.mxu0 0.0
      %4489 = vmatpush1.xpose.msra.mxu0 %v4416
      %4490 = vmatprep.subr.mxu0 0.0
      %4491 = vmatpush1.xpose.msra.mxu0 %v4419
      %4492 = vmatprep.subr.mxu0 0.0
      %4493 = vmatpush1.xpose.msra.mxu0 %v4422
      %4494 = vmatprep.subr.mxu0 0.0
      %4495 = vmatpush1.xpose.msra.mxu0 %v4425
      %4496 = vmatprep.subr.mxu0 0.0
      %4497 = vmatpush1.xpose.msra.mxu0 %v4428
      %4498 = vmatprep.subr.mxu0 0.0
      %4499 = vmatpush1.xpose.msra.mxu0 %v4431
      %4500 = vmatprep.subr.mxu0 0.0
      %4501 = vmatpush1.xpose.msra.mxu0 %v4434
      %4502 = vmatprep.subr.mxu0 0.0
      %4503 = vmatpush1.xpose.msra.mxu0 %v4437
      %4504 = vmatprep.subr.mxu0 0.0
      %4505 = vmatpush1.xpose.msra.mxu0 %v4440
      %4506 = vmatprep.mubr.f32.mxu0 0.0
      %4507 = vmatmul.mubr.f32.gmra.mrb[0].mxu0 %v4344
      %v4508 = vpop.f32.mrb[0].mxu0
      %v4509 = vadd.f32 0.0, %v4508
      %v4510 = vpop.f32.mrb[0].mxu0
      %v4511 = vadd.f32 0.0, %v4510
      %4512 = vdwg.mxu0
      %v4513 = vstv %s365
      %v4514 = vmul.f32 %v4509, %v4513
      %v4515 = vmul.f32 %v4511, %v4513
      %v4516 = vadd.f32 %v4340, %v4514
      %v4517 = vadd.f32 %v4341, %v4515
      %v4518 = vld [vmem:[%s9] sm:$0xff]
      %4520 = vset.pattern.permute.xlu0 0
      %4521 = vperm.xlu0 %4520, %v4518
      %v4522 = vpop.permute.xlu0 %4521
      %v4524 = vadd.f32 %v4516, %v4522
      %v4525 = vadd.f32 %v4517, %v4522
      %4526 = vst [vmem:[%s362] sm:$0xff] %v4524
      %4527 = vst [vmem:[%s362 + $0x8] sm:$0xff] %v4525
      %p4528 = scmp.lt.s32.totalorder %s24, 1
      %s4529 = scalar_select %p4528, %s24, 1
      %s4530 = smul.addr %s4529, 2
      %s4531 = smul.addr %s4530, 8
      %s4532 = scalar_lea.vmem %s10, %s4531
      // Predicated region
      $region61: #{dblock_forward.3} parent=59 // pred_check
        %p4533 = pneg %p257
      $region62: #{dblock_forward.3} parent=59 // pred_check_branch
        %4535 = sbr.rel (%p4533) target = $region64
      $region63: #{dblock_forward.3} parent=59 // pred_region
        _
      $region64: #{dblock_forward.3} parent=59 // pred_fallthru
        _
    $region60: #{dblock_forward.3} parent=5 // pred_fallthru
      _
    %p4536 = scmp.le.s32.totalorder 2, %s19
    // Predicated region
    $region65: #{dblock_forward.3} parent=5 // pred_check
      %p4537 = pneg %p4536
    $region66: #{dblock_forward.3} parent=5 // pred_check_branch
      %4539 = sbr.rel (%p4537) target = $region68
    $region67: #{dblock_forward.3} parent=5 // pred_region
      %s4540 = ssub.s32 %s19, 2
      // Predicated region
      $region69: #{dblock_forward.3} parent=67 // pred_check
        %p4541 = pneg %p263
      $region70: #{dblock_forward.3} parent=67 // pred_check_branch
        %4543 = sbr.rel (%p4541) target = $region72
      $region71: #{dblock_forward.3} parent=67 // pred_region
        %p4544 = scmp.lt.s32.totalorder %s25, 1
        %s4545 = scalar_select %p4544, %s25, 1
        %s4546 = smul.addr %s4545, 2
        %s4547 = smul.addr %s4546, 8
        %s4548 = scalar_lea.vmem %s10, %s4547
      $region72: #{dblock_forward.3} parent=67 // pred_fallthru
        _
    $region68: #{dblock_forward.3} parent=5 // pred_fallthru
      _
  $region6: #{dblock_forward.3} parent=0 // loop_footer
    %s23 = sadd.s32 1, %s19
  $region7: #{dblock_forward.3} parent=0 // loop_footer_branch
    %18 = sbr.rel target = $region3
  $region8: #{dblock_forward.3} parent=0 // loop_exit
    _

</llo_original>
